<compile_context>
chip_gen: v6e
topology: v6e:2x2x1
jax: 0.10.0
libtpu: 0.0.40
codegen_flags: <defaults>
</compile_context>

<pallas_src>
import math
import jax
import jax.numpy as jnp
from jax.experimental import pallas as pl
from jax.experimental.pallas import tpu as pltpu

# ----------------------------- config ---------------------------------------
BATCH = 2
CHANNELS = 3
IMAGE = 16
PATCH = 4
HIDDEN = 32
HEADS = 4
HEAD_DIM = HIDDEN // HEADS
INTERMEDIATE = 64
LAYERS = 2
NUM_CLASSES = 10
EPS = 1e-12                       # ViT layer_norm_eps
N_PATCHES = (IMAGE // PATCH) ** 2 # 16
SEQ = N_PATCHES + 1               # 17 (CLS + patches)
SEQP = 32                         # per-batch padded sequence length
TOKP = BATCH * SEQP               # 64 batch-folded token rows
CPP = CHANNELS * PATCH * PATCH    # 48
KEYL = HEADS * BATCH * SEQP       # 256 packed attention key columns
INV_SQRT2 = 0.7071067811865476

LOGIT_PAD = 128                   # lane-dense classifier output width
SLAB_W = 128                      # lane-dense weight slab width
W_ROWS = 160                      # wqkv(32) | wo(32) | w1(32) | w2(64)
VEC_ROWS = 8                      # LN params + biases, one row each
R_WQKV, R_WO, R_W1, R_W2 = 0, 32, 64, 96


# ----------------------------- fused kernel ----------------------------------

def _ln(z, g, b):
    m = jnp.mean(z, axis=-1, keepdims=True)
    c = z - m
    v = jnp.mean(c * c, axis=-1, keepdims=True)
    return c * jax.lax.rsqrt(v + EPS) * g + b


def _vit_fused_kernel(patches_ref, pw_ref, add_ref, lw_ref, lv_ref,
                      mv_ref, sm_ref, hw_ref, hv_ref, o_ref):
    # patches_ref : (TOKP, CPP) f32   row b*32+0 = CLS slot (zero), 1..16 patches,
    #                                 17..31 zero padding
    # pw_ref      : (CPP, HIDDEN) bf16 patch-embedding weight
    # add_ref     : (TOKP, HIDDEN) f32 cls / position / patch-bias fold
    # lw_ref      : (LAYERS, W_ROWS, 128) bf16 packed per-layer matrices
    # lv_ref      : (LAYERS, VEC_ROWS, 128) f32 packed per-layer vectors
    # mv_ref      : (KEYL, HIDDEN) bf16 block-diag head selector (keys/values/denom)
    # sm_ref      : (TOKP, KEYL) f32 additive score mask (-1e9 at cross-batch/pad)
    # hw_ref      : (HIDDEN, LOGIT_PAD) bf16 classifier weight
    # hv_ref      : (VEC_ROWS, LOGIT_PAD) f32 final LN gamma/beta + classifier bias
    # o_ref       : (BATCH, LOGIT_PAD) f32 padded logits
    bf16 = jnp.bfloat16

    # Patch embedding (+ CLS token, position embedding, patch bias folded in).
    x = jnp.dot(patches_ref[...].astype(bf16), pw_ref[...],
                preferred_element_type=jnp.float32) + add_ref[...]   # (TOKP, H) f32

    mask_v = mv_ref[...]                                             # (KEYL, H) bf16
    smask = sm_ref[...]                                              # (TOKP, KEYL) f32

    for li in range(LAYERS):                       # 2 encoder layers, unrolled
        wl = lw_ref[li]                            # (W_ROWS, 128) bf16
        vl = lv_ref[li]                            # (VEC_ROWS, 128) f32
        wqkv = wl[R_WQKV:R_WO, :]                  # (32, 128): [wq/sqrt(dh)|wk|wv|0]
        wo = wl[R_WO:R_W1, 0:HIDDEN]
        w1 = wl[R_W1:R_W2, 0:INTERMEDIATE]
        w2 = wl[R_W2:W_ROWS, 0:HIDDEN]
        ln1g = vl[0:1, 0:HIDDEN]
        ln1b = vl[1:2, 0:HIDDEN]
        bqkv = vl[2:3, :]
        bo = vl[3:4, 0:HIDDEN]
        ln2g = vl[4:5, 0:HIDDEN]
        ln2b = vl[5:6, 0:HIDDEN]
        b1 = vl[6:7, 0:INTERMEDIATE]
        b2 = vl[7:8, 0:HIDDEN]

        # --- self-attention (pre-LN, fused QKV, heads packed along lanes) ---
        h = _ln(x, ln1g, ln1b)
        qkv = jnp.dot(h.astype(bf16), wqkv,
                      preferred_element_type=jnp.float32) + bqkv     # (TOKP, 128)
        q = qkv[:, 0:HIDDEN].astype(bf16)          # attention scale folded into wq/bq
        k = qkv[:, HIDDEN:2 * HIDDEN].astype(bf16)
        v = qkv[:, 2 * HIDDEN:3 * HIDDEN].astype(bf16)

        # Block-diagonal packing: column c = h*64 + b*32 + j.
        kp = jnp.concatenate([k] * HEADS, axis=0) * mask_v           # (KEYL, H)
        vp = jnp.concatenate([v] * HEADS, axis=0) * mask_v           # (KEYL, H)

        # scores: one NT dot for all batches/heads; mask invalid columns.
        s = jax.lax.dot_general(q, kp, (((1,), (1,)), ((), ())),
                                preferred_element_type=jnp.float32) + smask
        s = s - jnp.max(s, axis=-1, keepdims=True)   # shared row max (per-seg exact)
        p = jnp.exp(s).astype(bf16)                  # unnormalized probabilities
        ctx = jnp.dot(p, vp, preferred_element_type=jnp.float32)     # (TOKP, H)
        den = jnp.dot(p, mask_v, preferred_element_type=jnp.float32) # per-head sums
        ctx = ctx * pl.reciprocal(den, approx=True)  # normalize output, not p
        x = x + jnp.dot(ctx.astype(bf16), wo,
                        preferred_element_type=jnp.float32) + bo

        # --- MLP (pre-LN, tanh GELU) ---
        h2 = _ln(x, ln2g, ln2b)
        m1 = jnp.dot(h2.astype(bf16), w1,
                     preferred_element_type=jnp.float32) + b1
        m1 = jax.nn.gelu(m1, approximate=True)
        x = x + jnp.dot(m1.astype(bf16), w2,
                        preferred_element_type=jnp.float32) + b2

    # final LayerNorm + classifier on the CLS rows only (row b*SEQP per batch)
    hv = hv_ref[...]
    lng = hv[0:1, 0:HIDDEN]
    lnb = hv[1:2, 0:HIDDEN]
    bc = hv[2:3, :]
    cls = jnp.concatenate([x[b * SEQP:b * SEQP + 1, :] for b in range(BATCH)],
                          axis=0)                                     # (BATCH, H)
    hcls = _ln(cls, lng, lnb)
    o_ref[...] = jnp.dot(hcls.astype(bf16), hw_ref[...],
                         preferred_element_type=jnp.float32) + bc


# ----------------------------- wrapper / glue ---------------------------------

def extract_tokens(x):
    """(B,C,H,W) NCHW -> (B*SEQP, CPP) padded token rows.

    Row b*SEQP+0 is the (zero) CLS slot, rows 1..16 the flattened patches in
    (c, ph, pw) order (matching Conv2d(stride=P) + flatten + transpose), rows
    17..31 are zero padding.
    """
    B, C, H, W = x.shape
    hp, wp = H // PATCH, W // PATCH
    xp = x.reshape(B, C, hp, PATCH, wp, PATCH)
    xp = xp.transpose(0, 2, 4, 1, 3, 5).reshape(B, hp * wp, CPP)
    tok = jnp.concatenate(
        [jnp.zeros((B, 1, CPP), xp.dtype), xp,
         jnp.zeros((B, SEQP - 1 - hp * wp, CPP), xp.dtype)], axis=1)
    return tok.reshape(B * SEQP, CPP)


def init_params(key):
    std = 0.02
    ks = jax.random.split(key, 8 + LAYERS)

    def normal(k, shape):
        return std * jax.random.normal(k, shape, jnp.float32)

    params = {
        "patch_w": normal(ks[0], (CPP, HIDDEN)),
        "patch_b": jnp.zeros((1, HIDDEN), jnp.float32),
        "cls": normal(ks[1], (1, 1, HIDDEN)),
        "pos": normal(ks[2], (1, SEQ, HIDDEN)),
        "ln_g": jnp.ones((1, HIDDEN), jnp.float32),
        "ln_b": jnp.zeros((1, HIDDEN), jnp.float32),
        "wc": normal(ks[3], (HIDDEN, NUM_CLASSES)),
        "bc": jnp.zeros((1, NUM_CLASSES), jnp.float32),
        "layers": [],
    }
    for li in range(LAYERS):
        lk = jax.random.split(ks[8 + li], 6)
        params["layers"].append({
            "ln1_g": jnp.ones((1, HIDDEN), jnp.float32),
            "ln1_b": jnp.zeros((1, HIDDEN), jnp.float32),
            "wq": normal(lk[0], (HIDDEN, HIDDEN)),
            "bq": jnp.zeros((1, HIDDEN), jnp.float32),
            "wk": normal(lk[1], (HIDDEN, HIDDEN)),
            "bk": jnp.zeros((1, HIDDEN), jnp.float32),
            "wv": normal(lk[2], (HIDDEN, HIDDEN)),
            "bv": jnp.zeros((1, HIDDEN), jnp.float32),
            "wo": normal(lk[3], (HIDDEN, HIDDEN)),
            "bo": jnp.zeros((1, HIDDEN), jnp.float32),
            "ln2_g": jnp.ones((1, HIDDEN), jnp.float32),
            "ln2_b": jnp.zeros((1, HIDDEN), jnp.float32),
            "w1": normal(lk[4], (HIDDEN, INTERMEDIATE)),
            "b1": jnp.zeros((1, INTERMEDIATE), jnp.float32),
            "w2": normal(lk[5], (INTERMEDIATE, HIDDEN)),
            "b2": jnp.zeros((1, HIDDEN), jnp.float32),
        })
    return params


def prepare_params(p):
    """One-time packing of raw params into kernel slabs (not per forward call)."""
    inv_scale = 1.0 / math.sqrt(HEAD_DIM)     # attention scale folded into wq/bq
    lw, lv = [], []
    for lp in p["layers"]:
        wqkv = jnp.concatenate([lp["wq"] * inv_scale, lp["wk"], lp["wv"]], axis=1)
        W = jnp.zeros((W_ROWS, SLAB_W), jnp.float32)
        W = W.at[R_WQKV:R_WO, 0:3 * HIDDEN].set(wqkv)
        W = W.at[R_WO:R_W1, 0:HIDDEN].set(lp["wo"])
        W = W.at[R_W1:R_W2, 0:INTERMEDIATE].set(lp["w1"])
        W = W.at[R_W2:W_ROWS, 0:HIDDEN].set(lp["w2"])
        lw.append(W.astype(jnp.bfloat16))

        V = jnp.zeros((VEC_ROWS, SLAB_W), jnp.float32)
        V = V.at[0, 0:HIDDEN].set(lp["ln1_g"][0])
        V = V.at[1, 0:HIDDEN].set(lp["ln1_b"][0])
        V = V.at[2, 0:3 * HIDDEN].set(
            jnp.concatenate([lp["bq"] * inv_scale, lp["bk"], lp["bv"]], axis=1)[0])
        V = V.at[3, 0:HIDDEN].set(lp["bo"][0])
        V = V.at[4, 0:HIDDEN].set(lp["ln2_g"][0])
        V = V.at[5, 0:HIDDEN].set(lp["ln2_b"][0])
        V = V.at[6, 0:INTERMEDIATE].set(lp["b1"][0])
        V = V.at[7, 0:HIDDEN].set(lp["b2"][0])
        lv.append(V)

    layers_w = jnp.stack(lw)                         # (LAYERS, 160, 128) bf16
    layers_v = jnp.stack(lv)                         # (LAYERS, 8, 128)   f32

    # Additive token slab: CLS + pos[0] at row 0, pos[i] + patch bias at 1..16,
    # zero at pad rows; tiled over the batch-folded token axis.
    add_b = jnp.zeros((SEQP, HIDDEN), jnp.float32)
    add_b = add_b.at[0].set(p["cls"][0, 0] + p["pos"][0, 0])
    add_b = add_b.at[1:SEQ].set(p["pos"][0, 1:] + p["patch_b"])
    add = jnp.tile(add_b, (BATCH, 1))                # (TOKP, HIDDEN)

    # Attention packing masks.  Packed key column c = h*64 + b*32 + j.
    d = jnp.arange(HIDDEN)
    c = jnp.arange(KEYL)
    t = jnp.arange(TOKP)
    # block-diagonal head selector (keys, values and denominator share it)
    mask_v = (c[:, None] // TOKP == d[None, :] // HEAD_DIM).astype(jnp.bfloat16)
    # additive score mask: valid iff same batch and key position < SEQ
    valid = ((t[:, None] // SEQP) == ((c[None, :] // SEQP) % BATCH)) \
        & ((c[None, :] % SEQP) < SEQ)
    smask = jnp.where(valid, 0.0, -1e9).astype(jnp.float32)

    head_w = jnp.zeros((HIDDEN, LOGIT_PAD), jnp.float32)
    head_w = head_w.at[:, 0:NUM_CLASSES].set(p["wc"]).astype(jnp.bfloat16)
    head_v = jnp.zeros((VEC_ROWS, LOGIT_PAD), jnp.float32)
    head_v = head_v.at[0, 0:HIDDEN].set(p["ln_g"][0])
    head_v = head_v.at[1, 0:HIDDEN].set(p["ln_b"][0])
    head_v = head_v.at[2, 0:NUM_CLASSES].set(p["bc"][0])

    return {"patch_w": p["patch_w"].astype(jnp.bfloat16),
            "add": add, "layers_w": layers_w, "layers_v": layers_v,
            "mask_v": mask_v, "smask": smask,
            "head_w": head_w, "head_v": head_v}


def vit_forward(x, kp):
    tokens = extract_tokens(x)                       # (TOKP, CPP)
    logits_pad = pl.pallas_call(
        _vit_fused_kernel,
        out_shape=jax.ShapeDtypeStruct((BATCH, LOGIT_PAD), jnp.float32),
        grid=(1,),
        in_specs=[
            pl.BlockSpec((TOKP, CPP), lambda i: (0, 0)),
            pl.BlockSpec((CPP, HIDDEN), lambda i: (0, 0)),
            pl.BlockSpec((TOKP, HIDDEN), lambda i: (0, 0)),
            pl.BlockSpec((LAYERS, W_ROWS, SLAB_W), lambda i: (0, 0, 0)),
            pl.BlockSpec((LAYERS, VEC_ROWS, SLAB_W), lambda i: (0, 0, 0)),
            pl.BlockSpec((KEYL, HIDDEN), lambda i: (0, 0)),
            pl.BlockSpec((TOKP, KEYL), lambda i: (0, 0)),
            pl.BlockSpec((HIDDEN, LOGIT_PAD), lambda i: (0, 0)),
            pl.BlockSpec((VEC_ROWS, LOGIT_PAD), lambda i: (0, 0)),
        ],
        out_specs=pl.BlockSpec((BATCH, LOGIT_PAD), lambda i: (0, 0)),
        compiler_params=pltpu.CompilerParams(
            dimension_semantics=("arbitrary",)),
    )(tokens, kp["patch_w"], kp["add"], kp["layers_w"], kp["layers_v"],
      kp["mask_v"], kp["smask"], kp["head_w"], kp["head_v"])
    return logits_pad[:, :NUM_CLASSES]


# ----------------------------- pure-JAX reference ----------------------------

def vit_forward_ref(x, params):
    def ln(z, g, b):
        m = jnp.mean(z, axis=-1, keepdims=True)
        v = jnp.mean((z - m) ** 2, axis=-1, keepdims=True)
        return (z - m) * jax.lax.rsqrt(v + EPS) * g[0] + b[0]

    B = x.shape[0]
    hp, wp = IMAGE // PATCH, IMAGE // PATCH
    patches = x.reshape(B, CHANNELS, hp, PATCH, wp, PATCH)
    patches = patches.transpose(0, 2, 4, 1, 3, 5).reshape(B, hp * wp, CPP)
    pe = patches @ params["patch_w"] + params["patch_b"]
    cls = jnp.broadcast_to(params["cls"], (B, 1, HIDDEN))
    h = jnp.concatenate([cls, pe], axis=1) + params["pos"]
    for p in params["layers"]:
        a = ln(h, p["ln1_g"], p["ln1_b"])
        q = a @ p["wq"] + p["bq"][0]
        k = a @ p["wk"] + p["bk"][0]
        v = a @ p["wv"] + p["bv"][0]
        q = q.reshape(B, SEQ, HEADS, HEAD_DIM).transpose(0, 2, 1, 3)
        k = k.reshape(B, SEQ, HEADS, HEAD_DIM).transpose(0, 2, 1, 3)
        v = v.reshape(B, SEQ, HEADS, HEAD_DIM).transpose(0, 2, 1, 3)
        s = jnp.einsum("bhqd,bhkd->bhqk", q, k) / math.sqrt(HEAD_DIM)
        pr = jax.nn.softmax(s, axis=-1)
        ctx = jnp.einsum("bhqk,bhkd->bhqd", pr, v)
        ctx = ctx.transpose(0, 2, 1, 3).reshape(B, SEQ, HIDDEN)
        h = h + ctx @ p["wo"] + p["bo"][0]
        a2 = ln(h, p["ln2_g"], p["ln2_b"])
        m1 = a2 @ p["w1"] + p["b1"][0]
        m1 = 0.5 * m1 * (1.0 + jax.lax.erf(m1 * INV_SQRT2))
        h = h + m1 @ p["w2"] + p["b2"][0]
    cls_tok = ln(h, params["ln_g"], params["ln_b"])[:, 0, :]
    return cls_tok @ params["wc"] + params["bc"]


# ----------------------------- main -------------------------------------------

if __name__ == "__main__":
    key = jax.random.PRNGKey(0)
    kx, kparam = jax.random.split(key)
    x = jax.random.normal(kx, (BATCH, CHANNELS, IMAGE, IMAGE), jnp.float32)
    params = init_params(kparam)
    kparams = prepare_params(params)          # one-time weight packing

    fwd = jax.jit(vit_forward)
    logits = jax.block_until_ready(fwd(x, kparams))
    assert logits.shape == (BATCH, NUM_CLASSES)

    ref = jax.block_until_ready(vit_forward_ref(x, params))
    max_err = float(jnp.max(jnp.abs(logits - ref)))
    assert jnp.allclose(logits, ref, atol=2e-2, rtol=2e-2), f"max_err={max_err}"

    print("KERNEL_OK")
</pallas_src>

<mosaic_0001>
module attributes {stable_mosaic.version = 11 : i64} {
  func.func @_vit_fused_kernel(%arg0: i32, %arg1: memref<64x48xf32, #tpu.memory_space<vmem>>, %arg2: memref<48x32xbf16, #tpu.memory_space<vmem>>, %arg3: memref<64x32xf32, #tpu.memory_space<vmem>>, %arg4: memref<2x160x128xbf16, #tpu.memory_space<vmem>>, %arg5: memref<2x8x128xf32, #tpu.memory_space<vmem>>, %arg6: memref<256x32xbf16, #tpu.memory_space<vmem>>, %arg7: memref<64x256xf32, #tpu.memory_space<vmem>>, %arg8: memref<32x128xbf16, #tpu.memory_space<vmem>>, %arg9: memref<8x128xf32, #tpu.memory_space<vmem>>, %arg10: memref<2x128xf32, #tpu.memory_space<vmem>>) attributes {dimension_semantics = [#tpu.dimension_semantics<arbitrary>], iteration_bounds = array<i64: 1>, scalar_prefetch = 0 : i64, scratch_operands = 0 : i64, tpu.core_type = #tpu.core_type<tc>, window_params = [{pipeline_mode = #tpu.pipeline_mode<synchronous>, transform_indices = @transform_0, window_bounds = array<i64: 64, 48>}, {pipeline_mode = #tpu.pipeline_mode<synchronous>, transform_indices = @transform_1, window_bounds = array<i64: 48, 32>}, {pipeline_mode = #tpu.pipeline_mode<synchronous>, transform_indices = @transform_2, window_bounds = array<i64: 64, 32>}, {pipeline_mode = #tpu.pipeline_mode<synchronous>, transform_indices = @transform_3, window_bounds = array<i64: 2, 160, 128>}, {pipeline_mode = #tpu.pipeline_mode<synchronous>, transform_indices = @transform_4, window_bounds = array<i64: 2, 8, 128>}, {pipeline_mode = #tpu.pipeline_mode<synchronous>, transform_indices = @transform_5, window_bounds = array<i64: 256, 32>}, {pipeline_mode = #tpu.pipeline_mode<synchronous>, transform_indices = @transform_6, window_bounds = array<i64: 64, 256>}, {pipeline_mode = #tpu.pipeline_mode<synchronous>, transform_indices = @transform_7, window_bounds = array<i64: 32, 128>}, {pipeline_mode = #tpu.pipeline_mode<synchronous>, transform_indices = @transform_8, window_bounds = array<i64: 8, 128>}, {pipeline_mode = #tpu.pipeline_mode<synchronous>, transform_indices = @transform_9, window_bounds = array<i64: 2, 128>}]} {
    %c0 = arith.constant 0 : index
    %c0_0 = arith.constant 0 : index
    %0 = vector.load %arg1[%c0, %c0_0] : memref<64x48xf32, #tpu.memory_space<vmem>>, vector<64x48xf32>
    %1 = arith.truncf %0 : vector<64x48xf32> to vector<64x48xbf16>
    %c0_1 = arith.constant 0 : index
    %c0_2 = arith.constant 0 : index
    %2 = vector.load %arg2[%c0_1, %c0_2] : memref<48x32xbf16, #tpu.memory_space<vmem>>, vector<48x32xbf16>
    %cst = arith.constant dense<0.000000e+00> : vector<64x32xf32>
    %3 = tpu.matmul %1, %2, %cst {dimension_numbers = #tpu.dot_dimension_numbers<[1], [0], [0], [1], [0, 0, 1, 1], [], []>} : vector<64x48xbf16>, vector<48x32xbf16>, vector<64x32xf32> -> vector<64x32xf32>
    %c0_3 = arith.constant 0 : index
    %c0_4 = arith.constant 0 : index
    %4 = vector.load %arg3[%c0_3, %c0_4] : memref<64x32xf32, #tpu.memory_space<vmem>>, vector<64x32xf32>
    %5 = arith.addf %3, %4 : vector<64x32xf32>
    %c0_5 = arith.constant 0 : index
    %c0_6 = arith.constant 0 : index
    %6 = vector.load %arg6[%c0_5, %c0_6] : memref<256x32xbf16, #tpu.memory_space<vmem>>, vector<256x32xbf16>
    %c0_7 = arith.constant 0 : index
    %c0_8 = arith.constant 0 : index
    %7 = vector.load %arg7[%c0_7, %c0_8] : memref<64x256xf32, #tpu.memory_space<vmem>>, vector<64x256xf32>
    %c0_9 = arith.constant 0 : index
    %c0_10 = arith.constant 0 : index
    %c0_11 = arith.constant 0 : index
    %8 = vector.load %arg4[%c0_9, %c0_10, %c0_11] : memref<2x160x128xbf16, #tpu.memory_space<vmem>>, vector<1x160x128xbf16>
    %9 = vector.shape_cast %8 : vector<1x160x128xbf16> to vector<160x128xbf16>
    %c0_12 = arith.constant 0 : index
    %c0_13 = arith.constant 0 : index
    %c0_14 = arith.constant 0 : index
    %10 = vector.load %arg5[%c0_12, %c0_13, %c0_14] : memref<2x8x128xf32, #tpu.memory_space<vmem>>, vector<1x8x128xf32>
    %11 = vector.shape_cast %10 : vector<1x8x128xf32> to vector<8x128xf32>
    %12 = vector.extract_strided_slice %9 {offsets = [0, 0], sizes = [32, 128], strides = [1, 1]} : vector<160x128xbf16> to vector<32x128xbf16>
    %13 = vector.extract_strided_slice %9 {offsets = [32, 0], sizes = [32, 32], strides = [1, 1]} : vector<160x128xbf16> to vector<32x32xbf16>
    %14 = vector.extract_strided_slice %9 {offsets = [64, 0], sizes = [32, 64], strides = [1, 1]} : vector<160x128xbf16> to vector<32x64xbf16>
    %15 = vector.extract_strided_slice %9 {offsets = [96, 0], sizes = [64, 32], strides = [1, 1]} : vector<160x128xbf16> to vector<64x32xbf16>
    %16 = vector.extract_strided_slice %11 {offsets = [0, 0], sizes = [1, 32], strides = [1, 1]} : vector<8x128xf32> to vector<1x32xf32>
    %17 = vector.extract_strided_slice %11 {offsets = [1, 0], sizes = [1, 32], strides = [1, 1]} : vector<8x128xf32> to vector<1x32xf32>
    %18 = vector.extract_strided_slice %11 {offsets = [2, 0], sizes = [1, 128], strides = [1, 1]} : vector<8x128xf32> to vector<1x128xf32>
    %19 = vector.extract_strided_slice %11 {offsets = [3, 0], sizes = [1, 32], strides = [1, 1]} : vector<8x128xf32> to vector<1x32xf32>
    %20 = vector.extract_strided_slice %11 {offsets = [4, 0], sizes = [1, 32], strides = [1, 1]} : vector<8x128xf32> to vector<1x32xf32>
    %21 = vector.extract_strided_slice %11 {offsets = [5, 0], sizes = [1, 32], strides = [1, 1]} : vector<8x128xf32> to vector<1x32xf32>
    %22 = vector.extract_strided_slice %11 {offsets = [6, 0], sizes = [1, 64], strides = [1, 1]} : vector<8x128xf32> to vector<1x64xf32>
    %23 = vector.extract_strided_slice %11 {offsets = [7, 0], sizes = [1, 32], strides = [1, 1]} : vector<8x128xf32> to vector<1x32xf32>
    %cst_15 = arith.constant dense<0.000000e+00> : vector<64xf32>
    %24 = vector.multi_reduction <add>, %5, %cst_15 [1] : vector<64x32xf32> to vector<64xf32>
    %25 = vector.shape_cast %24 : vector<64xf32> to vector<64x1xf32>
    %cst_16 = arith.constant 3.200000e+01 : f32
    %26 = vector.broadcast %cst_16 : f32 to vector<64x1xf32>
    %27 = arith.divf %25, %26 : vector<64x1xf32>
    %28 = vector.broadcast %27 : vector<64x1xf32> to vector<64x32xf32>
    %29 = arith.subf %5, %28 : vector<64x32xf32>
    %30 = arith.mulf %29, %29 : vector<64x32xf32>
    %cst_17 = arith.constant dense<0.000000e+00> : vector<64xf32>
    %31 = vector.multi_reduction <add>, %30, %cst_17 [1] : vector<64x32xf32> to vector<64xf32>
    %32 = vector.shape_cast %31 : vector<64xf32> to vector<64x1xf32>
    %cst_18 = arith.constant 3.200000e+01 : f32
    %33 = vector.broadcast %cst_18 : f32 to vector<64x1xf32>
    %34 = arith.divf %32, %33 : vector<64x1xf32>
    %cst_19 = arith.constant 9.99999996E-13 : f32
    %35 = vector.broadcast %cst_19 : f32 to vector<64x1xf32>
    %36 = arith.addf %34, %35 : vector<64x1xf32>
    %37 = math.rsqrt %36 : vector<64x1xf32>
    %38 = vector.broadcast %37 : vector<64x1xf32> to vector<64x32xf32>
    %39 = arith.mulf %29, %38 : vector<64x32xf32>
    %40 = vector.broadcast %16 : vector<1x32xf32> to vector<64x32xf32>
    %41 = arith.mulf %39, %40 : vector<64x32xf32>
    %42 = vector.broadcast %17 : vector<1x32xf32> to vector<64x32xf32>
    %43 = arith.addf %41, %42 : vector<64x32xf32>
    %44 = arith.truncf %43 : vector<64x32xf32> to vector<64x32xbf16>
    %cst_20 = arith.constant dense<0.000000e+00> : vector<64x128xf32>
    %45 = tpu.matmul %44, %12, %cst_20 {dimension_numbers = #tpu.dot_dimension_numbers<[1], [0], [0], [1], [0, 0, 1, 1], [], []>} : vector<64x32xbf16>, vector<32x128xbf16>, vector<64x128xf32> -> vector<64x128xf32>
    %46 = vector.broadcast %18 : vector<1x128xf32> to vector<64x128xf32>
    %47 = arith.addf %45, %46 : vector<64x128xf32>
    %48 = vector.extract_strided_slice %47 {offsets = [0, 0], sizes = [64, 32], strides = [1, 1]} : vector<64x128xf32> to vector<64x32xf32>
    %49 = arith.truncf %48 : vector<64x32xf32> to vector<64x32xbf16>
    %50 = vector.extract_strided_slice %47 {offsets = [0, 32], sizes = [64, 32], strides = [1, 1]} : vector<64x128xf32> to vector<64x32xf32>
    %51 = arith.truncf %50 : vector<64x32xf32> to vector<64x32xbf16>
    %52 = vector.extract_strided_slice %47 {offsets = [0, 64], sizes = [64, 32], strides = [1, 1]} : vector<64x128xf32> to vector<64x32xf32>
    %53 = arith.truncf %52 : vector<64x32xf32> to vector<64x32xbf16>
    %54 = tpu.concatenate %51, %51, %51, %51 in 0 : vector<64x32xbf16>, vector<64x32xbf16>, vector<64x32xbf16>, vector<64x32xbf16> -> vector<256x32xbf16>
    %55 = arith.mulf %54, %6 : vector<256x32xbf16>
    %56 = tpu.concatenate %53, %53, %53, %53 in 0 : vector<64x32xbf16>, vector<64x32xbf16>, vector<64x32xbf16>, vector<64x32xbf16> -> vector<256x32xbf16>
    %57 = arith.mulf %56, %6 : vector<256x32xbf16>
    %cst_21 = arith.constant dense<0.000000e+00> : vector<64x256xf32>
    %58 = tpu.matmul %49, %55, %cst_21 {dimension_numbers = #tpu.dot_dimension_numbers<[1], [1], [0], [0], [0, 0, 1, 0], [], []>} : vector<64x32xbf16>, vector<256x32xbf16>, vector<64x256xf32> -> vector<64x256xf32>
    %59 = arith.addf %58, %7 : vector<64x256xf32>
    %cst_22 = arith.constant dense<0xFF800000> : vector<64xf32>
    %60 = vector.multi_reduction <maximumf>, %59, %cst_22 [1] : vector<64x256xf32> to vector<64xf32>
    %61 = vector.shape_cast %60 : vector<64xf32> to vector<64x1xf32>
    %62 = vector.broadcast %61 : vector<64x1xf32> to vector<64x256xf32>
    %63 = arith.subf %59, %62 : vector<64x256xf32>
    %64 = math.exp %63 : vector<64x256xf32>
    %65 = arith.truncf %64 : vector<64x256xf32> to vector<64x256xbf16>
    %cst_23 = arith.constant dense<0.000000e+00> : vector<64x32xf32>
    %66 = tpu.matmul %65, %57, %cst_23 {dimension_numbers = #tpu.dot_dimension_numbers<[1], [0], [0], [1], [0, 0, 1, 1], [], []>} : vector<64x256xbf16>, vector<256x32xbf16>, vector<64x32xf32> -> vector<64x32xf32>
    %cst_24 = arith.constant dense<0.000000e+00> : vector<64x32xf32>
    %67 = tpu.matmul %65, %6, %cst_24 {dimension_numbers = #tpu.dot_dimension_numbers<[1], [0], [0], [1], [0, 0, 1, 1], [], []>} : vector<64x256xbf16>, vector<256x32xbf16>, vector<64x32xf32> -> vector<64x32xf32>
    %68 = tpu.reciprocal %67 {approx = true} : vector<64x32xf32> -> vector<64x32xf32>
    %69 = arith.mulf %66, %68 : vector<64x32xf32>
    %70 = arith.truncf %69 : vector<64x32xf32> to vector<64x32xbf16>
    %cst_25 = arith.constant dense<0.000000e+00> : vector<64x32xf32>
    %71 = tpu.matmul %70, %13, %cst_25 {dimension_numbers = #tpu.dot_dimension_numbers<[1], [0], [0], [1], [0, 0, 1, 1], [], []>} : vector<64x32xbf16>, vector<32x32xbf16>, vector<64x32xf32> -> vector<64x32xf32>
    %72 = arith.addf %5, %71 : vector<64x32xf32>
    %73 = vector.broadcast %19 : vector<1x32xf32> to vector<64x32xf32>
    %74 = arith.addf %72, %73 : vector<64x32xf32>
    %cst_26 = arith.constant dense<0.000000e+00> : vector<64xf32>
    %75 = vector.multi_reduction <add>, %74, %cst_26 [1] : vector<64x32xf32> to vector<64xf32>
    %76 = vector.shape_cast %75 : vector<64xf32> to vector<64x1xf32>
    %cst_27 = arith.constant 3.200000e+01 : f32
    %77 = vector.broadcast %cst_27 : f32 to vector<64x1xf32>
    %78 = arith.divf %76, %77 : vector<64x1xf32>
    %79 = vector.broadcast %78 : vector<64x1xf32> to vector<64x32xf32>
    %80 = arith.subf %74, %79 : vector<64x32xf32>
    %81 = arith.mulf %80, %80 : vector<64x32xf32>
    %cst_28 = arith.constant dense<0.000000e+00> : vector<64xf32>
    %82 = vector.multi_reduction <add>, %81, %cst_28 [1] : vector<64x32xf32> to vector<64xf32>
    %83 = vector.shape_cast %82 : vector<64xf32> to vector<64x1xf32>
    %cst_29 = arith.constant 3.200000e+01 : f32
    %84 = vector.broadcast %cst_29 : f32 to vector<64x1xf32>
    %85 = arith.divf %83, %84 : vector<64x1xf32>
    %cst_30 = arith.constant 9.99999996E-13 : f32
    %86 = vector.broadcast %cst_30 : f32 to vector<64x1xf32>
    %87 = arith.addf %85, %86 : vector<64x1xf32>
    %88 = math.rsqrt %87 : vector<64x1xf32>
    %89 = vector.broadcast %88 : vector<64x1xf32> to vector<64x32xf32>
    %90 = arith.mulf %80, %89 : vector<64x32xf32>
    %91 = vector.broadcast %20 : vector<1x32xf32> to vector<64x32xf32>
    %92 = arith.mulf %90, %91 : vector<64x32xf32>
    %93 = vector.broadcast %21 : vector<1x32xf32> to vector<64x32xf32>
    %94 = arith.addf %92, %93 : vector<64x32xf32>
    %95 = arith.truncf %94 : vector<64x32xf32> to vector<64x32xbf16>
    %cst_31 = arith.constant dense<0.000000e+00> : vector<64x64xf32>
    %96 = tpu.matmul %95, %14, %cst_31 {dimension_numbers = #tpu.dot_dimension_numbers<[1], [0], [0], [1], [0, 0, 1, 1], [], []>} : vector<64x32xbf16>, vector<32x64xbf16>, vector<64x64xf32> -> vector<64x64xf32>
    %97 = vector.broadcast %22 : vector<1x64xf32> to vector<64x64xf32>
    %98 = arith.addf %96, %97 : vector<64x64xf32>
    %99 = arith.mulf %98, %98 : vector<64x64xf32>
    %100 = arith.mulf %98, %99 : vector<64x64xf32>
    %cst_32 = arith.constant 4.471500e-02 : f32
    %101 = vector.broadcast %cst_32 : f32 to vector<64x64xf32>
    %102 = arith.mulf %101, %100 : vector<64x64xf32>
    %103 = arith.addf %98, %102 : vector<64x64xf32>
    %cst_33 = arith.constant 0.797884583 : f32
    %104 = vector.broadcast %cst_33 : f32 to vector<64x64xf32>
    %105 = arith.mulf %104, %103 : vector<64x64xf32>
    %106 = math.tanh %105 : vector<64x64xf32>
    %cst_34 = arith.constant 1.000000e+00 : f32
    %107 = vector.broadcast %cst_34 : f32 to vector<64x64xf32>
    %108 = arith.addf %107, %106 : vector<64x64xf32>
    %cst_35 = arith.constant 5.000000e-01 : f32
    %109 = vector.broadcast %cst_35 : f32 to vector<64x64xf32>
    %110 = arith.mulf %109, %108 : vector<64x64xf32>
    %111 = arith.mulf %98, %110 : vector<64x64xf32>
    %112 = arith.truncf %111 : vector<64x64xf32> to vector<64x64xbf16>
    %cst_36 = arith.constant dense<0.000000e+00> : vector<64x32xf32>
    %113 = tpu.matmul %112, %15, %cst_36 {dimension_numbers = #tpu.dot_dimension_numbers<[1], [0], [0], [1], [0, 0, 1, 1], [], []>} : vector<64x64xbf16>, vector<64x32xbf16>, vector<64x32xf32> -> vector<64x32xf32>
    %114 = arith.addf %74, %113 : vector<64x32xf32>
    %115 = vector.broadcast %23 : vector<1x32xf32> to vector<64x32xf32>
    %116 = arith.addf %114, %115 : vector<64x32xf32>
    %c1 = arith.constant 1 : index
    %c0_37 = arith.constant 0 : index
    %c0_38 = arith.constant 0 : index
    %117 = vector.load %arg4[%c1, %c0_37, %c0_38] : memref<2x160x128xbf16, #tpu.memory_space<vmem>>, vector<1x160x128xbf16>
    %118 = vector.shape_cast %117 : vector<1x160x128xbf16> to vector<160x128xbf16>
    %c1_39 = arith.constant 1 : index
    %c0_40 = arith.constant 0 : index
    %c0_41 = arith.constant 0 : index
    %119 = vector.load %arg5[%c1_39, %c0_40, %c0_41] : memref<2x8x128xf32, #tpu.memory_space<vmem>>, vector<1x8x128xf32>
    %120 = vector.shape_cast %119 : vector<1x8x128xf32> to vector<8x128xf32>
    %121 = vector.extract_strided_slice %118 {offsets = [0, 0], sizes = [32, 128], strides = [1, 1]} : vector<160x128xbf16> to vector<32x128xbf16>
    %122 = vector.extract_strided_slice %118 {offsets = [32, 0], sizes = [32, 32], strides = [1, 1]} : vector<160x128xbf16> to vector<32x32xbf16>
    %123 = vector.extract_strided_slice %118 {offsets = [64, 0], sizes = [32, 64], strides = [1, 1]} : vector<160x128xbf16> to vector<32x64xbf16>
    %124 = vector.extract_strided_slice %118 {offsets = [96, 0], sizes = [64, 32], strides = [1, 1]} : vector<160x128xbf16> to vector<64x32xbf16>
    %125 = vector.extract_strided_slice %120 {offsets = [0, 0], sizes = [1, 32], strides = [1, 1]} : vector<8x128xf32> to vector<1x32xf32>
    %126 = vector.extract_strided_slice %120 {offsets = [1, 0], sizes = [1, 32], strides = [1, 1]} : vector<8x128xf32> to vector<1x32xf32>
    %127 = vector.extract_strided_slice %120 {offsets = [2, 0], sizes = [1, 128], strides = [1, 1]} : vector<8x128xf32> to vector<1x128xf32>
    %128 = vector.extract_strided_slice %120 {offsets = [3, 0], sizes = [1, 32], strides = [1, 1]} : vector<8x128xf32> to vector<1x32xf32>
    %129 = vector.extract_strided_slice %120 {offsets = [4, 0], sizes = [1, 32], strides = [1, 1]} : vector<8x128xf32> to vector<1x32xf32>
    %130 = vector.extract_strided_slice %120 {offsets = [5, 0], sizes = [1, 32], strides = [1, 1]} : vector<8x128xf32> to vector<1x32xf32>
    %131 = vector.extract_strided_slice %120 {offsets = [6, 0], sizes = [1, 64], strides = [1, 1]} : vector<8x128xf32> to vector<1x64xf32>
    %132 = vector.extract_strided_slice %120 {offsets = [7, 0], sizes = [1, 32], strides = [1, 1]} : vector<8x128xf32> to vector<1x32xf32>
    %cst_42 = arith.constant dense<0.000000e+00> : vector<64xf32>
    %133 = vector.multi_reduction <add>, %116, %cst_42 [1] : vector<64x32xf32> to vector<64xf32>
    %134 = vector.shape_cast %133 : vector<64xf32> to vector<64x1xf32>
    %cst_43 = arith.constant 3.200000e+01 : f32
    %135 = vector.broadcast %cst_43 : f32 to vector<64x1xf32>
    %136 = arith.divf %134, %135 : vector<64x1xf32>
    %137 = vector.broadcast %136 : vector<64x1xf32> to vector<64x32xf32>
    %138 = arith.subf %116, %137 : vector<64x32xf32>
    %139 = arith.mulf %138, %138 : vector<64x32xf32>
    %cst_44 = arith.constant dense<0.000000e+00> : vector<64xf32>
    %140 = vector.multi_reduction <add>, %139, %cst_44 [1] : vector<64x32xf32> to vector<64xf32>
    %141 = vector.shape_cast %140 : vector<64xf32> to vector<64x1xf32>
    %cst_45 = arith.constant 3.200000e+01 : f32
    %142 = vector.broadcast %cst_45 : f32 to vector<64x1xf32>
    %143 = arith.divf %141, %142 : vector<64x1xf32>
    %cst_46 = arith.constant 9.99999996E-13 : f32
    %144 = vector.broadcast %cst_46 : f32 to vector<64x1xf32>
    %145 = arith.addf %143, %144 : vector<64x1xf32>
    %146 = math.rsqrt %145 : vector<64x1xf32>
    %147 = vector.broadcast %146 : vector<64x1xf32> to vector<64x32xf32>
    %148 = arith.mulf %138, %147 : vector<64x32xf32>
    %149 = vector.broadcast %125 : vector<1x32xf32> to vector<64x32xf32>
    %150 = arith.mulf %148, %149 : vector<64x32xf32>
    %151 = vector.broadcast %126 : vector<1x32xf32> to vector<64x32xf32>
    %152 = arith.addf %150, %151 : vector<64x32xf32>
    %153 = arith.truncf %152 : vector<64x32xf32> to vector<64x32xbf16>
    %cst_47 = arith.constant dense<0.000000e+00> : vector<64x128xf32>
    %154 = tpu.matmul %153, %121, %cst_47 {dimension_numbers = #tpu.dot_dimension_numbers<[1], [0], [0], [1], [0, 0, 1, 1], [], []>} : vector<64x32xbf16>, vector<32x128xbf16>, vector<64x128xf32> -> vector<64x128xf32>
    %155 = vector.broadcast %127 : vector<1x128xf32> to vector<64x128xf32>
    %156 = arith.addf %154, %155 : vector<64x128xf32>
    %157 = vector.extract_strided_slice %156 {offsets = [0, 0], sizes = [64, 32], strides = [1, 1]} : vector<64x128xf32> to vector<64x32xf32>
    %158 = arith.truncf %157 : vector<64x32xf32> to vector<64x32xbf16>
    %159 = vector.extract_strided_slice %156 {offsets = [0, 32], sizes = [64, 32], strides = [1, 1]} : vector<64x128xf32> to vector<64x32xf32>
    %160 = arith.truncf %159 : vector<64x32xf32> to vector<64x32xbf16>
    %161 = vector.extract_strided_slice %156 {offsets = [0, 64], sizes = [64, 32], strides = [1, 1]} : vector<64x128xf32> to vector<64x32xf32>
    %162 = arith.truncf %161 : vector<64x32xf32> to vector<64x32xbf16>
    %163 = tpu.concatenate %160, %160, %160, %160 in 0 : vector<64x32xbf16>, vector<64x32xbf16>, vector<64x32xbf16>, vector<64x32xbf16> -> vector<256x32xbf16>
    %164 = arith.mulf %163, %6 : vector<256x32xbf16>
    %165 = tpu.concatenate %162, %162, %162, %162 in 0 : vector<64x32xbf16>, vector<64x32xbf16>, vector<64x32xbf16>, vector<64x32xbf16> -> vector<256x32xbf16>
    %166 = arith.mulf %165, %6 : vector<256x32xbf16>
    %cst_48 = arith.constant dense<0.000000e+00> : vector<64x256xf32>
    %167 = tpu.matmul %158, %164, %cst_48 {dimension_numbers = #tpu.dot_dimension_numbers<[1], [1], [0], [0], [0, 0, 1, 0], [], []>} : vector<64x32xbf16>, vector<256x32xbf16>, vector<64x256xf32> -> vector<64x256xf32>
    %168 = arith.addf %167, %7 : vector<64x256xf32>
    %cst_49 = arith.constant dense<0xFF800000> : vector<64xf32>
    %169 = vector.multi_reduction <maximumf>, %168, %cst_49 [1] : vector<64x256xf32> to vector<64xf32>
    %170 = vector.shape_cast %169 : vector<64xf32> to vector<64x1xf32>
    %171 = vector.broadcast %170 : vector<64x1xf32> to vector<64x256xf32>
    %172 = arith.subf %168, %171 : vector<64x256xf32>
    %173 = math.exp %172 : vector<64x256xf32>
    %174 = arith.truncf %173 : vector<64x256xf32> to vector<64x256xbf16>
    %cst_50 = arith.constant dense<0.000000e+00> : vector<64x32xf32>
    %175 = tpu.matmul %174, %166, %cst_50 {dimension_numbers = #tpu.dot_dimension_numbers<[1], [0], [0], [1], [0, 0, 1, 1], [], []>} : vector<64x256xbf16>, vector<256x32xbf16>, vector<64x32xf32> -> vector<64x32xf32>
    %cst_51 = arith.constant dense<0.000000e+00> : vector<64x32xf32>
    %176 = tpu.matmul %174, %6, %cst_51 {dimension_numbers = #tpu.dot_dimension_numbers<[1], [0], [0], [1], [0, 0, 1, 1], [], []>} : vector<64x256xbf16>, vector<256x32xbf16>, vector<64x32xf32> -> vector<64x32xf32>
    %177 = tpu.reciprocal %176 {approx = true} : vector<64x32xf32> -> vector<64x32xf32>
    %178 = arith.mulf %175, %177 : vector<64x32xf32>
    %179 = arith.truncf %178 : vector<64x32xf32> to vector<64x32xbf16>
    %cst_52 = arith.constant dense<0.000000e+00> : vector<64x32xf32>
    %180 = tpu.matmul %179, %122, %cst_52 {dimension_numbers = #tpu.dot_dimension_numbers<[1], [0], [0], [1], [0, 0, 1, 1], [], []>} : vector<64x32xbf16>, vector<32x32xbf16>, vector<64x32xf32> -> vector<64x32xf32>
    %181 = arith.addf %116, %180 : vector<64x32xf32>
    %182 = vector.broadcast %128 : vector<1x32xf32> to vector<64x32xf32>
    %183 = arith.addf %181, %182 : vector<64x32xf32>
    %cst_53 = arith.constant dense<0.000000e+00> : vector<64xf32>
    %184 = vector.multi_reduction <add>, %183, %cst_53 [1] : vector<64x32xf32> to vector<64xf32>
    %185 = vector.shape_cast %184 : vector<64xf32> to vector<64x1xf32>
    %cst_54 = arith.constant 3.200000e+01 : f32
    %186 = vector.broadcast %cst_54 : f32 to vector<64x1xf32>
    %187 = arith.divf %185, %186 : vector<64x1xf32>
    %188 = vector.broadcast %187 : vector<64x1xf32> to vector<64x32xf32>
    %189 = arith.subf %183, %188 : vector<64x32xf32>
    %190 = arith.mulf %189, %189 : vector<64x32xf32>
    %cst_55 = arith.constant dense<0.000000e+00> : vector<64xf32>
    %191 = vector.multi_reduction <add>, %190, %cst_55 [1] : vector<64x32xf32> to vector<64xf32>
    %192 = vector.shape_cast %191 : vector<64xf32> to vector<64x1xf32>
    %cst_56 = arith.constant 3.200000e+01 : f32
    %193 = vector.broadcast %cst_56 : f32 to vector<64x1xf32>
    %194 = arith.divf %192, %193 : vector<64x1xf32>
    %cst_57 = arith.constant 9.99999996E-13 : f32
    %195 = vector.broadcast %cst_57 : f32 to vector<64x1xf32>
    %196 = arith.addf %194, %195 : vector<64x1xf32>
    %197 = math.rsqrt %196 : vector<64x1xf32>
    %198 = vector.broadcast %197 : vector<64x1xf32> to vector<64x32xf32>
    %199 = arith.mulf %189, %198 : vector<64x32xf32>
    %200 = vector.broadcast %129 : vector<1x32xf32> to vector<64x32xf32>
    %201 = arith.mulf %199, %200 : vector<64x32xf32>
    %202 = vector.broadcast %130 : vector<1x32xf32> to vector<64x32xf32>
    %203 = arith.addf %201, %202 : vector<64x32xf32>
    %204 = arith.truncf %203 : vector<64x32xf32> to vector<64x32xbf16>
    %cst_58 = arith.constant dense<0.000000e+00> : vector<64x64xf32>
    %205 = tpu.matmul %204, %123, %cst_58 {dimension_numbers = #tpu.dot_dimension_numbers<[1], [0], [0], [1], [0, 0, 1, 1], [], []>} : vector<64x32xbf16>, vector<32x64xbf16>, vector<64x64xf32> -> vector<64x64xf32>
    %206 = vector.broadcast %131 : vector<1x64xf32> to vector<64x64xf32>
    %207 = arith.addf %205, %206 : vector<64x64xf32>
    %208 = arith.mulf %207, %207 : vector<64x64xf32>
    %209 = arith.mulf %207, %208 : vector<64x64xf32>
    %cst_59 = arith.constant 4.471500e-02 : f32
    %210 = vector.broadcast %cst_59 : f32 to vector<64x64xf32>
    %211 = arith.mulf %210, %209 : vector<64x64xf32>
    %212 = arith.addf %207, %211 : vector<64x64xf32>
    %cst_60 = arith.constant 0.797884583 : f32
    %213 = vector.broadcast %cst_60 : f32 to vector<64x64xf32>
    %214 = arith.mulf %213, %212 : vector<64x64xf32>
    %215 = math.tanh %214 : vector<64x64xf32>
    %cst_61 = arith.constant 1.000000e+00 : f32
    %216 = vector.broadcast %cst_61 : f32 to vector<64x64xf32>
    %217 = arith.addf %216, %215 : vector<64x64xf32>
    %cst_62 = arith.constant 5.000000e-01 : f32
    %218 = vector.broadcast %cst_62 : f32 to vector<64x64xf32>
    %219 = arith.mulf %218, %217 : vector<64x64xf32>
    %220 = arith.mulf %207, %219 : vector<64x64xf32>
    %221 = arith.truncf %220 : vector<64x64xf32> to vector<64x64xbf16>
    %cst_63 = arith.constant dense<0.000000e+00> : vector<64x32xf32>
    %222 = tpu.matmul %221, %124, %cst_63 {dimension_numbers = #tpu.dot_dimension_numbers<[1], [0], [0], [1], [0, 0, 1, 1], [], []>} : vector<64x64xbf16>, vector<64x32xbf16>, vector<64x32xf32> -> vector<64x32xf32>
    %223 = arith.addf %183, %222 : vector<64x32xf32>
    %224 = vector.broadcast %132 : vector<1x32xf32> to vector<64x32xf32>
    %225 = arith.addf %223, %224 : vector<64x32xf32>
    %c0_64 = arith.constant 0 : index
    %c0_65 = arith.constant 0 : index
    %226 = vector.load %arg9[%c0_64, %c0_65] : memref<8x128xf32, #tpu.memory_space<vmem>>, vector<8x128xf32>
    %227 = vector.extract_strided_slice %226 {offsets = [0, 0], sizes = [1, 32], strides = [1, 1]} : vector<8x128xf32> to vector<1x32xf32>
    %228 = vector.extract_strided_slice %226 {offsets = [1, 0], sizes = [1, 32], strides = [1, 1]} : vector<8x128xf32> to vector<1x32xf32>
    %229 = vector.extract_strided_slice %226 {offsets = [2, 0], sizes = [1, 128], strides = [1, 1]} : vector<8x128xf32> to vector<1x128xf32>
    %230 = vector.extract_strided_slice %225 {offsets = [0, 0], sizes = [1, 32], strides = [1, 1]} : vector<64x32xf32> to vector<1x32xf32>
    %231 = vector.extract_strided_slice %225 {offsets = [32, 0], sizes = [1, 32], strides = [1, 1]} : vector<64x32xf32> to vector<1x32xf32>
    %232 = tpu.concatenate %230, %231 in 0 : vector<1x32xf32>, vector<1x32xf32> -> vector<2x32xf32>
    %cst_66 = arith.constant dense<0.000000e+00> : vector<2xf32>
    %233 = vector.multi_reduction <add>, %232, %cst_66 [1] : vector<2x32xf32> to vector<2xf32>
    %234 = vector.shape_cast %233 : vector<2xf32> to vector<2x1xf32>
    %cst_67 = arith.constant 3.200000e+01 : f32
    %235 = vector.broadcast %cst_67 : f32 to vector<2x1xf32>
    %236 = arith.divf %234, %235 : vector<2x1xf32>
    %237 = vector.broadcast %236 : vector<2x1xf32> to vector<2x32xf32>
    %238 = arith.subf %232, %237 : vector<2x32xf32>
    %239 = arith.mulf %238, %238 : vector<2x32xf32>
    %cst_68 = arith.constant dense<0.000000e+00> : vector<2xf32>
    %240 = vector.multi_reduction <add>, %239, %cst_68 [1] : vector<2x32xf32> to vector<2xf32>
    %241 = vector.shape_cast %240 : vector<2xf32> to vector<2x1xf32>
    %cst_69 = arith.constant 3.200000e+01 : f32
    %242 = vector.broadcast %cst_69 : f32 to vector<2x1xf32>
    %243 = arith.divf %241, %242 : vector<2x1xf32>
    %cst_70 = arith.constant 9.99999996E-13 : f32
    %244 = vector.broadcast %cst_70 : f32 to vector<2x1xf32>
    %245 = arith.addf %243, %244 : vector<2x1xf32>
    %246 = math.rsqrt %245 : vector<2x1xf32>
    %247 = vector.broadcast %246 : vector<2x1xf32> to vector<2x32xf32>
    %248 = arith.mulf %238, %247 : vector<2x32xf32>
    %249 = vector.broadcast %227 : vector<1x32xf32> to vector<2x32xf32>
    %250 = arith.mulf %248, %249 : vector<2x32xf32>
    %251 = vector.broadcast %228 : vector<1x32xf32> to vector<2x32xf32>
    %252 = arith.addf %250, %251 : vector<2x32xf32>
    %253 = arith.truncf %252 : vector<2x32xf32> to vector<2x32xbf16>
    %c0_71 = arith.constant 0 : index
    %c0_72 = arith.constant 0 : index
    %254 = vector.load %arg8[%c0_71, %c0_72] : memref<32x128xbf16, #tpu.memory_space<vmem>>, vector<32x128xbf16>
    %cst_73 = arith.constant dense<0.000000e+00> : vector<2x128xf32>
    %255 = tpu.matmul %253, %254, %cst_73 {dimension_numbers = #tpu.dot_dimension_numbers<[1], [0], [0], [1], [0, 0, 1, 1], [], []>} : vector<2x32xbf16>, vector<32x128xbf16>, vector<2x128xf32> -> vector<2x128xf32>
    %256 = vector.broadcast %229 : vector<1x128xf32> to vector<2x128xf32>
    %257 = arith.addf %255, %256 : vector<2x128xf32>
    %c0_74 = arith.constant 0 : index
    %c0_75 = arith.constant 0 : index
    %258 = vector.load %arg10[%c0_74, %c0_75] : memref<2x128xf32, #tpu.memory_space<vmem>>, vector<2x128xf32>
    tpu.vector_store %arg10[%c0_74, %c0_75], %257 {strides = array<i32>} : memref<2x128xf32, #tpu.memory_space<vmem>>, vector<2x128xf32>,
    return
  }
  func.func @transform_0(%arg0: i32) -> (i32, i32) {
    %c0_i32 = arith.constant 0 : i32
    %c0_i32_0 = arith.constant 0 : i32
    %c0_i32_1 = arith.constant 0 : i32
    return %c0_i32, %c0_i32_0 : i32, i32
  }
  func.func @transform_1(%arg0: i32) -> (i32, i32) {
    %c0_i32 = arith.constant 0 : i32
    %c0_i32_0 = arith.constant 0 : i32
    %c0_i32_1 = arith.constant 0 : i32
    return %c0_i32, %c0_i32_0 : i32, i32
  }
  func.func @transform_2(%arg0: i32) -> (i32, i32) {
    %c0_i32 = arith.constant 0 : i32
    %c0_i32_0 = arith.constant 0 : i32
    %c0_i32_1 = arith.constant 0 : i32
    return %c0_i32, %c0_i32_0 : i32, i32
  }
  func.func @transform_3(%arg0: i32) -> (i32, i32, i32) {
    %c0_i32 = arith.constant 0 : i32
    %c0_i32_0 = arith.constant 0 : i32
    %c0_i32_1 = arith.constant 0 : i32
    %c0_i32_2 = arith.constant 0 : i32
    return %c0_i32, %c0_i32_0, %c0_i32_1 : i32, i32, i32
  }
  func.func @transform_4(%arg0: i32) -> (i32, i32, i32) {
    %c0_i32 = arith.constant 0 : i32
    %c0_i32_0 = arith.constant 0 : i32
    %c0_i32_1 = arith.constant 0 : i32
    %c0_i32_2 = arith.constant 0 : i32
    return %c0_i32, %c0_i32_0, %c0_i32_1 : i32, i32, i32
  }
  func.func @transform_5(%arg0: i32) -> (i32, i32) {
    %c0_i32 = arith.constant 0 : i32
    %c0_i32_0 = arith.constant 0 : i32
    %c0_i32_1 = arith.constant 0 : i32
    return %c0_i32, %c0_i32_0 : i32, i32
  }
  func.func @transform_6(%arg0: i32) -> (i32, i32) {
    %c0_i32 = arith.constant 0 : i32
    %c0_i32_0 = arith.constant 0 : i32
    %c0_i32_1 = arith.constant 0 : i32
    return %c0_i32, %c0_i32_0 : i32, i32
  }
  func.func @transform_7(%arg0: i32) -> (i32, i32) {
    %c0_i32 = arith.constant 0 : i32
    %c0_i32_0 = arith.constant 0 : i32
    %c0_i32_1 = arith.constant 0 : i32
    return %c0_i32, %c0_i32_0 : i32, i32
  }
  func.func @transform_8(%arg0: i32) -> (i32, i32) {
    %c0_i32 = arith.constant 0 : i32
    %c0_i32_0 = arith.constant 0 : i32
    %c0_i32_1 = arith.constant 0 : i32
    return %c0_i32, %c0_i32_0 : i32, i32
  }
  func.func @transform_9(%arg0: i32) -> (i32, i32) {
    %c0_i32 = arith.constant 0 : i32
    %c0_i32_0 = arith.constant 0 : i32
    %c0_i32_1 = arith.constant 0 : i32
    return %c0_i32, %c0_i32_0 : i32, i32
  }
}

</mosaic_0001>

<llo_original>
// kernel: vit_forward.1
$region0: #{vit_forward.1}
  #allocation0 [shape = 'u32[]', space=smem, size = 0x4, offset = 0x4, fixed_abs, tag = 'smem constant byte address 0x4 - core index']
  #allocation1 [shape = 'u32[144,128]{1,0:T(1,128)}', space=vmem, size = 0x12000, scoped, tag = 'internal scratch']
  %s0 = inlined_call_operand.vmem [shape: f32[64,48], index: 0, kind: input, shape index: {}]
  %s1 = inlined_call_operand.vmem [shape: bf16[48,32], index: 1, kind: input, shape index: {}]
  %s2 = inlined_call_operand.vmem [shape: f32[64,32], index: 2, kind: input, shape index: {}]
  %s3 = inlined_call_operand.vmem [shape: bf16[2,160,128], index: 3, kind: input, shape index: {}]
  %s4 = inlined_call_operand.vmem [shape: f32[2,8,128], index: 4, kind: input, shape index: {}]
  %s5 = inlined_call_operand.vmem [shape: bf16[256,32], index: 5, kind: input, shape index: {}]
  %s6 = inlined_call_operand.vmem [shape: f32[64,256], index: 6, kind: input, shape index: {}]
  %s7 = inlined_call_operand.vmem [shape: bf16[32,128], index: 7, kind: input, shape index: {}]
  %s8 = inlined_call_operand.vmem [shape: f32[8,128], index: 8, kind: input, shape index: {}]
  %s9 = inlined_call_operand.hbm [shape: f32[2,128], index: 9, kind: output, shape index: {}]
  %s10 = sld [smem:[#allocation0]]
  $region46: #{vit_forward.1} parent=0
    _
  %s12 = ssub.s32 1, %s10
  %s13 = scalar_select 0, %s12, %s10
  $region1: #{vit_forward.1} parent=0
    #allocation2 [shape = 'u8[1024]{0}', space=vmem, size = 0x400, scoped, tag = 'output window, operand 0, single buffered']
    #allocation3 [shape = 's32[1]{0}', space=sflag, size = 0x4, scoped, tag = 'scoped memory for vit_forward.1']
    %14 = vsyncpa [#allocation3], 0
    // Predicated region
    $region2: #{vit_forward.1} parent=1 // pred_check
      _
    $region3: #{vit_forward.1} parent=1 // pred_check_branch
      %16 = sbr.rel (0) target = $region5
    $region4: #{vit_forward.1} parent=1 // pred_region
      _
    $region5: #{vit_forward.1} parent=1 // pred_fallthru
      _
    // Predicated region
    $region6: #{vit_forward.1} parent=1 // pred_check
      _
    $region7: #{vit_forward.1} parent=1 // pred_check_branch
      %18 = sbr.rel (0) target = $region9
    $region8: #{vit_forward.1} parent=1 // pred_region
      _
    $region9: #{vit_forward.1} parent=1 // pred_fallthru
      _
    // Predicated region
    $region10: #{vit_forward.1} parent=1 // pred_check
      _
    $region11: #{vit_forward.1} parent=1 // pred_check_branch
      %20 = sbr.rel (0) target = $region13
    $region12: #{vit_forward.1} parent=1 // pred_region
      _
    $region13: #{vit_forward.1} parent=1 // pred_fallthru
      _
    // Predicated region
    $region14: #{vit_forward.1} parent=1 // pred_check
      _
    $region15: #{vit_forward.1} parent=1 // pred_check_branch
      %22 = sbr.rel (0) target = $region17
    $region16: #{vit_forward.1} parent=1 // pred_region
      _
    $region17: #{vit_forward.1} parent=1 // pred_fallthru
      _
    // Predicated region
    $region18: #{vit_forward.1} parent=1 // pred_check
      _
    $region19: #{vit_forward.1} parent=1 // pred_check_branch
      %24 = sbr.rel (0) target = $region21
    $region20: #{vit_forward.1} parent=1 // pred_region
      _
    $region21: #{vit_forward.1} parent=1 // pred_fallthru
      _
    // Predicated region
    $region22: #{vit_forward.1} parent=1 // pred_check
      _
    $region23: #{vit_forward.1} parent=1 // pred_check_branch
      %26 = sbr.rel (0) target = $region25
    $region24: #{vit_forward.1} parent=1 // pred_region
      _
    $region25: #{vit_forward.1} parent=1 // pred_fallthru
      _
    // Predicated region
    $region26: #{vit_forward.1} parent=1 // pred_check
      _
    $region27: #{vit_forward.1} parent=1 // pred_check_branch
      %28 = sbr.rel (0) target = $region29
    $region28: #{vit_forward.1} parent=1 // pred_region
      _
    $region29: #{vit_forward.1} parent=1 // pred_fallthru
      _
    // Predicated region
    $region30: #{vit_forward.1} parent=1 // pred_check
      _
    $region31: #{vit_forward.1} parent=1 // pred_check_branch
      %30 = sbr.rel (0) target = $region33
    $region32: #{vit_forward.1} parent=1 // pred_region
      _
    $region33: #{vit_forward.1} parent=1 // pred_fallthru
      _
    // Predicated region
    $region34: #{vit_forward.1} parent=1 // pred_check
      _
    $region35: #{vit_forward.1} parent=1 // pred_check_branch
      %32 = sbr.rel (0) target = $region37
    $region36: #{vit_forward.1} parent=1 // pred_region
      _
    $region37: #{vit_forward.1} parent=1 // pred_fallthru
      _
    %v34 = vld [vmem:[%s0] sm:$0xff]
    %v35 = vld [vmem:[%s0 + $0x8] sm:$0xff]
    %v36 = vld [vmem:[%s0 + $0x10] sm:$0xff]
    %v37 = vld [vmem:[%s0 + $0x18] sm:$0xff]
    %v38 = vld [vmem:[%s0 + $0x20] sm:$0xff]
    %v39 = vld [vmem:[%s0 + $0x28] sm:$0xff]
    %v40 = vld [vmem:[%s0 + $0x30] sm:$0xff]
    %v41 = vld [vmem:[%s0 + $0x38] sm:$0xff]
    %v42 = vpack.c.bf16 %v35, %v34
    %v43 = vpack.c.bf16 %v37, %v36
    %v44 = vpack.c.bf16 %v39, %v38
    %v45 = vpack.c.bf16 %v41, %v40
    %v46 = vld [vmem:[%s1] sm:$0xf]
    %v47 = vld [vmem:[%s1 + $0x4] sm:$0xf]
    %v48 = vld [vmem:[%s1 + $0x8] sm:$0xf]
    %v49 = vld [vmem:[%s1 + $0xc] sm:$0xf]
    %v50 = vld [vmem:[%s1 + $0x10] sm:$0xf]
    %v51 = vld [vmem:[%s1 + $0x14] sm:$0xf]
    %v52 = vld [vmem:[%s2] sm:$0xff]
    %v53 = vld [vmem:[%s2 + $0x8] sm:$0xff]
    %v54 = vld [vmem:[%s2 + $0x10] sm:$0xff]
    %v55 = vld [vmem:[%s2 + $0x18] sm:$0xff]
    %v56 = vld [vmem:[%s2 + $0x20] sm:$0xff]
    %v57 = vld [vmem:[%s2 + $0x28] sm:$0xff]
    %v58 = vld [vmem:[%s2 + $0x30] sm:$0xff]
    %v59 = vld [vmem:[%s2 + $0x38] sm:$0xff]
    %v66 = vunpack.c.l.b16 %v46
    %v67 = vunpack.c.l.b16 %v47
    %v68 = vunpack.c.l.b16 %v48
    %v69 = vunpack.c.l.b16 %v49
    %v70 = vunpack.c.l.b16 %v50
    %v71 = vunpack.c.l.b16 %v51
    %v72 = vpack.c.b16 %v67, %v66
    %v73 = vpack.c.b16 %v69, %v68
    %v74 = vpack.c.b16 %v71, %v70
    %vm78 = vcmask 392192
    %v80 = vsel %vm78, %v42, 0
    %v83 = vsel %vm78, %v43, 0
    %v86 = vsel %vm78, %v44, 0
    %v89 = vsel %vm78, %v45, 0
    %91 = vmatprep.subr.bf16.mxu0 0
    %92 = vmatpush1.bf16.msra.mxu0 0
    %93 = vmatprep.subr.bf16.mxu0 0
    %94 = vmatpush1.bf16.msra.mxu0 0
    %95 = vmatprep.subr.bf16.mxu0 0
    %96 = vmatpush1.bf16.msra.mxu0 0
    %97 = vmatprep.subr.bf16.mxu0 0
    %98 = vmatpush1.bf16.msra.mxu0 0
    %99 = vmatprep.subr.bf16.mxu0 0
    %100 = vmatpush1.bf16.msra.mxu0 0
    %101 = vmatprep.subr.bf16.mxu0 0
    %102 = vmatpush1.bf16.msra.mxu0 %v74
    %103 = vmatprep.subr.bf16.mxu0 0
    %104 = vmatpush1.bf16.msra.mxu0 %v73
    %105 = vmatprep.subr.bf16.mxu0 0
    %106 = vmatpush1.bf16.msra.mxu0 %v72
    %107 = vmatprep.subr.bf16.mxu0 0
    %108 = vmatpush2.bf16.msra.mxu0 0
    %109 = vmatprep.subr.bf16.mxu0 0
    %110 = vmatpush2.bf16.msra.mxu0 0
    %111 = vmatprep.subr.bf16.mxu0 0
    %112 = vmatpush2.bf16.msra.mxu0 0
    %113 = vmatprep.subr.bf16.mxu0 0
    %114 = vmatpush2.bf16.msra.mxu0 0
    %115 = vmatprep.subr.bf16.mxu0 0
    %116 = vmatpush2.bf16.msra.mxu0 0
    %117 = vmatprep.subr.bf16.mxu0 0
    %118 = vmatpush2.bf16.msra.mxu0 0
    %119 = vmatprep.subr.bf16.mxu0 0
    %120 = vmatpush2.bf16.msra.mxu0 0
    %121 = vmatprep.subr.bf16.mxu0 0
    %122 = vmatpush2.bf16.msra.mxu0 0
    %123 = vmatprep.mubr.bf16.mxu0 0
    %124 = vmatmul.mubr.bf16.gmra.mxu0 %v80
    %v125 = vpop.f32.mrf.mxu0
    %v126 = vadd.f32 %v52, %v125
    %v127 = vpop.f32.mrf.mxu0
    %v128 = vpop.f32.mrf.mxu0
    %v129 = vadd.f32 %v53, %v128
    %v130 = vpop.f32.mrf.mxu0
    %131 = vmatprep.mubr.bf16.mxu0 0
    %132 = vmatmul.mubr.bf16.gmra.mxu0 %v83
    %v133 = vpop.f32.mrf.mxu0
    %v134 = vadd.f32 %v54, %v133
    %v135 = vpop.f32.mrf.mxu0
    %v136 = vpop.f32.mrf.mxu0
    %v137 = vadd.f32 %v55, %v136
    %v138 = vpop.f32.mrf.mxu0
    %139 = vmatprep.mubr.bf16.mxu0 0
    %140 = vmatmul.mubr.bf16.gmra.mxu0 %v86
    %v141 = vpop.f32.mrf.mxu0
    %v142 = vadd.f32 %v56, %v141
    %v143 = vpop.f32.mrf.mxu0
    %v144 = vpop.f32.mrf.mxu0
    %v145 = vadd.f32 %v57, %v144
    %v146 = vpop.f32.mrf.mxu0
    %147 = vmatprep.mubr.bf16.mxu0 0
    %148 = vmatmul.mubr.bf16.gmra.mxu0 %v89
    %v149 = vpop.f32.mrf.mxu0
    %v150 = vadd.f32 %v58, %v149
    %v151 = vpop.f32.mrf.mxu0
    %v152 = vpop.f32.mrf.mxu0
    %v153 = vadd.f32 %v59, %v152
    %v154 = vpop.f32.mrf.mxu0
    %155 = vdwg.mxu0
    %v156 = vld [vmem:[%s5] sm:$0xf]
    %v157 = vld [vmem:[%s5 + $0x4] sm:$0xf]
    %v158 = vld [vmem:[%s5 + $0x8] sm:$0xf]
    %v159 = vld [vmem:[%s5 + $0xc] sm:$0xf]
    %v160 = vld [vmem:[%s5 + $0x10] sm:$0xf]
    %v161 = vld [vmem:[%s5 + $0x14] sm:$0xf]
    %v162 = vld [vmem:[%s5 + $0x18] sm:$0xf]
    %v163 = vld [vmem:[%s5 + $0x1c] sm:$0xf]
    %v164 = vld [vmem:[%s5 + $0x20] sm:$0xf]
    %v165 = vld [vmem:[%s5 + $0x24] sm:$0xf]
    %v166 = vld [vmem:[%s5 + $0x28] sm:$0xf]
    %v167 = vld [vmem:[%s5 + $0x2c] sm:$0xf]
    %v168 = vld [vmem:[%s5 + $0x30] sm:$0xf]
    %v169 = vld [vmem:[%s5 + $0x34] sm:$0xf]
    %v170 = vld [vmem:[%s5 + $0x38] sm:$0xf]
    %v171 = vld [vmem:[%s5 + $0x3c] sm:$0xf]
    %v172 = vld [vmem:[%s5 + $0x40] sm:$0xf]
    %v173 = vld [vmem:[%s5 + $0x44] sm:$0xf]
    %v174 = vld [vmem:[%s5 + $0x48] sm:$0xf]
    %v175 = vld [vmem:[%s5 + $0x4c] sm:$0xf]
    %v176 = vld [vmem:[%s5 + $0x50] sm:$0xf]
    %v177 = vld [vmem:[%s5 + $0x54] sm:$0xf]
    %v178 = vld [vmem:[%s5 + $0x58] sm:$0xf]
    %v179 = vld [vmem:[%s5 + $0x5c] sm:$0xf]
    %v180 = vld [vmem:[%s5 + $0x60] sm:$0xf]
    %v181 = vld [vmem:[%s5 + $0x64] sm:$0xf]
    %v182 = vld [vmem:[%s5 + $0x68] sm:$0xf]
    %v183 = vld [vmem:[%s5 + $0x6c] sm:$0xf]
    %v184 = vld [vmem:[%s5 + $0x70] sm:$0xf]
    %v185 = vld [vmem:[%s5 + $0x74] sm:$0xf]
    %v186 = vld [vmem:[%s5 + $0x78] sm:$0xf]
    %v187 = vld [vmem:[%s5 + $0x7c] sm:$0xf]
    %v188 = vld [vmem:[%s6] sm:$0xff]
    %v189 = vld [vmem:[%s6 + $0x8] sm:$0xff]
    %v190 = vld [vmem:[%s6 + $0x10] sm:$0xff]
    %v191 = vld [vmem:[%s6 + $0x18] sm:$0xff]
    %v192 = vld [vmem:[%s6 + $0x20] sm:$0xff]
    %v193 = vld [vmem:[%s6 + $0x28] sm:$0xff]
    %v194 = vld [vmem:[%s6 + $0x30] sm:$0xff]
    %v195 = vld [vmem:[%s6 + $0x38] sm:$0xff]
    %v196 = vld [vmem:[%s6 + $0x40] sm:$0xff]
    %v197 = vld [vmem:[%s6 + $0x48] sm:$0xff]
    %v198 = vld [vmem:[%s6 + $0x50] sm:$0xff]
    %v199 = vld [vmem:[%s6 + $0x58] sm:$0xff]
    %v200 = vld [vmem:[%s6 + $0x60] sm:$0xff]
    %v201 = vld [vmem:[%s6 + $0x68] sm:$0xff]
    %v202 = vld [vmem:[%s6 + $0x70] sm:$0xff]
    %v203 = vld [vmem:[%s6 + $0x78] sm:$0xff]
    %v204 = vld [vmem:[%s3] sm:$0xf]
    %v205 = vld [vmem:[%s3 + $0x4] sm:$0xf]
    %v206 = vld [vmem:[%s3 + $0x8] sm:$0xf]
    %v207 = vld [vmem:[%s3 + $0xc] sm:$0xf]
    %v208 = vld [vmem:[%s3 + $0x10] sm:$0xf]
    %v209 = vld [vmem:[%s3 + $0x14] sm:$0xf]
    %v210 = vld [vmem:[%s3 + $0x18] sm:$0xf]
    %v211 = vld [vmem:[%s3 + $0x1c] sm:$0xf]
    %v212 = vld [vmem:[%s3 + $0x20] sm:$0xf]
    %v213 = vld [vmem:[%s3 + $0x24] sm:$0xf]
    %v214 = vld [vmem:[%s3 + $0x28] sm:$0xf]
    %v215 = vld [vmem:[%s3 + $0x2c] sm:$0xf]
    %v216 = vld [vmem:[%s3 + $0x30] sm:$0xf]
    %v217 = vld [vmem:[%s3 + $0x34] sm:$0xf]
    %v218 = vld [vmem:[%s3 + $0x38] sm:$0xf]
    %v219 = vld [vmem:[%s3 + $0x3c] sm:$0xf]
    %v220 = vld [vmem:[%s3 + $0x40] sm:$0xf]
    %v221 = vld [vmem:[%s3 + $0x44] sm:$0xf]
    %v222 = vld [vmem:[%s3 + $0x48] sm:$0xf]
    %v223 = vld [vmem:[%s3 + $0x4c] sm:$0xf]
    %v224 = vld [vmem:[%s4] sm:$0xff]
    %vm225 = vcmask 261120
    %v226 = vsel %vm225, %v126, 0.0
    %227 = vadd.xlane.f32.xlu0 %v226
    %v228 = vpop.xlane.xlu0 %227
    %v229 = vsel %vm225, %v129, 0.0
    %230 = vadd.xlane.f32.xlu0 %v229
    %v231 = vpop.xlane.xlu0 %230
    %v232 = vsel %vm225, %v134, 0.0
    %233 = vadd.xlane.f32.xlu0 %v232
    %v234 = vpop.xlane.xlu0 %233
    %v235 = vsel %vm225, %v137, 0.0
    %236 = vadd.xlane.f32.xlu0 %v235
    %v237 = vpop.xlane.xlu0 %236
    %v238 = vsel %vm225, %v142, 0.0
    %239 = vadd.xlane.f32.xlu0 %v238
    %v240 = vpop.xlane.xlu0 %239
    %v241 = vsel %vm225, %v145, 0.0
    %242 = vadd.xlane.f32.xlu0 %v241
    %v243 = vpop.xlane.xlu0 %242
    %v244 = vsel %vm225, %v150, 0.0
    %245 = vadd.xlane.f32.xlu0 %v244
    %v246 = vpop.xlane.xlu0 %245
    %v247 = vsel %vm225, %v153, 0.0
    %248 = vadd.xlane.f32.xlu0 %v247
    %v249 = vpop.xlane.xlu0 %248
    %v250 = vrcp.pop 32.0
    %v251 = vmul.f32 %v228, %v250
    %v252 = vmul.f32 %v231, %v250
    %v253 = vmul.f32 %v234, %v250
    %v254 = vmul.f32 %v237, %v250
    %v255 = vmul.f32 %v240, %v250
    %v256 = vmul.f32 %v243, %v250
    %v257 = vmul.f32 %v246, %v250
    %v258 = vmul.f32 %v249, %v250
    %v259 = vsub.f32 %v126, %v251
    %v260 = vsub.f32 %v129, %v252
    %v261 = vsub.f32 %v134, %v253
    %v262 = vsub.f32 %v137, %v254
    %v263 = vsub.f32 %v142, %v255
    %v264 = vsub.f32 %v145, %v256
    %v265 = vsub.f32 %v150, %v257
    %v266 = vsub.f32 %v153, %v258
    %v267 = vmul.f32 %v259, %v259
    %v268 = vmul.f32 %v260, %v260
    %v269 = vmul.f32 %v261, %v261
    %v270 = vmul.f32 %v262, %v262
    %v271 = vmul.f32 %v263, %v263
    %v272 = vmul.f32 %v264, %v264
    %v273 = vmul.f32 %v265, %v265
    %v274 = vmul.f32 %v266, %v266
    %v275 = vsel %vm225, %v267, 0.0
    %276 = vadd.xlane.f32.xlu0 %v275
    %v277 = vpop.xlane.xlu0 %276
    %v278 = vsel %vm225, %v268, 0.0
    %279 = vadd.xlane.f32.xlu0 %v278
    %v280 = vpop.xlane.xlu0 %279
    %v281 = vsel %vm225, %v269, 0.0
    %282 = vadd.xlane.f32.xlu0 %v281
    %v283 = vpop.xlane.xlu0 %282
    %v284 = vsel %vm225, %v270, 0.0
    %285 = vadd.xlane.f32.xlu0 %v284
    %v286 = vpop.xlane.xlu0 %285
    %v287 = vsel %vm225, %v271, 0.0
    %288 = vadd.xlane.f32.xlu0 %v287
    %v289 = vpop.xlane.xlu0 %288
    %v290 = vsel %vm225, %v272, 0.0
    %291 = vadd.xlane.f32.xlu0 %v290
    %v292 = vpop.xlane.xlu0 %291
    %v293 = vsel %vm225, %v273, 0.0
    %294 = vadd.xlane.f32.xlu0 %v293
    %v295 = vpop.xlane.xlu0 %294
    %v296 = vsel %vm225, %v274, 0.0
    %297 = vadd.xlane.f32.xlu0 %v296
    %v298 = vpop.xlane.xlu0 %297
    %v299 = vmul.f32 %v277, %v250
    %v300 = vmul.f32 %v280, %v250
    %v301 = vmul.f32 %v283, %v250
    %v302 = vmul.f32 %v286, %v250
    %v303 = vmul.f32 %v289, %v250
    %v304 = vmul.f32 %v292, %v250
    %v305 = vmul.f32 %v295, %v250
    %v306 = vmul.f32 %v298, %v250
    %v307 = vadd.f32 %v299, 1e-12
    %v308 = vadd.f32 %v300, 1e-12
    %v309 = vadd.f32 %v301, 1e-12
    %v310 = vadd.f32 %v302, 1e-12
    %v311 = vadd.f32 %v303, 1e-12
    %v312 = vadd.f32 %v304, 1e-12
    %v313 = vadd.f32 %v305, 1e-12
    %v314 = vadd.f32 %v306, 1e-12
    %v315 = vrsqrt.pop %v307
    %v316 = vrsqrt.pop %v308
    %v317 = vrsqrt.pop %v309
    %v318 = vrsqrt.pop %v310
    %v319 = vrsqrt.pop %v311
    %v320 = vrsqrt.pop %v312
    %v321 = vrsqrt.pop %v313
    %v322 = vrsqrt.pop %v314
    %v323 = vmul.f32 %v259, %v315
    %v324 = vmul.f32 %v260, %v316
    %v325 = vmul.f32 %v261, %v317
    %v326 = vmul.f32 %v262, %v318
    %v327 = vmul.f32 %v263, %v319
    %v328 = vmul.f32 %v264, %v320
    %v329 = vmul.f32 %v265, %v321
    %v330 = vmul.f32 %v266, %v322
    %v331 = vlaneseq
    %v332 = vshrl.u32 %v331, 7
    %v333 = vsub.s32 0, %v332
    %v334 = vrot.slane %v224, %v333
    %v335 = vmul.f32 %v323, %v334
    %v336 = vmul.f32 %v324, %v334
    %v337 = vmul.f32 %v325, %v334
    %v338 = vmul.f32 %v326, %v334
    %v339 = vmul.f32 %v327, %v334
    %v340 = vmul.f32 %v328, %v334
    %v341 = vmul.f32 %v329, %v334
    %v342 = vmul.f32 %v330, %v334
    %v343 = vlaneseq
    %v344 = vshrl.u32 %v343, 7
    %v345 = vsub.s32 1, %v344
    %v346 = vrot.slane %v224, %v345
    %v347 = vadd.f32 %v335, %v346
    %v348 = vadd.f32 %v336, %v346
    %v349 = vadd.f32 %v337, %v346
    %v350 = vadd.f32 %v338, %v346
    %v351 = vadd.f32 %v339, %v346
    %v352 = vadd.f32 %v340, %v346
    %v353 = vadd.f32 %v341, %v346
    %v354 = vadd.f32 %v342, %v346
    %v355 = vpack.c.bf16 %v348, %v347
    %v356 = vpack.c.bf16 %v350, %v349
    %v357 = vpack.c.bf16 %v352, %v351
    %v358 = vpack.c.bf16 %v354, %v353
    %v359 = vlaneseq
    %v360 = vshrl.u32 %v359, 7
    %v361 = vsub.s32 2, %v360
    %v362 = vrot.slane %v224, %v361
    %v367 = vunpack.c.l.b16 %v204
    %v368 = vunpack.c.l.b16 %v205
    %v369 = vunpack.c.l.b16 %v206
    %v370 = vunpack.c.l.b16 %v207
    %v371 = vpack.c.b16 %v368, %v367
    %v372 = vpack.c.b16 %v370, %v369
    %v376 = vsel %vm225, %v355, 0
    %v379 = vsel %vm225, %v356, 0
    %v382 = vsel %vm225, %v357, 0
    %v385 = vsel %vm225, %v358, 0
    %387 = vmatprep.subr.bf16.mxu0 0
    %388 = vmatpush1.bf16.msra.mxu0 0
    %389 = vmatprep.subr.bf16.mxu0 0
    %390 = vmatpush1.bf16.msra.mxu0 0
    %391 = vmatprep.subr.bf16.mxu0 0
    %392 = vmatpush1.bf16.msra.mxu0 0
    %393 = vmatprep.subr.bf16.mxu0 0
    %394 = vmatpush1.bf16.msra.mxu0 0
    %395 = vmatprep.subr.bf16.mxu0 0
    %396 = vmatpush1.bf16.msra.mxu0 0
    %397 = vmatprep.subr.bf16.mxu0 0
    %398 = vmatpush1.bf16.msra.mxu0 0
    %399 = vmatprep.subr.bf16.mxu0 0
    %400 = vmatpush1.bf16.msra.mxu0 %v372
    %401 = vmatprep.subr.bf16.mxu0 0
    %402 = vmatpush1.bf16.msra.mxu0 %v371
    %403 = vmatprep.subr.bf16.mxu0 0
    %404 = vmatpush2.bf16.msra.mxu0 0
    %405 = vmatprep.subr.bf16.mxu0 0
    %406 = vmatpush2.bf16.msra.mxu0 0
    %407 = vmatprep.subr.bf16.mxu0 0
    %408 = vmatpush2.bf16.msra.mxu0 0
    %409 = vmatprep.subr.bf16.mxu0 0
    %410 = vmatpush2.bf16.msra.mxu0 0
    %411 = vmatprep.subr.bf16.mxu0 0
    %412 = vmatpush2.bf16.msra.mxu0 0
    %413 = vmatprep.subr.bf16.mxu0 0
    %414 = vmatpush2.bf16.msra.mxu0 0
    %415 = vmatprep.subr.bf16.mxu0 0
    %416 = vmatpush2.bf16.msra.mxu0 0
    %417 = vmatprep.subr.bf16.mxu0 0
    %418 = vmatpush2.bf16.msra.mxu0 0
    %419 = vmatprep.mubr.bf16.mxu0 0
    %420 = vmatmul.mubr.bf16.gmra.mxu0 %v376
    %v421 = vpop.f32.mrf.mxu0
    %v422 = vadd.f32 %v362, %v421
    %v423 = vpop.f32.mrf.mxu0
    %v424 = vpop.f32.mrf.mxu0
    %v425 = vadd.f32 %v362, %v424
    %v426 = vpop.f32.mrf.mxu0
    %427 = vmatprep.mubr.bf16.mxu0 0
    %428 = vmatmul.mubr.bf16.gmra.mxu0 %v379
    %v429 = vpop.f32.mrf.mxu0
    %v430 = vadd.f32 %v362, %v429
    %v431 = vpop.f32.mrf.mxu0
    %v432 = vpop.f32.mrf.mxu0
    %v433 = vadd.f32 %v362, %v432
    %v434 = vpop.f32.mrf.mxu0
    %435 = vmatprep.mubr.bf16.mxu0 0
    %436 = vmatmul.mubr.bf16.gmra.mxu0 %v382
    %v437 = vpop.f32.mrf.mxu0
    %v438 = vadd.f32 %v362, %v437
    %v439 = vpop.f32.mrf.mxu0
    %v440 = vpop.f32.mrf.mxu0
    %v441 = vadd.f32 %v362, %v440
    %v442 = vpop.f32.mrf.mxu0
    %443 = vmatprep.mubr.bf16.mxu0 0
    %444 = vmatmul.mubr.bf16.gmra.mxu0 %v385
    %v445 = vpop.f32.mrf.mxu0
    %v446 = vadd.f32 %v362, %v445
    %v447 = vpop.f32.mrf.mxu0
    %v448 = vpop.f32.mrf.mxu0
    %v449 = vadd.f32 %v362, %v448
    %v450 = vpop.f32.mrf.mxu0
    %451 = vdwg.mxu0
    %v452 = vpack.c.bf16 %v425, %v422
    %v453 = vpack.c.bf16 %v433, %v430
    %v454 = vpack.c.bf16 %v441, %v438
    %v455 = vpack.c.bf16 %v449, %v446
    %v488 = vunpack.c.l.b16 %v156
    %v489 = vunpack.c.l.b16 %v157
    %v490 = vunpack.c.l.b16 %v158
    %v491 = vunpack.c.l.b16 %v159
    %v492 = vunpack.c.l.b16 %v160
    %v493 = vunpack.c.l.b16 %v161
    %v494 = vunpack.c.l.b16 %v162
    %v495 = vunpack.c.l.b16 %v163
    %v496 = vunpack.c.l.b16 %v164
    %v497 = vunpack.c.l.b16 %v165
    %v498 = vunpack.c.l.b16 %v166
    %v499 = vunpack.c.l.b16 %v167
    %v500 = vunpack.c.l.b16 %v168
    %v501 = vunpack.c.l.b16 %v169
    %v502 = vunpack.c.l.b16 %v170
    %v503 = vunpack.c.l.b16 %v171
    %v504 = vunpack.c.l.b16 %v172
    %v505 = vunpack.c.l.b16 %v173
    %v506 = vunpack.c.l.b16 %v174
    %v507 = vunpack.c.l.b16 %v175
    %v508 = vunpack.c.l.b16 %v176
    %v509 = vunpack.c.l.b16 %v177
    %v510 = vunpack.c.l.b16 %v178
    %v511 = vunpack.c.l.b16 %v179
    %v512 = vunpack.c.l.b16 %v180
    %v513 = vunpack.c.l.b16 %v181
    %v514 = vunpack.c.l.b16 %v182
    %v515 = vunpack.c.l.b16 %v183
    %v516 = vunpack.c.l.b16 %v184
    %v517 = vunpack.c.l.b16 %v185
    %v518 = vunpack.c.l.b16 %v186
    %v519 = vunpack.c.l.b16 %v187
    %v520 = vpack.c.b16 %v489, %v488
    %v521 = vpack.c.b16 %v491, %v490
    %v522 = vpack.c.b16 %v493, %v492
    %v523 = vpack.c.b16 %v495, %v494
    %v524 = vpack.c.b16 %v497, %v496
    %v525 = vpack.c.b16 %v499, %v498
    %v526 = vpack.c.b16 %v501, %v500
    %v527 = vpack.c.b16 %v503, %v502
    %v528 = vpack.c.b16 %v505, %v504
    %v529 = vpack.c.b16 %v507, %v506
    %v530 = vpack.c.b16 %v509, %v508
    %v531 = vpack.c.b16 %v511, %v510
    %v532 = vpack.c.b16 %v513, %v512
    %v533 = vpack.c.b16 %v515, %v514
    %v534 = vpack.c.b16 %v517, %v516
    %v535 = vpack.c.b16 %v519, %v518
    %536 = vrot.lane.b32.xlu0 %v520, 32
    %v537 = vpop.permute.xlu0 %536
    %538 = vrot.lane.b32.xlu0 %v521, 32
    %v539 = vpop.permute.xlu0 %538
    %540 = vrot.lane.b32.xlu0 %v522, 32
    %v541 = vpop.permute.xlu0 %540
    %542 = vrot.lane.b32.xlu0 %v523, 32
    %v543 = vpop.permute.xlu0 %542
    %544 = vrot.lane.b32.xlu0 %v524, 32
    %v545 = vpop.permute.xlu0 %544
    %546 = vrot.lane.b32.xlu0 %v525, 32
    %v547 = vpop.permute.xlu0 %546
    %548 = vrot.lane.b32.xlu0 %v526, 32
    %v549 = vpop.permute.xlu0 %548
    %550 = vrot.lane.b32.xlu0 %v527, 32
    %v551 = vpop.permute.xlu0 %550
    %552 = vrot.lane.b32.xlu0 %v528, 32
    %v553 = vpop.permute.xlu0 %552
    %554 = vrot.lane.b32.xlu0 %v529, 32
    %v555 = vpop.permute.xlu0 %554
    %556 = vrot.lane.b32.xlu0 %v530, 32
    %v557 = vpop.permute.xlu0 %556
    %558 = vrot.lane.b32.xlu0 %v531, 32
    %v559 = vpop.permute.xlu0 %558
    %560 = vrot.lane.b32.xlu0 %v532, 32
    %v561 = vpop.permute.xlu0 %560
    %562 = vrot.lane.b32.xlu0 %v533, 32
    %v563 = vpop.permute.xlu0 %562
    %564 = vrot.lane.b32.xlu0 %v534, 32
    %v565 = vpop.permute.xlu0 %564
    %566 = vrot.lane.b32.xlu0 %v535, 32
    %v567 = vpop.permute.xlu0 %566
    %v584 = vmul.bf16 %v452, %v537
    %v585 = vmul.bf16 %v453, %v539
    %v586 = vmul.bf16 %v454, %v541
    %v587 = vmul.bf16 %v455, %v543
    %v588 = vmul.bf16 %v452, %v545
    %v589 = vmul.bf16 %v453, %v547
    %v590 = vmul.bf16 %v454, %v549
    %v591 = vmul.bf16 %v455, %v551
    %v592 = vmul.bf16 %v452, %v553
    %v593 = vmul.bf16 %v453, %v555
    %v594 = vmul.bf16 %v454, %v557
    %v595 = vmul.bf16 %v455, %v559
    %v596 = vmul.bf16 %v452, %v561
    %v597 = vmul.bf16 %v453, %v563
    %v598 = vmul.bf16 %v454, %v565
    %v599 = vmul.bf16 %v455, %v567
    %600 = vrot.lane.b32.xlu0 %v520, 64
    %v601 = vpop.permute.xlu0 %600
    %602 = vrot.lane.b32.xlu0 %v521, 64
    %v603 = vpop.permute.xlu0 %602
    %604 = vrot.lane.b32.xlu0 %v522, 64
    %v605 = vpop.permute.xlu0 %604
    %606 = vrot.lane.b32.xlu0 %v523, 64
    %v607 = vpop.permute.xlu0 %606
    %608 = vrot.lane.b32.xlu0 %v524, 64
    %v609 = vpop.permute.xlu0 %608
    %610 = vrot.lane.b32.xlu0 %v525, 64
    %v611 = vpop.permute.xlu0 %610
    %612 = vrot.lane.b32.xlu0 %v526, 64
    %v613 = vpop.permute.xlu0 %612
    %614 = vrot.lane.b32.xlu0 %v527, 64
    %v615 = vpop.permute.xlu0 %614
    %616 = vrot.lane.b32.xlu0 %v528, 64
    %v617 = vpop.permute.xlu0 %616
    %618 = vrot.lane.b32.xlu0 %v529, 64
    %v619 = vpop.permute.xlu0 %618
    %620 = vrot.lane.b32.xlu0 %v530, 64
    %v621 = vpop.permute.xlu0 %620
    %622 = vrot.lane.b32.xlu0 %v531, 64
    %v623 = vpop.permute.xlu0 %622
    %624 = vrot.lane.b32.xlu0 %v532, 64
    %v625 = vpop.permute.xlu0 %624
    %626 = vrot.lane.b32.xlu0 %v533, 64
    %v627 = vpop.permute.xlu0 %626
    %628 = vrot.lane.b32.xlu0 %v534, 64
    %v629 = vpop.permute.xlu0 %628
    %630 = vrot.lane.b32.xlu0 %v535, 64
    %v631 = vpop.permute.xlu0 %630
    %v648 = vmul.bf16 %v452, %v601
    %v649 = vmul.bf16 %v453, %v603
    %v650 = vmul.bf16 %v454, %v605
    %v651 = vmul.bf16 %v455, %v607
    %v652 = vmul.bf16 %v452, %v609
    %v653 = vmul.bf16 %v453, %v611
    %v654 = vmul.bf16 %v454, %v613
    %v655 = vmul.bf16 %v455, %v615
    %v656 = vmul.bf16 %v452, %v617
    %v657 = vmul.bf16 %v453, %v619
    %v658 = vmul.bf16 %v454, %v621
    %v659 = vmul.bf16 %v455, %v623
    %v660 = vmul.bf16 %v452, %v625
    %v661 = vmul.bf16 %v453, %v627
    %v662 = vmul.bf16 %v454, %v629
    %v663 = vmul.bf16 %v455, %v631
    %680 = vrot.lane.b32.xlu0 %v584, 96
    %v681 = vpop.permute.xlu0 %680
    %682 = vrot.lane.b32.xlu0 %v585, 96
    %v683 = vpop.permute.xlu0 %682
    %684 = vrot.lane.b32.xlu0 %v586, 96
    %v685 = vpop.permute.xlu0 %684
    %686 = vrot.lane.b32.xlu0 %v587, 96
    %v687 = vpop.permute.xlu0 %686
    %688 = vrot.lane.b32.xlu0 %v588, 96
    %v689 = vpop.permute.xlu0 %688
    %690 = vrot.lane.b32.xlu0 %v589, 96
    %v691 = vpop.permute.xlu0 %690
    %692 = vrot.lane.b32.xlu0 %v590, 96
    %v693 = vpop.permute.xlu0 %692
    %694 = vrot.lane.b32.xlu0 %v591, 96
    %v695 = vpop.permute.xlu0 %694
    %696 = vrot.lane.b32.xlu0 %v592, 96
    %v697 = vpop.permute.xlu0 %696
    %698 = vrot.lane.b32.xlu0 %v593, 96
    %v699 = vpop.permute.xlu0 %698
    %700 = vrot.lane.b32.xlu0 %v594, 96
    %v701 = vpop.permute.xlu0 %700
    %702 = vrot.lane.b32.xlu0 %v595, 96
    %v703 = vpop.permute.xlu0 %702
    %704 = vrot.lane.b32.xlu0 %v596, 96
    %v705 = vpop.permute.xlu0 %704
    %706 = vrot.lane.b32.xlu0 %v597, 96
    %v707 = vpop.permute.xlu0 %706
    %708 = vrot.lane.b32.xlu0 %v598, 96
    %v709 = vpop.permute.xlu0 %708
    %710 = vrot.lane.b32.xlu0 %v599, 96
    %v711 = vpop.permute.xlu0 %710
    %v713 = vsel %vm225, %v452, 0
    %v716 = vsel %vm225, %v453, 0
    %v719 = vsel %vm225, %v454, 0
    %v722 = vsel %vm225, %v455, 0
    %v725 = vsel %vm225, %v681, 0
    %v728 = vsel %vm225, %v683, 0
    %v731 = vsel %vm225, %v685, 0
    %v734 = vsel %vm225, %v687, 0
    %v737 = vsel %vm225, %v689, 0
    %v740 = vsel %vm225, %v691, 0
    %v743 = vsel %vm225, %v693, 0
    %v746 = vsel %vm225, %v695, 0
    %v749 = vsel %vm225, %v697, 0
    %v752 = vsel %vm225, %v699, 0
    %v755 = vsel %vm225, %v701, 0
    %v758 = vsel %vm225, %v703, 0
    %v761 = vsel %vm225, %v705, 0
    %v764 = vsel %vm225, %v707, 0
    %v767 = vsel %vm225, %v709, 0
    %v770 = vsel %vm225, %v711, 0
    %772 = vmatprep.subr.bf16.mxu0 0
    %773 = vmatpush1.bf16.xpose.msra.mxu0 %v746
    %774 = vmatprep.subr.bf16.mxu0 0
    %775 = vmatpush1.bf16.xpose.msra.mxu0 %v743
    %776 = vmatprep.subr.bf16.mxu0 0
    %777 = vmatpush1.bf16.xpose.msra.mxu0 %v740
    %778 = vmatprep.subr.bf16.mxu0 0
    %779 = vmatpush1.bf16.xpose.msra.mxu0 %v737
    %780 = vmatprep.subr.bf16.mxu0 0
    %781 = vmatpush1.bf16.xpose.msra.mxu0 %v734
    %782 = vmatprep.subr.bf16.mxu0 0
    %783 = vmatpush1.bf16.xpose.msra.mxu0 %v731
    %784 = vmatprep.subr.bf16.mxu0 0
    %785 = vmatpush1.bf16.xpose.msra.mxu0 %v728
    %786 = vmatprep.subr.bf16.mxu0 0
    %787 = vmatpush1.bf16.xpose.msra.mxu0 %v725
    %788 = vmatprep.subr.bf16.mxu0 0
    %789 = vmatpush2.bf16.xpose.msra.mxu0 %v770
    %790 = vmatprep.subr.bf16.mxu0 0
    %791 = vmatpush2.bf16.xpose.msra.mxu0 %v767
    %792 = vmatprep.subr.bf16.mxu0 0
    %793 = vmatpush2.bf16.xpose.msra.mxu0 %v764
    %794 = vmatprep.subr.bf16.mxu0 0
    %795 = vmatpush2.bf16.xpose.msra.mxu0 %v761
    %796 = vmatprep.subr.bf16.mxu0 0
    %797 = vmatpush2.bf16.xpose.msra.mxu0 %v758
    %798 = vmatprep.subr.bf16.mxu0 0
    %799 = vmatpush2.bf16.xpose.msra.mxu0 %v755
    %800 = vmatprep.subr.bf16.mxu0 0
    %801 = vmatpush2.bf16.xpose.msra.mxu0 %v752
    %802 = vmatprep.subr.bf16.mxu0 0
    %803 = vmatpush2.bf16.xpose.msra.mxu0 %v749
    %804 = vmatprep.mubr.bf16.mxu0 0
    %805 = vmatmul.mubr.bf16.gmra.mxu0 %v713
    %v806 = vpop.f32.mrf.mxu0
    %v807 = vadd.f32 %v188, %v806
    %v808 = vpop.f32.mrf.mxu0
    %v809 = vadd.f32 %v189, %v808
    %v810 = vpop.f32.mrf.mxu0
    %v811 = vadd.f32 %v190, %v810
    %v812 = vpop.f32.mrf.mxu0
    %v813 = vadd.f32 %v191, %v812
    %814 = vmatprep.mubr.bf16.mxu0 0
    %815 = vmatmul.mubr.bf16.gmra.mxu0 %v716
    %v816 = vpop.f32.mrf.mxu0
    %v817 = vadd.f32 %v192, %v816
    %v818 = vpop.f32.mrf.mxu0
    %v819 = vadd.f32 %v193, %v818
    %v820 = vpop.f32.mrf.mxu0
    %v821 = vadd.f32 %v194, %v820
    %v822 = vpop.f32.mrf.mxu0
    %v823 = vadd.f32 %v195, %v822
    %824 = vmatprep.mubr.bf16.mxu0 0
    %825 = vmatmul.mubr.bf16.gmra.mxu0 %v719
    %v826 = vpop.f32.mrf.mxu0
    %v827 = vadd.f32 %v196, %v826
    %v828 = vpop.f32.mrf.mxu0
    %v829 = vadd.f32 %v197, %v828
    %v830 = vpop.f32.mrf.mxu0
    %v831 = vadd.f32 %v198, %v830
    %v832 = vpop.f32.mrf.mxu0
    %v833 = vadd.f32 %v199, %v832
    %834 = vmatprep.mubr.bf16.mxu0 0
    %835 = vmatmul.mubr.bf16.gmra.mxu0 %v722
    %v836 = vpop.f32.mrf.mxu0
    %v837 = vadd.f32 %v200, %v836
    %v838 = vpop.f32.mrf.mxu0
    %v839 = vadd.f32 %v201, %v838
    %v840 = vpop.f32.mrf.mxu0
    %v841 = vadd.f32 %v202, %v840
    %v842 = vpop.f32.mrf.mxu0
    %v843 = vadd.f32 %v203, %v842
    %844 = vdwg.mxu0
    %v845 = vmax.f32 %v807, %v809
    %846 = vmax.xlane.f32.xlu0 %v845
    %v847 = vpop.xlane.xlu0 %846
    %v848 = vmax.f32 %v811, %v813
    %849 = vmax.xlane.f32.xlu0 %v848
    %v850 = vpop.xlane.xlu0 %849
    %v851 = vmax.f32 %v817, %v819
    %852 = vmax.xlane.f32.xlu0 %v851
    %v853 = vpop.xlane.xlu0 %852
    %v854 = vmax.f32 %v821, %v823
    %855 = vmax.xlane.f32.xlu0 %v854
    %v856 = vpop.xlane.xlu0 %855
    %v857 = vmax.f32 %v827, %v829
    %858 = vmax.xlane.f32.xlu0 %v857
    %v859 = vpop.xlane.xlu0 %858
    %v860 = vmax.f32 %v831, %v833
    %861 = vmax.xlane.f32.xlu0 %v860
    %v862 = vpop.xlane.xlu0 %861
    %v863 = vmax.f32 %v837, %v839
    %864 = vmax.xlane.f32.xlu0 %v863
    %v865 = vpop.xlane.xlu0 %864
    %v866 = vmax.f32 %v841, %v843
    %867 = vmax.xlane.f32.xlu0 %v866
    %v868 = vpop.xlane.xlu0 %867
    %v869 = vsub.f32 %v807, %v847
    %v870 = vsub.f32 %v809, %v847
    %v871 = vsub.f32 %v811, %v850
    %v872 = vsub.f32 %v813, %v850
    %v873 = vsub.f32 %v817, %v853
    %v874 = vsub.f32 %v819, %v853
    %v875 = vsub.f32 %v821, %v856
    %v876 = vsub.f32 %v823, %v856
    %v877 = vsub.f32 %v827, %v859
    %v878 = vsub.f32 %v829, %v859
    %v879 = vsub.f32 %v831, %v862
    %v880 = vsub.f32 %v833, %v862
    %v881 = vsub.f32 %v837, %v865
    %v882 = vsub.f32 %v839, %v865
    %v883 = vsub.f32 %v841, %v868
    %v884 = vsub.f32 %v843, %v868
    %v885 = vmul.f32 %v869, 1.442695
    %v886 = vpow.pop %v885
    %v887 = vmul.f32 %v870, 1.442695
    %v888 = vpow.pop %v887
    %v889 = vmul.f32 %v871, 1.442695
    %v890 = vpow.pop %v889
    %v891 = vmul.f32 %v872, 1.442695
    %v892 = vpow.pop %v891
    %v893 = vmul.f32 %v873, 1.442695
    %v894 = vpow.pop %v893
    %v895 = vmul.f32 %v874, 1.442695
    %v896 = vpow.pop %v895
    %v897 = vmul.f32 %v875, 1.442695
    %v898 = vpow.pop %v897
    %v899 = vmul.f32 %v876, 1.442695
    %v900 = vpow.pop %v899
    %v901 = vmul.f32 %v877, 1.442695
    %v902 = vpow.pop %v901
    %v903 = vmul.f32 %v878, 1.442695
    %v904 = vpow.pop %v903
    %v905 = vmul.f32 %v879, 1.442695
    %v906 = vpow.pop %v905
    %v907 = vmul.f32 %v880, 1.442695
    %v908 = vpow.pop %v907
    %v909 = vmul.f32 %v881, 1.442695
    %v910 = vpow.pop %v909
    %v911 = vmul.f32 %v882, 1.442695
    %v912 = vpow.pop %v911
    %v913 = vmul.f32 %v883, 1.442695
    %v914 = vpow.pop %v913
    %v915 = vmul.f32 %v884, 1.442695
    %v916 = vpow.pop %v915
    %v917 = vpack.c.bf16 %v890, %v886
    %v918 = vpack.c.bf16 %v892, %v888
    %v919 = vpack.c.bf16 %v898, %v894
    %v920 = vpack.c.bf16 %v900, %v896
    %v921 = vpack.c.bf16 %v906, %v902
    %v922 = vpack.c.bf16 %v908, %v904
    %v923 = vpack.c.bf16 %v914, %v910
    %v924 = vpack.c.bf16 %v916, %v912
    %941 = vrot.lane.b32.xlu0 %v648, 64
    %v942 = vpop.permute.xlu0 %941
    %943 = vrot.lane.b32.xlu0 %v649, 64
    %v944 = vpop.permute.xlu0 %943
    %945 = vrot.lane.b32.xlu0 %v650, 64
    %v946 = vpop.permute.xlu0 %945
    %947 = vrot.lane.b32.xlu0 %v651, 64
    %v948 = vpop.permute.xlu0 %947
    %949 = vrot.lane.b32.xlu0 %v652, 64
    %v950 = vpop.permute.xlu0 %949
    %951 = vrot.lane.b32.xlu0 %v653, 64
    %v952 = vpop.permute.xlu0 %951
    %953 = vrot.lane.b32.xlu0 %v654, 64
    %v954 = vpop.permute.xlu0 %953
    %955 = vrot.lane.b32.xlu0 %v655, 64
    %v956 = vpop.permute.xlu0 %955
    %957 = vrot.lane.b32.xlu0 %v656, 64
    %v958 = vpop.permute.xlu0 %957
    %959 = vrot.lane.b32.xlu0 %v657, 64
    %v960 = vpop.permute.xlu0 %959
    %961 = vrot.lane.b32.xlu0 %v658, 64
    %v962 = vpop.permute.xlu0 %961
    %963 = vrot.lane.b32.xlu0 %v659, 64
    %v964 = vpop.permute.xlu0 %963
    %965 = vrot.lane.b32.xlu0 %v660, 64
    %v966 = vpop.permute.xlu0 %965
    %967 = vrot.lane.b32.xlu0 %v661, 64
    %v968 = vpop.permute.xlu0 %967
    %969 = vrot.lane.b32.xlu0 %v662, 64
    %v970 = vpop.permute.xlu0 %969
    %971 = vrot.lane.b32.xlu0 %v663, 64
    %v972 = vpop.permute.xlu0 %971
    %989 = vmatprep.subr.bf16.mxu0 0
    %990 = vmatpush1.bf16.msra.mxu0 %v956
    %991 = vmatprep.subr.bf16.mxu0 0
    %992 = vmatpush1.bf16.msra.mxu0 %v954
    %993 = vmatprep.subr.bf16.mxu0 0
    %994 = vmatpush1.bf16.msra.mxu0 %v952
    %995 = vmatprep.subr.bf16.mxu0 0
    %996 = vmatpush1.bf16.msra.mxu0 %v950
    %997 = vmatprep.subr.bf16.mxu0 0
    %998 = vmatpush1.bf16.msra.mxu0 %v948
    %999 = vmatprep.subr.bf16.mxu0 0
    %1000 = vmatpush1.bf16.msra.mxu0 %v946
    %1001 = vmatprep.subr.bf16.mxu0 0
    %1002 = vmatpush1.bf16.msra.mxu0 %v944
    %1003 = vmatprep.subr.bf16.mxu0 0
    %1004 = vmatpush1.bf16.msra.mxu0 %v942
    %1005 = vmatprep.subr.bf16.mxu0 0
    %1006 = vmatpush2.bf16.msra.mxu0 %v972
    %1007 = vmatprep.subr.bf16.mxu0 0
    %1008 = vmatpush2.bf16.msra.mxu0 %v970
    %1009 = vmatprep.subr.bf16.mxu0 0
    %1010 = vmatpush2.bf16.msra.mxu0 %v968
    %1011 = vmatprep.subr.bf16.mxu0 0
    %1012 = vmatpush2.bf16.msra.mxu0 %v966
    %1013 = vmatprep.subr.bf16.mxu0 0
    %1014 = vmatpush2.bf16.msra.mxu0 %v964
    %1015 = vmatprep.subr.bf16.mxu0 0
    %1016 = vmatpush2.bf16.msra.mxu0 %v962
    %1017 = vmatprep.subr.bf16.mxu0 0
    %1018 = vmatpush2.bf16.msra.mxu0 %v960
    %1019 = vmatprep.subr.bf16.mxu0 0
    %1020 = vmatpush2.bf16.msra.mxu0 %v958
    %1021 = vmatprep.mubr.bf16.mxu0 %v918
    %1022 = vmatmul.mubr.bf16.gmra.mxu0 %v917
    %v1023 = vpop.f32.mrf.mxu0
    %v1024 = vadd.f32 0.0, %v1023
    %v1025 = vpop.f32.mrf.mxu0
    %v1026 = vpop.f32.mrf.mxu0
    %v1027 = vadd.f32 0.0, %v1026
    %v1028 = vpop.f32.mrf.mxu0
    %1029 = vmatprep.mubr.bf16.mxu0 %v920
    %1030 = vmatmul.mubr.bf16.gmra.mxu0 %v919
    %v1031 = vpop.f32.mrf.mxu0
    %v1032 = vadd.f32 0.0, %v1031
    %v1033 = vpop.f32.mrf.mxu0
    %v1034 = vpop.f32.mrf.mxu0
    %v1035 = vadd.f32 0.0, %v1034
    %v1036 = vpop.f32.mrf.mxu0
    %1037 = vmatprep.mubr.bf16.mxu0 %v922
    %1038 = vmatmul.mubr.bf16.gmra.mxu0 %v921
    %v1039 = vpop.f32.mrf.mxu0
    %v1040 = vadd.f32 0.0, %v1039
    %v1041 = vpop.f32.mrf.mxu0
    %v1042 = vpop.f32.mrf.mxu0
    %v1043 = vadd.f32 0.0, %v1042
    %v1044 = vpop.f32.mrf.mxu0
    %1045 = vmatprep.mubr.bf16.mxu0 %v924
    %1046 = vmatmul.mubr.bf16.gmra.mxu0 %v923
    %v1047 = vpop.f32.mrf.mxu0
    %v1048 = vadd.f32 0.0, %v1047
    %v1049 = vpop.f32.mrf.mxu0
    %v1050 = vpop.f32.mrf.mxu0
    %v1051 = vadd.f32 0.0, %v1050
    %v1052 = vpop.f32.mrf.mxu0
    %1053 = vdwg.mxu0
    %1070 = vmatprep.subr.bf16.mxu0 0
    %1071 = vmatpush1.bf16.msra.mxu0 %v527
    %1072 = vmatprep.subr.bf16.mxu0 0
    %1073 = vmatpush1.bf16.msra.mxu0 %v526
    %1074 = vmatprep.subr.bf16.mxu0 0
    %1075 = vmatpush1.bf16.msra.mxu0 %v525
    %1076 = vmatprep.subr.bf16.mxu0 0
    %1077 = vmatpush1.bf16.msra.mxu0 %v524
    %1078 = vmatprep.subr.bf16.mxu0 0
    %1079 = vmatpush1.bf16.msra.mxu0 %v523
    %1080 = vmatprep.subr.bf16.mxu0 0
    %1081 = vmatpush1.bf16.msra.mxu0 %v522
    %1082 = vmatprep.subr.bf16.mxu0 0
    %1083 = vmatpush1.bf16.msra.mxu0 %v521
    %1084 = vmatprep.subr.bf16.mxu0 0
    %1085 = vmatpush1.bf16.msra.mxu0 %v520
    %1086 = vmatprep.subr.bf16.mxu0 0
    %1087 = vmatpush2.bf16.msra.mxu0 %v535
    %1088 = vmatprep.subr.bf16.mxu0 0
    %1089 = vmatpush2.bf16.msra.mxu0 %v534
    %1090 = vmatprep.subr.bf16.mxu0 0
    %1091 = vmatpush2.bf16.msra.mxu0 %v533
    %1092 = vmatprep.subr.bf16.mxu0 0
    %1093 = vmatpush2.bf16.msra.mxu0 %v532
    %1094 = vmatprep.subr.bf16.mxu0 0
    %1095 = vmatpush2.bf16.msra.mxu0 %v531
    %1096 = vmatprep.subr.bf16.mxu0 0
    %1097 = vmatpush2.bf16.msra.mxu0 %v530
    %1098 = vmatprep.subr.bf16.mxu0 0
    %1099 = vmatpush2.bf16.msra.mxu0 %v529
    %1100 = vmatprep.subr.bf16.mxu0 0
    %1101 = vmatpush2.bf16.msra.mxu0 %v528
    %1102 = vmatprep.mubr.bf16.mxu0 %v918
    %1103 = vmatmul.mubr.bf16.gmra.mxu0 %v917
    %v1104 = vpop.f32.mrf.mxu0
    %v1105 = vadd.f32 0.0, %v1104
    %v1106 = vpop.f32.mrf.mxu0
    %v1107 = vpop.f32.mrf.mxu0
    %v1108 = vadd.f32 0.0, %v1107
    %v1109 = vpop.f32.mrf.mxu0
    %1110 = vmatprep.mubr.bf16.mxu0 %v920
    %1111 = vmatmul.mubr.bf16.gmra.mxu0 %v919
    %v1112 = vpop.f32.mrf.mxu0
    %v1113 = vadd.f32 0.0, %v1112
    %v1114 = vpop.f32.mrf.mxu0
    %v1115 = vpop.f32.mrf.mxu0
    %v1116 = vadd.f32 0.0, %v1115
    %v1117 = vpop.f32.mrf.mxu0
    %1118 = vmatprep.mubr.bf16.mxu0 %v922
    %1119 = vmatmul.mubr.bf16.gmra.mxu0 %v921
    %v1120 = vpop.f32.mrf.mxu0
    %v1121 = vadd.f32 0.0, %v1120
    %v1122 = vpop.f32.mrf.mxu0
    %v1123 = vpop.f32.mrf.mxu0
    %v1124 = vadd.f32 0.0, %v1123
    %v1125 = vpop.f32.mrf.mxu0
    %1126 = vmatprep.mubr.bf16.mxu0 %v924
    %1127 = vmatmul.mubr.bf16.gmra.mxu0 %v923
    %v1128 = vpop.f32.mrf.mxu0
    %v1129 = vadd.f32 0.0, %v1128
    %v1130 = vpop.f32.mrf.mxu0
    %v1131 = vpop.f32.mrf.mxu0
    %v1132 = vadd.f32 0.0, %v1131
    %v1133 = vpop.f32.mrf.mxu0
    %1134 = vdwg.mxu0
    %v1135 = vrcp.pop %v1105
    %v1136 = vrcp.pop %v1108
    %v1137 = vrcp.pop %v1113
    %v1138 = vrcp.pop %v1116
    %v1139 = vrcp.pop %v1121
    %v1140 = vrcp.pop %v1124
    %v1141 = vrcp.pop %v1129
    %v1142 = vrcp.pop %v1132
    %v1143 = vmul.f32 %v1024, %v1135
    %v1144 = vmul.f32 %v1027, %v1136
    %v1145 = vmul.f32 %v1032, %v1137
    %v1146 = vmul.f32 %v1035, %v1138
    %v1147 = vmul.f32 %v1040, %v1139
    %v1148 = vmul.f32 %v1043, %v1140
    %v1149 = vmul.f32 %v1048, %v1141
    %v1150 = vmul.f32 %v1051, %v1142
    %v1151 = vpack.c.bf16 %v1144, %v1143
    %v1152 = vpack.c.bf16 %v1146, %v1145
    %v1153 = vpack.c.bf16 %v1148, %v1147
    %v1154 = vpack.c.bf16 %v1150, %v1149
    %v1159 = vunpack.c.l.b16 %v208
    %v1160 = vunpack.c.l.b16 %v209
    %v1161 = vunpack.c.l.b16 %v210
    %v1162 = vunpack.c.l.b16 %v211
    %v1163 = vpack.c.b16 %v1160, %v1159
    %v1164 = vpack.c.b16 %v1162, %v1161
    %v1168 = vsel %vm225, %v1151, 0
    %v1171 = vsel %vm225, %v1152, 0
    %v1174 = vsel %vm225, %v1153, 0
    %v1177 = vsel %vm225, %v1154, 0
    %1179 = vmatprep.subr.bf16.mxu0 0
    %1180 = vmatpush1.bf16.msra.mxu0 0
    %1181 = vmatprep.subr.bf16.mxu0 0
    %1182 = vmatpush1.bf16.msra.mxu0 0
    %1183 = vmatprep.subr.bf16.mxu0 0
    %1184 = vmatpush1.bf16.msra.mxu0 0
    %1185 = vmatprep.subr.bf16.mxu0 0
    %1186 = vmatpush1.bf16.msra.mxu0 0
    %1187 = vmatprep.subr.bf16.mxu0 0
    %1188 = vmatpush1.bf16.msra.mxu0 0
    %1189 = vmatprep.subr.bf16.mxu0 0
    %1190 = vmatpush1.bf16.msra.mxu0 0
    %1191 = vmatprep.subr.bf16.mxu0 0
    %1192 = vmatpush1.bf16.msra.mxu0 %v1164
    %1193 = vmatprep.subr.bf16.mxu0 0
    %1194 = vmatpush1.bf16.msra.mxu0 %v1163
    %1195 = vmatprep.subr.bf16.mxu0 0
    %1196 = vmatpush2.bf16.msra.mxu0 0
    %1197 = vmatprep.subr.bf16.mxu0 0
    %1198 = vmatpush2.bf16.msra.mxu0 0
    %1199 = vmatprep.subr.bf16.mxu0 0
    %1200 = vmatpush2.bf16.msra.mxu0 0
    %1201 = vmatprep.subr.bf16.mxu0 0
    %1202 = vmatpush2.bf16.msra.mxu0 0
    %1203 = vmatprep.subr.bf16.mxu0 0
    %1204 = vmatpush2.bf16.msra.mxu0 0
    %1205 = vmatprep.subr.bf16.mxu0 0
    %1206 = vmatpush2.bf16.msra.mxu0 0
    %1207 = vmatprep.subr.bf16.mxu0 0
    %1208 = vmatpush2.bf16.msra.mxu0 0
    %1209 = vmatprep.subr.bf16.mxu0 0
    %1210 = vmatpush2.bf16.msra.mxu0 0
    %1211 = vmatprep.mubr.bf16.mxu0 0
    %1212 = vmatmul.mubr.bf16.gmra.mxu0 %v1168
    %v1213 = vpop.f32.mrf.mxu0
    %v1214 = vadd.f32 0.0, %v1213
    %v1215 = vpop.f32.mrf.mxu0
    %v1216 = vpop.f32.mrf.mxu0
    %v1217 = vadd.f32 0.0, %v1216
    %v1218 = vpop.f32.mrf.mxu0
    %1219 = vmatprep.mubr.bf16.mxu0 0
    %1220 = vmatmul.mubr.bf16.gmra.mxu0 %v1171
    %v1221 = vpop.f32.mrf.mxu0
    %v1222 = vadd.f32 0.0, %v1221
    %v1223 = vpop.f32.mrf.mxu0
    %v1224 = vpop.f32.mrf.mxu0
    %v1225 = vadd.f32 0.0, %v1224
    %v1226 = vpop.f32.mrf.mxu0
    %1227 = vmatprep.mubr.bf16.mxu0 0
    %1228 = vmatmul.mubr.bf16.gmra.mxu0 %v1174
    %v1229 = vpop.f32.mrf.mxu0
    %v1230 = vadd.f32 0.0, %v1229
    %v1231 = vpop.f32.mrf.mxu0
    %v1232 = vpop.f32.mrf.mxu0
    %v1233 = vadd.f32 0.0, %v1232
    %v1234 = vpop.f32.mrf.mxu0
    %1235 = vmatprep.mubr.bf16.mxu0 0
    %1236 = vmatmul.mubr.bf16.gmra.mxu0 %v1177
    %v1237 = vpop.f32.mrf.mxu0
    %v1238 = vadd.f32 0.0, %v1237
    %v1239 = vpop.f32.mrf.mxu0
    %v1240 = vpop.f32.mrf.mxu0
    %v1241 = vadd.f32 0.0, %v1240
    %v1242 = vpop.f32.mrf.mxu0
    %1243 = vdwg.mxu0
    %v1244 = vadd.f32 %v126, %v1214
    %v1245 = vadd.f32 %v129, %v1217
    %v1246 = vadd.f32 %v134, %v1222
    %v1247 = vadd.f32 %v137, %v1225
    %v1248 = vadd.f32 %v142, %v1230
    %v1249 = vadd.f32 %v145, %v1233
    %v1250 = vadd.f32 %v150, %v1238
    %v1251 = vadd.f32 %v153, %v1241
    %v1252 = vlaneseq
    %v1253 = vshrl.u32 %v1252, 7
    %v1254 = vsub.s32 3, %v1253
    %v1255 = vrot.slane %v224, %v1254
    %v1256 = vadd.f32 %v1244, %v1255
    %v1257 = vadd.f32 %v1245, %v1255
    %v1258 = vadd.f32 %v1246, %v1255
    %v1259 = vadd.f32 %v1247, %v1255
    %v1260 = vadd.f32 %v1248, %v1255
    %v1261 = vadd.f32 %v1249, %v1255
    %v1262 = vadd.f32 %v1250, %v1255
    %v1263 = vadd.f32 %v1251, %v1255
    %v1264 = vsel %vm225, %v1256, 0.0
    %1265 = vadd.xlane.f32.xlu0 %v1264
    %v1266 = vpop.xlane.xlu0 %1265
    %v1267 = vsel %vm225, %v1257, 0.0
    %1268 = vadd.xlane.f32.xlu0 %v1267
    %v1269 = vpop.xlane.xlu0 %1268
    %v1270 = vsel %vm225, %v1258, 0.0
    %1271 = vadd.xlane.f32.xlu0 %v1270
    %v1272 = vpop.xlane.xlu0 %1271
    %v1273 = vsel %vm225, %v1259, 0.0
    %1274 = vadd.xlane.f32.xlu0 %v1273
    %v1275 = vpop.xlane.xlu0 %1274
    %v1276 = vsel %vm225, %v1260, 0.0
    %1277 = vadd.xlane.f32.xlu0 %v1276
    %v1278 = vpop.xlane.xlu0 %1277
    %v1279 = vsel %vm225, %v1261, 0.0
    %1280 = vadd.xlane.f32.xlu0 %v1279
    %v1281 = vpop.xlane.xlu0 %1280
    %v1282 = vsel %vm225, %v1262, 0.0
    %1283 = vadd.xlane.f32.xlu0 %v1282
    %v1284 = vpop.xlane.xlu0 %1283
    %v1285 = vsel %vm225, %v1263, 0.0
    %1286 = vadd.xlane.f32.xlu0 %v1285
    %v1287 = vpop.xlane.xlu0 %1286
    %v1288 = vmul.f32 %v1266, %v250
    %v1289 = vmul.f32 %v1269, %v250
    %v1290 = vmul.f32 %v1272, %v250
    %v1291 = vmul.f32 %v1275, %v250
    %v1292 = vmul.f32 %v1278, %v250
    %v1293 = vmul.f32 %v1281, %v250
    %v1294 = vmul.f32 %v1284, %v250
    %v1295 = vmul.f32 %v1287, %v250
    %v1296 = vsub.f32 %v1256, %v1288
    %v1297 = vsub.f32 %v1257, %v1289
    %v1298 = vsub.f32 %v1258, %v1290
    %v1299 = vsub.f32 %v1259, %v1291
    %v1300 = vsub.f32 %v1260, %v1292
    %v1301 = vsub.f32 %v1261, %v1293
    %v1302 = vsub.f32 %v1262, %v1294
    %v1303 = vsub.f32 %v1263, %v1295
    %v1304 = vmul.f32 %v1296, %v1296
    %v1305 = vmul.f32 %v1297, %v1297
    %v1306 = vmul.f32 %v1298, %v1298
    %v1307 = vmul.f32 %v1299, %v1299
    %v1308 = vmul.f32 %v1300, %v1300
    %v1309 = vmul.f32 %v1301, %v1301
    %v1310 = vmul.f32 %v1302, %v1302
    %v1311 = vmul.f32 %v1303, %v1303
    %v1312 = vsel %vm225, %v1304, 0.0
    %1313 = vadd.xlane.f32.xlu0 %v1312
    %v1314 = vpop.xlane.xlu0 %1313
    %v1315 = vsel %vm225, %v1305, 0.0
    %1316 = vadd.xlane.f32.xlu0 %v1315
    %v1317 = vpop.xlane.xlu0 %1316
    %v1318 = vsel %vm225, %v1306, 0.0
    %1319 = vadd.xlane.f32.xlu0 %v1318
    %v1320 = vpop.xlane.xlu0 %1319
    %v1321 = vsel %vm225, %v1307, 0.0
    %1322 = vadd.xlane.f32.xlu0 %v1321
    %v1323 = vpop.xlane.xlu0 %1322
    %v1324 = vsel %vm225, %v1308, 0.0
    %1325 = vadd.xlane.f32.xlu0 %v1324
    %v1326 = vpop.xlane.xlu0 %1325
    %v1327 = vsel %vm225, %v1309, 0.0
    %1328 = vadd.xlane.f32.xlu0 %v1327
    %v1329 = vpop.xlane.xlu0 %1328
    %v1330 = vsel %vm225, %v1310, 0.0
    %1331 = vadd.xlane.f32.xlu0 %v1330
    %v1332 = vpop.xlane.xlu0 %1331
    %v1333 = vsel %vm225, %v1311, 0.0
    %1334 = vadd.xlane.f32.xlu0 %v1333
    %v1335 = vpop.xlane.xlu0 %1334
    %v1336 = vmul.f32 %v1314, %v250
    %v1337 = vmul.f32 %v1317, %v250
    %v1338 = vmul.f32 %v1320, %v250
    %v1339 = vmul.f32 %v1323, %v250
    %v1340 = vmul.f32 %v1326, %v250
    %v1341 = vmul.f32 %v1329, %v250
    %v1342 = vmul.f32 %v1332, %v250
    %v1343 = vmul.f32 %v1335, %v250
    %v1344 = vadd.f32 %v1336, 1e-12
    %v1345 = vadd.f32 %v1337, 1e-12
    %v1346 = vadd.f32 %v1338, 1e-12
    %v1347 = vadd.f32 %v1339, 1e-12
    %v1348 = vadd.f32 %v1340, 1e-12
    %v1349 = vadd.f32 %v1341, 1e-12
    %v1350 = vadd.f32 %v1342, 1e-12
    %v1351 = vadd.f32 %v1343, 1e-12
    %v1352 = vrsqrt.pop %v1344
    %v1353 = vrsqrt.pop %v1345
    %v1354 = vrsqrt.pop %v1346
    %v1355 = vrsqrt.pop %v1347
    %v1356 = vrsqrt.pop %v1348
    %v1357 = vrsqrt.pop %v1349
    %v1358 = vrsqrt.pop %v1350
    %v1359 = vrsqrt.pop %v1351
    %v1360 = vmul.f32 %v1296, %v1352
    %v1361 = vmul.f32 %v1297, %v1353
    %v1362 = vmul.f32 %v1298, %v1354
    %v1363 = vmul.f32 %v1299, %v1355
    %v1364 = vmul.f32 %v1300, %v1356
    %v1365 = vmul.f32 %v1301, %v1357
    %v1366 = vmul.f32 %v1302, %v1358
    %v1367 = vmul.f32 %v1303, %v1359
    %v1368 = vlaneseq
    %v1369 = vshrl.u32 %v1368, 7
    %v1370 = vsub.s32 4, %v1369
    %v1371 = vrot.slane %v224, %v1370
    %v1372 = vmul.f32 %v1360, %v1371
    %v1373 = vmul.f32 %v1361, %v1371
    %v1374 = vmul.f32 %v1362, %v1371
    %v1375 = vmul.f32 %v1363, %v1371
    %v1376 = vmul.f32 %v1364, %v1371
    %v1377 = vmul.f32 %v1365, %v1371
    %v1378 = vmul.f32 %v1366, %v1371
    %v1379 = vmul.f32 %v1367, %v1371
    %v1380 = vlaneseq
    %v1381 = vshrl.u32 %v1380, 7
    %v1382 = vsub.s32 5, %v1381
    %v1383 = vrot.slane %v224, %v1382
    %v1384 = vadd.f32 %v1372, %v1383
    %v1385 = vadd.f32 %v1373, %v1383
    %v1386 = vadd.f32 %v1374, %v1383
    %v1387 = vadd.f32 %v1375, %v1383
    %v1388 = vadd.f32 %v1376, %v1383
    %v1389 = vadd.f32 %v1377, %v1383
    %v1390 = vadd.f32 %v1378, %v1383
    %v1391 = vadd.f32 %v1379, %v1383
    %v1392 = vpack.c.bf16 %v1385, %v1384
    %v1393 = vpack.c.bf16 %v1387, %v1386
    %v1394 = vpack.c.bf16 %v1389, %v1388
    %v1395 = vpack.c.bf16 %v1391, %v1390
    %v1396 = vlaneseq
    %v1397 = vshrl.u32 %v1396, 7
    %v1398 = vsub.s32 6, %v1397
    %v1399 = vrot.slane %v224, %v1398
    %v1404 = vunpack.c.l.b16 %v212
    %v1405 = vunpack.c.l.b16 %v213
    %v1406 = vunpack.c.l.b16 %v214
    %v1407 = vunpack.c.l.b16 %v215
    %v1408 = vpack.c.b16 %v1405, %v1404
    %v1409 = vpack.c.b16 %v1407, %v1406
    %v1413 = vsel %vm225, %v1392, 0
    %v1416 = vsel %vm225, %v1393, 0
    %v1419 = vsel %vm225, %v1394, 0
    %v1422 = vsel %vm225, %v1395, 0
    %1424 = vmatprep.subr.bf16.mxu0 0
    %1425 = vmatpush1.bf16.msra.mxu0 0
    %1426 = vmatprep.subr.bf16.mxu0 0
    %1427 = vmatpush1.bf16.msra.mxu0 0
    %1428 = vmatprep.subr.bf16.mxu0 0
    %1429 = vmatpush1.bf16.msra.mxu0 0
    %1430 = vmatprep.subr.bf16.mxu0 0
    %1431 = vmatpush1.bf16.msra.mxu0 0
    %1432 = vmatprep.subr.bf16.mxu0 0
    %1433 = vmatpush1.bf16.msra.mxu0 0
    %1434 = vmatprep.subr.bf16.mxu0 0
    %1435 = vmatpush1.bf16.msra.mxu0 0
    %1436 = vmatprep.subr.bf16.mxu0 0
    %1437 = vmatpush1.bf16.msra.mxu0 %v1409
    %1438 = vmatprep.subr.bf16.mxu0 0
    %1439 = vmatpush1.bf16.msra.mxu0 %v1408
    %1440 = vmatprep.subr.bf16.mxu0 0
    %1441 = vmatpush2.bf16.msra.mxu0 0
    %1442 = vmatprep.subr.bf16.mxu0 0
    %1443 = vmatpush2.bf16.msra.mxu0 0
    %1444 = vmatprep.subr.bf16.mxu0 0
    %1445 = vmatpush2.bf16.msra.mxu0 0
    %1446 = vmatprep.subr.bf16.mxu0 0
    %1447 = vmatpush2.bf16.msra.mxu0 0
    %1448 = vmatprep.subr.bf16.mxu0 0
    %1449 = vmatpush2.bf16.msra.mxu0 0
    %1450 = vmatprep.subr.bf16.mxu0 0
    %1451 = vmatpush2.bf16.msra.mxu0 0
    %1452 = vmatprep.subr.bf16.mxu0 0
    %1453 = vmatpush2.bf16.msra.mxu0 0
    %1454 = vmatprep.subr.bf16.mxu0 0
    %1455 = vmatpush2.bf16.msra.mxu0 0
    %1456 = vmatprep.mubr.bf16.mxu0 0
    %1457 = vmatmul.mubr.bf16.gmra.mxu0 %v1413
    %v1458 = vpop.f32.mrf.mxu0
    %v1459 = vadd.f32 %v1399, %v1458
    %v1460 = vpop.f32.mrf.mxu0
    %v1461 = vpop.f32.mrf.mxu0
    %v1462 = vadd.f32 %v1399, %v1461
    %v1463 = vpop.f32.mrf.mxu0
    %1464 = vmatprep.mubr.bf16.mxu0 0
    %1465 = vmatmul.mubr.bf16.gmra.mxu0 %v1416
    %v1466 = vpop.f32.mrf.mxu0
    %v1467 = vadd.f32 %v1399, %v1466
    %v1468 = vpop.f32.mrf.mxu0
    %v1469 = vpop.f32.mrf.mxu0
    %v1470 = vadd.f32 %v1399, %v1469
    %v1471 = vpop.f32.mrf.mxu0
    %1472 = vmatprep.mubr.bf16.mxu0 0
    %1473 = vmatmul.mubr.bf16.gmra.mxu0 %v1419
    %v1474 = vpop.f32.mrf.mxu0
    %v1475 = vadd.f32 %v1399, %v1474
    %v1476 = vpop.f32.mrf.mxu0
    %v1477 = vpop.f32.mrf.mxu0
    %v1478 = vadd.f32 %v1399, %v1477
    %v1479 = vpop.f32.mrf.mxu0
    %1480 = vmatprep.mubr.bf16.mxu0 0
    %1481 = vmatmul.mubr.bf16.gmra.mxu0 %v1422
    %v1482 = vpop.f32.mrf.mxu0
    %v1483 = vadd.f32 %v1399, %v1482
    %v1484 = vpop.f32.mrf.mxu0
    %v1485 = vpop.f32.mrf.mxu0
    %v1486 = vadd.f32 %v1399, %v1485
    %v1487 = vpop.f32.mrf.mxu0
    %1488 = vdwg.mxu0
    %v1489 = vmul.f32 %v1459, %v1459
    %v1490 = vmul.f32 %v1462, %v1462
    %v1491 = vmul.f32 %v1467, %v1467
    %v1492 = vmul.f32 %v1470, %v1470
    %v1493 = vmul.f32 %v1475, %v1475
    %v1494 = vmul.f32 %v1478, %v1478
    %v1495 = vmul.f32 %v1483, %v1483
    %v1496 = vmul.f32 %v1486, %v1486
    %v1497 = vmul.f32 %v1459, %v1489
    %v1498 = vmul.f32 %v1462, %v1490
    %v1499 = vmul.f32 %v1467, %v1491
    %v1500 = vmul.f32 %v1470, %v1492
    %v1501 = vmul.f32 %v1475, %v1493
    %v1502 = vmul.f32 %v1478, %v1494
    %v1503 = vmul.f32 %v1483, %v1495
    %v1504 = vmul.f32 %v1486, %v1496
    %v1505 = vmul.f32 %v1497, 0.044715
    %v1506 = vmul.f32 %v1498, 0.044715
    %v1507 = vmul.f32 %v1499, 0.044715
    %v1508 = vmul.f32 %v1500, 0.044715
    %v1509 = vmul.f32 %v1501, 0.044715
    %v1510 = vmul.f32 %v1502, 0.044715
    %v1511 = vmul.f32 %v1503, 0.044715
    %v1512 = vmul.f32 %v1504, 0.044715
    %v1513 = vadd.f32 %v1459, %v1505
    %v1514 = vadd.f32 %v1462, %v1506
    %v1515 = vadd.f32 %v1467, %v1507
    %v1516 = vadd.f32 %v1470, %v1508
    %v1517 = vadd.f32 %v1475, %v1509
    %v1518 = vadd.f32 %v1478, %v1510
    %v1519 = vadd.f32 %v1483, %v1511
    %v1520 = vadd.f32 %v1486, %v1512
    %v1521 = vmul.f32 %v1513, 0.7978846
    %v1522 = vmul.f32 %v1514, 0.7978846
    %v1523 = vmul.f32 %v1515, 0.7978846
    %v1524 = vmul.f32 %v1516, 0.7978846
    %v1525 = vmul.f32 %v1517, 0.7978846
    %v1526 = vmul.f32 %v1518, 0.7978846
    %v1527 = vmul.f32 %v1519, 0.7978846
    %v1528 = vmul.f32 %v1520, 0.7978846
    %v1529 = vtanh.pop %v1521
    %v1530 = vtanh.pop %v1522
    %v1531 = vtanh.pop %v1523
    %v1532 = vtanh.pop %v1524
    %v1533 = vtanh.pop %v1525
    %v1534 = vtanh.pop %v1526
    %v1535 = vtanh.pop %v1527
    %v1536 = vtanh.pop %v1528
    %v1537 = vadd.f32 %v1529, 1.0
    %v1538 = vadd.f32 %v1530, 1.0
    %v1539 = vadd.f32 %v1531, 1.0
    %v1540 = vadd.f32 %v1532, 1.0
    %v1541 = vadd.f32 %v1533, 1.0
    %v1542 = vadd.f32 %v1534, 1.0
    %v1543 = vadd.f32 %v1535, 1.0
    %v1544 = vadd.f32 %v1536, 1.0
    %v1545 = vmul.f32 %v1537, 0.5
    %v1546 = vmul.f32 %v1538, 0.5
    %v1547 = vmul.f32 %v1539, 0.5
    %v1548 = vmul.f32 %v1540, 0.5
    %v1549 = vmul.f32 %v1541, 0.5
    %v1550 = vmul.f32 %v1542, 0.5
    %v1551 = vmul.f32 %v1543, 0.5
    %v1552 = vmul.f32 %v1544, 0.5
    %v1553 = vmul.f32 %v1459, %v1545
    %v1554 = vmul.f32 %v1462, %v1546
    %v1555 = vmul.f32 %v1467, %v1547
    %v1556 = vmul.f32 %v1470, %v1548
    %v1557 = vmul.f32 %v1475, %v1549
    %v1558 = vmul.f32 %v1478, %v1550
    %v1559 = vmul.f32 %v1483, %v1551
    %v1560 = vmul.f32 %v1486, %v1552
    %v1561 = vpack.c.bf16 %v1554, %v1553
    %v1562 = vpack.c.bf16 %v1556, %v1555
    %v1563 = vpack.c.bf16 %v1558, %v1557
    %v1564 = vpack.c.bf16 %v1560, %v1559
    %v1573 = vunpack.c.l.b16 %v216
    %v1574 = vunpack.c.l.b16 %v217
    %v1575 = vunpack.c.l.b16 %v218
    %v1576 = vunpack.c.l.b16 %v219
    %v1577 = vunpack.c.l.b16 %v220
    %v1578 = vunpack.c.l.b16 %v221
    %v1579 = vunpack.c.l.b16 %v222
    %v1580 = vunpack.c.l.b16 %v223
    %v1581 = vpack.c.b16 %v1574, %v1573
    %v1582 = vpack.c.b16 %v1576, %v1575
    %v1583 = vpack.c.b16 %v1578, %v1577
    %v1584 = vpack.c.b16 %v1580, %v1579
    %vm1589 = vcmask 523264
    %v1591 = vsel %vm1589, %v1561, 0
    %v1594 = vsel %vm1589, %v1562, 0
    %v1597 = vsel %vm1589, %v1563, 0
    %v1600 = vsel %vm1589, %v1564, 0
    %1602 = vmatprep.subr.bf16.mxu0 0
    %1603 = vmatpush1.bf16.msra.mxu0 0
    %1604 = vmatprep.subr.bf16.mxu0 0
    %1605 = vmatpush1.bf16.msra.mxu0 0
    %1606 = vmatprep.subr.bf16.mxu0 0
    %1607 = vmatpush1.bf16.msra.mxu0 0
    %1608 = vmatprep.subr.bf16.mxu0 0
    %1609 = vmatpush1.bf16.msra.mxu0 0
    %1610 = vmatprep.subr.bf16.mxu0 0
    %1611 = vmatpush1.bf16.msra.mxu0 %v1584
    %1612 = vmatprep.subr.bf16.mxu0 0
    %1613 = vmatpush1.bf16.msra.mxu0 %v1583
    %1614 = vmatprep.subr.bf16.mxu0 0
    %1615 = vmatpush1.bf16.msra.mxu0 %v1582
    %1616 = vmatprep.subr.bf16.mxu0 0
    %1617 = vmatpush1.bf16.msra.mxu0 %v1581
    %1618 = vmatprep.subr.bf16.mxu0 0
    %1619 = vmatpush2.bf16.msra.mxu0 0
    %1620 = vmatprep.subr.bf16.mxu0 0
    %1621 = vmatpush2.bf16.msra.mxu0 0
    %1622 = vmatprep.subr.bf16.mxu0 0
    %1623 = vmatpush2.bf16.msra.mxu0 0
    %1624 = vmatprep.subr.bf16.mxu0 0
    %1625 = vmatpush2.bf16.msra.mxu0 0
    %1626 = vmatprep.subr.bf16.mxu0 0
    %1627 = vmatpush2.bf16.msra.mxu0 0
    %1628 = vmatprep.subr.bf16.mxu0 0
    %1629 = vmatpush2.bf16.msra.mxu0 0
    %1630 = vmatprep.subr.bf16.mxu0 0
    %1631 = vmatpush2.bf16.msra.mxu0 0
    %1632 = vmatprep.subr.bf16.mxu0 0
    %1633 = vmatpush2.bf16.msra.mxu0 0
    %1634 = vmatprep.mubr.bf16.mxu0 0
    %1635 = vmatmul.mubr.bf16.gmra.mxu0 %v1591
    %v1636 = vpop.f32.mrf.mxu0
    %v1637 = vadd.f32 0.0, %v1636
    %v1638 = vpop.f32.mrf.mxu0
    %v1639 = vpop.f32.mrf.mxu0
    %v1640 = vadd.f32 0.0, %v1639
    %v1641 = vpop.f32.mrf.mxu0
    %1642 = vmatprep.mubr.bf16.mxu0 0
    %1643 = vmatmul.mubr.bf16.gmra.mxu0 %v1594
    %v1644 = vpop.f32.mrf.mxu0
    %v1645 = vadd.f32 0.0, %v1644
    %v1646 = vpop.f32.mrf.mxu0
    %v1647 = vpop.f32.mrf.mxu0
    %v1648 = vadd.f32 0.0, %v1647
    %v1649 = vpop.f32.mrf.mxu0
    %1650 = vmatprep.mubr.bf16.mxu0 0
    %1651 = vmatmul.mubr.bf16.gmra.mxu0 %v1597
    %v1652 = vpop.f32.mrf.mxu0
    %v1653 = vadd.f32 0.0, %v1652
    %v1654 = vpop.f32.mrf.mxu0
    %v1655 = vpop.f32.mrf.mxu0
    %v1656 = vadd.f32 0.0, %v1655
    %v1657 = vpop.f32.mrf.mxu0
    %1658 = vmatprep.mubr.bf16.mxu0 0
    %1659 = vmatmul.mubr.bf16.gmra.mxu0 %v1600
    %v1660 = vpop.f32.mrf.mxu0
    %v1661 = vadd.f32 0.0, %v1660
    %v1662 = vpop.f32.mrf.mxu0
    %v1663 = vpop.f32.mrf.mxu0
    %v1664 = vadd.f32 0.0, %v1663
    %v1665 = vpop.f32.mrf.mxu0
    %1666 = vdwg.mxu0
    %v1667 = vadd.f32 %v1256, %v1637
    %v1668 = vadd.f32 %v1257, %v1640
    %v1669 = vadd.f32 %v1258, %v1645
    %v1670 = vadd.f32 %v1259, %v1648
    %v1671 = vadd.f32 %v1260, %v1653
    %v1672 = vadd.f32 %v1261, %v1656
    %v1673 = vadd.f32 %v1262, %v1661
    %v1674 = vadd.f32 %v1263, %v1664
    %v1675 = vlaneseq
    %v1676 = vshrl.u32 %v1675, 7
    %v1677 = vsub.s32 7, %v1676
    %v1678 = vrot.slane %v224, %v1677
    %v1679 = vadd.f32 %v1667, %v1678
    %v1680 = vadd.f32 %v1668, %v1678
    %v1681 = vadd.f32 %v1669, %v1678
    %v1682 = vadd.f32 %v1670, %v1678
    %v1683 = vadd.f32 %v1671, %v1678
    %v1684 = vadd.f32 %v1672, %v1678
    %v1685 = vadd.f32 %v1673, %v1678
    %v1686 = vadd.f32 %v1674, %v1678
    %s1687 = scalar_lea.vmem %s3, 80
    %v1688 = vld [vmem:[%s1687] sm:$0xf]
    %v1689 = vld [vmem:[%s1687 + $0x4] sm:$0xf]
    %v1690 = vld [vmem:[%s1687 + $0x8] sm:$0xf]
    %v1691 = vld [vmem:[%s1687 + $0xc] sm:$0xf]
    %v1692 = vld [vmem:[%s1687 + $0x10] sm:$0xf]
    %v1693 = vld [vmem:[%s1687 + $0x14] sm:$0xf]
    %v1694 = vld [vmem:[%s1687 + $0x18] sm:$0xf]
    %v1695 = vld [vmem:[%s1687 + $0x1c] sm:$0xf]
    %v1696 = vld [vmem:[%s1687 + $0x20] sm:$0xf]
    %v1697 = vld [vmem:[%s1687 + $0x24] sm:$0xf]
    %v1698 = vld [vmem:[%s1687 + $0x28] sm:$0xf]
    %v1699 = vld [vmem:[%s1687 + $0x2c] sm:$0xf]
    %v1700 = vld [vmem:[%s1687 + $0x30] sm:$0xf]
    %v1701 = vld [vmem:[%s1687 + $0x34] sm:$0xf]
    %v1702 = vld [vmem:[%s1687 + $0x38] sm:$0xf]
    %v1703 = vld [vmem:[%s1687 + $0x3c] sm:$0xf]
    %v1704 = vld [vmem:[%s1687 + $0x40] sm:$0xf]
    %v1705 = vld [vmem:[%s1687 + $0x44] sm:$0xf]
    %v1706 = vld [vmem:[%s1687 + $0x48] sm:$0xf]
    %v1707 = vld [vmem:[%s1687 + $0x4c] sm:$0xf]
    %s1708 = scalar_lea.vmem %s4, 8
    %v1709 = vld [vmem:[%s1708] sm:$0xff]
    %v1710 = vsel %vm225, %v1679, 0.0
    %1711 = vadd.xlane.f32.xlu0 %v1710
    %v1712 = vpop.xlane.xlu0 %1711
    %v1713 = vsel %vm225, %v1680, 0.0
    %1714 = vadd.xlane.f32.xlu0 %v1713
    %v1715 = vpop.xlane.xlu0 %1714
    %v1716 = vsel %vm225, %v1681, 0.0
    %1717 = vadd.xlane.f32.xlu0 %v1716
    %v1718 = vpop.xlane.xlu0 %1717
    %v1719 = vsel %vm225, %v1682, 0.0
    %1720 = vadd.xlane.f32.xlu0 %v1719
    %v1721 = vpop.xlane.xlu0 %1720
    %v1722 = vsel %vm225, %v1683, 0.0
    %1723 = vadd.xlane.f32.xlu0 %v1722
    %v1724 = vpop.xlane.xlu0 %1723
    %v1725 = vsel %vm225, %v1684, 0.0
    %1726 = vadd.xlane.f32.xlu0 %v1725
    %v1727 = vpop.xlane.xlu0 %1726
    %v1728 = vsel %vm225, %v1685, 0.0
    %1729 = vadd.xlane.f32.xlu0 %v1728
    %v1730 = vpop.xlane.xlu0 %1729
    %v1731 = vsel %vm225, %v1686, 0.0
    %1732 = vadd.xlane.f32.xlu0 %v1731
    %v1733 = vpop.xlane.xlu0 %1732
    %v1734 = vmul.f32 %v1712, %v250
    %v1735 = vmul.f32 %v1715, %v250
    %v1736 = vmul.f32 %v1718, %v250
    %v1737 = vmul.f32 %v1721, %v250
    %v1738 = vmul.f32 %v1724, %v250
    %v1739 = vmul.f32 %v1727, %v250
    %v1740 = vmul.f32 %v1730, %v250
    %v1741 = vmul.f32 %v1733, %v250
    %v1742 = vsub.f32 %v1679, %v1734
    %v1743 = vsub.f32 %v1680, %v1735
    %v1744 = vsub.f32 %v1681, %v1736
    %v1745 = vsub.f32 %v1682, %v1737
    %v1746 = vsub.f32 %v1683, %v1738
    %v1747 = vsub.f32 %v1684, %v1739
    %v1748 = vsub.f32 %v1685, %v1740
    %v1749 = vsub.f32 %v1686, %v1741
    %v1750 = vmul.f32 %v1742, %v1742
    %v1751 = vmul.f32 %v1743, %v1743
    %v1752 = vmul.f32 %v1744, %v1744
    %v1753 = vmul.f32 %v1745, %v1745
    %v1754 = vmul.f32 %v1746, %v1746
    %v1755 = vmul.f32 %v1747, %v1747
    %v1756 = vmul.f32 %v1748, %v1748
    %v1757 = vmul.f32 %v1749, %v1749
    %v1758 = vsel %vm225, %v1750, 0.0
    %1759 = vadd.xlane.f32.xlu0 %v1758
    %v1760 = vpop.xlane.xlu0 %1759
    %v1761 = vsel %vm225, %v1751, 0.0
    %1762 = vadd.xlane.f32.xlu0 %v1761
    %v1763 = vpop.xlane.xlu0 %1762
    %v1764 = vsel %vm225, %v1752, 0.0
    %1765 = vadd.xlane.f32.xlu0 %v1764
    %v1766 = vpop.xlane.xlu0 %1765
    %v1767 = vsel %vm225, %v1753, 0.0
    %1768 = vadd.xlane.f32.xlu0 %v1767
    %v1769 = vpop.xlane.xlu0 %1768
    %v1770 = vsel %vm225, %v1754, 0.0
    %1771 = vadd.xlane.f32.xlu0 %v1770
    %v1772 = vpop.xlane.xlu0 %1771
    %v1773 = vsel %vm225, %v1755, 0.0
    %1774 = vadd.xlane.f32.xlu0 %v1773
    %v1775 = vpop.xlane.xlu0 %1774
    %v1776 = vsel %vm225, %v1756, 0.0
    %1777 = vadd.xlane.f32.xlu0 %v1776
    %v1778 = vpop.xlane.xlu0 %1777
    %v1779 = vsel %vm225, %v1757, 0.0
    %1780 = vadd.xlane.f32.xlu0 %v1779
    %v1781 = vpop.xlane.xlu0 %1780
    %v1782 = vmul.f32 %v1760, %v250
    %v1783 = vmul.f32 %v1763, %v250
    %v1784 = vmul.f32 %v1766, %v250
    %v1785 = vmul.f32 %v1769, %v250
    %v1786 = vmul.f32 %v1772, %v250
    %v1787 = vmul.f32 %v1775, %v250
    %v1788 = vmul.f32 %v1778, %v250
    %v1789 = vmul.f32 %v1781, %v250
    %v1790 = vadd.f32 %v1782, 1e-12
    %v1791 = vadd.f32 %v1783, 1e-12
    %v1792 = vadd.f32 %v1784, 1e-12
    %v1793 = vadd.f32 %v1785, 1e-12
    %v1794 = vadd.f32 %v1786, 1e-12
    %v1795 = vadd.f32 %v1787, 1e-12
    %v1796 = vadd.f32 %v1788, 1e-12
    %v1797 = vadd.f32 %v1789, 1e-12
    %v1798 = vrsqrt.pop %v1790
    %v1799 = vrsqrt.pop %v1791
    %v1800 = vrsqrt.pop %v1792
    %v1801 = vrsqrt.pop %v1793
    %v1802 = vrsqrt.pop %v1794
    %v1803 = vrsqrt.pop %v1795
    %v1804 = vrsqrt.pop %v1796
    %v1805 = vrsqrt.pop %v1797
    %v1806 = vmul.f32 %v1742, %v1798
    %v1807 = vmul.f32 %v1743, %v1799
    %v1808 = vmul.f32 %v1744, %v1800
    %v1809 = vmul.f32 %v1745, %v1801
    %v1810 = vmul.f32 %v1746, %v1802
    %v1811 = vmul.f32 %v1747, %v1803
    %v1812 = vmul.f32 %v1748, %v1804
    %v1813 = vmul.f32 %v1749, %v1805
    %v1814 = vlaneseq
    %v1815 = vshrl.u32 %v1814, 7
    %v1816 = vsub.s32 0, %v1815
    %v1817 = vrot.slane %v1709, %v1816
    %v1818 = vmul.f32 %v1806, %v1817
    %v1819 = vmul.f32 %v1807, %v1817
    %v1820 = vmul.f32 %v1808, %v1817
    %v1821 = vmul.f32 %v1809, %v1817
    %v1822 = vmul.f32 %v1810, %v1817
    %v1823 = vmul.f32 %v1811, %v1817
    %v1824 = vmul.f32 %v1812, %v1817
    %v1825 = vmul.f32 %v1813, %v1817
    %v1826 = vlaneseq
    %v1827 = vshrl.u32 %v1826, 7
    %v1828 = vsub.s32 1, %v1827
    %v1829 = vrot.slane %v1709, %v1828
    %v1830 = vadd.f32 %v1818, %v1829
    %v1831 = vadd.f32 %v1819, %v1829
    %v1832 = vadd.f32 %v1820, %v1829
    %v1833 = vadd.f32 %v1821, %v1829
    %v1834 = vadd.f32 %v1822, %v1829
    %v1835 = vadd.f32 %v1823, %v1829
    %v1836 = vadd.f32 %v1824, %v1829
    %v1837 = vadd.f32 %v1825, %v1829
    %v1838 = vpack.c.bf16 %v1831, %v1830
    %v1839 = vpack.c.bf16 %v1833, %v1832
    %v1840 = vpack.c.bf16 %v1835, %v1834
    %v1841 = vpack.c.bf16 %v1837, %v1836
    %v1842 = vlaneseq
    %v1843 = vshrl.u32 %v1842, 7
    %v1844 = vsub.s32 2, %v1843
    %v1845 = vrot.slane %v1709, %v1844
    %v1850 = vunpack.c.l.b16 %v1688
    %v1851 = vunpack.c.l.b16 %v1689
    %v1852 = vunpack.c.l.b16 %v1690
    %v1853 = vunpack.c.l.b16 %v1691
    %v1854 = vpack.c.b16 %v1851, %v1850
    %v1855 = vpack.c.b16 %v1853, %v1852
    %v1859 = vsel %vm225, %v1838, 0
    %v1862 = vsel %vm225, %v1839, 0
    %v1865 = vsel %vm225, %v1840, 0
    %v1868 = vsel %vm225, %v1841, 0
    %1870 = vmatprep.subr.bf16.mxu0 0
    %1871 = vmatpush1.bf16.msra.mxu0 0
    %1872 = vmatprep.subr.bf16.mxu0 0
    %1873 = vmatpush1.bf16.msra.mxu0 0
    %1874 = vmatprep.subr.bf16.mxu0 0
    %1875 = vmatpush1.bf16.msra.mxu0 0
    %1876 = vmatprep.subr.bf16.mxu0 0
    %1877 = vmatpush1.bf16.msra.mxu0 0
    %1878 = vmatprep.subr.bf16.mxu0 0
    %1879 = vmatpush1.bf16.msra.mxu0 0
    %1880 = vmatprep.subr.bf16.mxu0 0
    %1881 = vmatpush1.bf16.msra.mxu0 0
    %1882 = vmatprep.subr.bf16.mxu0 0
    %1883 = vmatpush1.bf16.msra.mxu0 %v1855
    %1884 = vmatprep.subr.bf16.mxu0 0
    %1885 = vmatpush1.bf16.msra.mxu0 %v1854
    %1886 = vmatprep.subr.bf16.mxu0 0
    %1887 = vmatpush2.bf16.msra.mxu0 0
    %1888 = vmatprep.subr.bf16.mxu0 0
    %1889 = vmatpush2.bf16.msra.mxu0 0
    %1890 = vmatprep.subr.bf16.mxu0 0
    %1891 = vmatpush2.bf16.msra.mxu0 0
    %1892 = vmatprep.subr.bf16.mxu0 0
    %1893 = vmatpush2.bf16.msra.mxu0 0
    %1894 = vmatprep.subr.bf16.mxu0 0
    %1895 = vmatpush2.bf16.msra.mxu0 0
    %1896 = vmatprep.subr.bf16.mxu0 0
    %1897 = vmatpush2.bf16.msra.mxu0 0
    %1898 = vmatprep.subr.bf16.mxu0 0
    %1899 = vmatpush2.bf16.msra.mxu0 0
    %1900 = vmatprep.subr.bf16.mxu0 0
    %1901 = vmatpush2.bf16.msra.mxu0 0
    %1902 = vmatprep.mubr.bf16.mxu0 0
    %1903 = vmatmul.mubr.bf16.gmra.mxu0 %v1859
    %v1904 = vpop.f32.mrf.mxu0
    %v1905 = vadd.f32 %v1845, %v1904
    %v1906 = vpop.f32.mrf.mxu0
    %v1907 = vpop.f32.mrf.mxu0
    %v1908 = vadd.f32 %v1845, %v1907
    %v1909 = vpop.f32.mrf.mxu0
    %1910 = vmatprep.mubr.bf16.mxu0 0
    %1911 = vmatmul.mubr.bf16.gmra.mxu0 %v1862
    %v1912 = vpop.f32.mrf.mxu0
    %v1913 = vadd.f32 %v1845, %v1912
    %v1914 = vpop.f32.mrf.mxu0
    %v1915 = vpop.f32.mrf.mxu0
    %v1916 = vadd.f32 %v1845, %v1915
    %v1917 = vpop.f32.mrf.mxu0
    %1918 = vmatprep.mubr.bf16.mxu0 0
    %1919 = vmatmul.mubr.bf16.gmra.mxu0 %v1865
    %v1920 = vpop.f32.mrf.mxu0
    %v1921 = vadd.f32 %v1845, %v1920
    %v1922 = vpop.f32.mrf.mxu0
    %v1923 = vpop.f32.mrf.mxu0
    %v1924 = vadd.f32 %v1845, %v1923
    %v1925 = vpop.f32.mrf.mxu0
    %1926 = vmatprep.mubr.bf16.mxu0 0
    %1927 = vmatmul.mubr.bf16.gmra.mxu0 %v1868
    %v1928 = vpop.f32.mrf.mxu0
    %v1929 = vadd.f32 %v1845, %v1928
    %v1930 = vpop.f32.mrf.mxu0
    %v1931 = vpop.f32.mrf.mxu0
    %v1932 = vadd.f32 %v1845, %v1931
    %v1933 = vpop.f32.mrf.mxu0
    %1934 = vdwg.mxu0
    %v1935 = vpack.c.bf16 %v1908, %v1905
    %v1936 = vpack.c.bf16 %v1916, %v1913
    %v1937 = vpack.c.bf16 %v1924, %v1921
    %v1938 = vpack.c.bf16 %v1932, %v1929
    %v1939 = vmul.bf16 %v1935, %v537
    %v1940 = vmul.bf16 %v1936, %v539
    %v1941 = vmul.bf16 %v1937, %v541
    %v1942 = vmul.bf16 %v1938, %v543
    %v1943 = vmul.bf16 %v1935, %v545
    %v1944 = vmul.bf16 %v1936, %v547
    %v1945 = vmul.bf16 %v1937, %v549
    %v1946 = vmul.bf16 %v1938, %v551
    %v1947 = vmul.bf16 %v1935, %v553
    %v1948 = vmul.bf16 %v1936, %v555
    %v1949 = vmul.bf16 %v1937, %v557
    %v1950 = vmul.bf16 %v1938, %v559
    %v1951 = vmul.bf16 %v1935, %v561
    %v1952 = vmul.bf16 %v1936, %v563
    %v1953 = vmul.bf16 %v1937, %v565
    %v1954 = vmul.bf16 %v1938, %v567
    %v1955 = vmul.bf16 %v1935, %v601
    %v1956 = vmul.bf16 %v1936, %v603
    %v1957 = vmul.bf16 %v1937, %v605
    %v1958 = vmul.bf16 %v1938, %v607
    %v1959 = vmul.bf16 %v1935, %v609
    %v1960 = vmul.bf16 %v1936, %v611
    %v1961 = vmul.bf16 %v1937, %v613
    %v1962 = vmul.bf16 %v1938, %v615
    %v1963 = vmul.bf16 %v1935, %v617
    %v1964 = vmul.bf16 %v1936, %v619
    %v1965 = vmul.bf16 %v1937, %v621
    %v1966 = vmul.bf16 %v1938, %v623
    %v1967 = vmul.bf16 %v1935, %v625
    %v1968 = vmul.bf16 %v1936, %v627
    %v1969 = vmul.bf16 %v1937, %v629
    %v1970 = vmul.bf16 %v1938, %v631
    %1987 = vrot.lane.b32.xlu0 %v1939, 96
    %v1988 = vpop.permute.xlu0 %1987
    %1989 = vrot.lane.b32.xlu0 %v1940, 96
    %v1990 = vpop.permute.xlu0 %1989
    %1991 = vrot.lane.b32.xlu0 %v1941, 96
    %v1992 = vpop.permute.xlu0 %1991
    %1993 = vrot.lane.b32.xlu0 %v1942, 96
    %v1994 = vpop.permute.xlu0 %1993
    %1995 = vrot.lane.b32.xlu0 %v1943, 96
    %v1996 = vpop.permute.xlu0 %1995
    %1997 = vrot.lane.b32.xlu0 %v1944, 96
    %v1998 = vpop.permute.xlu0 %1997
    %1999 = vrot.lane.b32.xlu0 %v1945, 96
    %v2000 = vpop.permute.xlu0 %1999
    %2001 = vrot.lane.b32.xlu0 %v1946, 96
    %v2002 = vpop.permute.xlu0 %2001
    %2003 = vrot.lane.b32.xlu0 %v1947, 96
    %v2004 = vpop.permute.xlu0 %2003
    %2005 = vrot.lane.b32.xlu0 %v1948, 96
    %v2006 = vpop.permute.xlu0 %2005
    %2007 = vrot.lane.b32.xlu0 %v1949, 96
    %v2008 = vpop.permute.xlu0 %2007
    %2009 = vrot.lane.b32.xlu0 %v1950, 96
    %v2010 = vpop.permute.xlu0 %2009
    %2011 = vrot.lane.b32.xlu0 %v1951, 96
    %v2012 = vpop.permute.xlu0 %2011
    %2013 = vrot.lane.b32.xlu0 %v1952, 96
    %v2014 = vpop.permute.xlu0 %2013
    %2015 = vrot.lane.b32.xlu0 %v1953, 96
    %v2016 = vpop.permute.xlu0 %2015
    %2017 = vrot.lane.b32.xlu0 %v1954, 96
    %v2018 = vpop.permute.xlu0 %2017
    %v2020 = vsel %vm225, %v1935, 0
    %v2023 = vsel %vm225, %v1936, 0
    %v2026 = vsel %vm225, %v1937, 0
    %v2029 = vsel %vm225, %v1938, 0
    %v2032 = vsel %vm225, %v1988, 0
    %v2035 = vsel %vm225, %v1990, 0
    %v2038 = vsel %vm225, %v1992, 0
    %v2041 = vsel %vm225, %v1994, 0
    %v2044 = vsel %vm225, %v1996, 0
    %v2047 = vsel %vm225, %v1998, 0
    %v2050 = vsel %vm225, %v2000, 0
    %v2053 = vsel %vm225, %v2002, 0
    %v2056 = vsel %vm225, %v2004, 0
    %v2059 = vsel %vm225, %v2006, 0
    %v2062 = vsel %vm225, %v2008, 0
    %v2065 = vsel %vm225, %v2010, 0
    %v2068 = vsel %vm225, %v2012, 0
    %v2071 = vsel %vm225, %v2014, 0
    %v2074 = vsel %vm225, %v2016, 0
    %v2077 = vsel %vm225, %v2018, 0
    %2079 = vmatprep.subr.bf16.mxu0 0
    %2080 = vmatpush1.bf16.xpose.msra.mxu0 %v2053
    %2081 = vmatprep.subr.bf16.mxu0 0
    %2082 = vmatpush1.bf16.xpose.msra.mxu0 %v2050
    %2083 = vmatprep.subr.bf16.mxu0 0
    %2084 = vmatpush1.bf16.xpose.msra.mxu0 %v2047
    %2085 = vmatprep.subr.bf16.mxu0 0
    %2086 = vmatpush1.bf16.xpose.msra.mxu0 %v2044
    %2087 = vmatprep.subr.bf16.mxu0 0
    %2088 = vmatpush1.bf16.xpose.msra.mxu0 %v2041
    %2089 = vmatprep.subr.bf16.mxu0 0
    %2090 = vmatpush1.bf16.xpose.msra.mxu0 %v2038
    %2091 = vmatprep.subr.bf16.mxu0 0
    %2092 = vmatpush1.bf16.xpose.msra.mxu0 %v2035
    %2093 = vmatprep.subr.bf16.mxu0 0
    %2094 = vmatpush1.bf16.xpose.msra.mxu0 %v2032
    %2095 = vmatprep.subr.bf16.mxu0 0
    %2096 = vmatpush2.bf16.xpose.msra.mxu0 %v2077
    %2097 = vmatprep.subr.bf16.mxu0 0
    %2098 = vmatpush2.bf16.xpose.msra.mxu0 %v2074
    %2099 = vmatprep.subr.bf16.mxu0 0
    %2100 = vmatpush2.bf16.xpose.msra.mxu0 %v2071
    %2101 = vmatprep.subr.bf16.mxu0 0
    %2102 = vmatpush2.bf16.xpose.msra.mxu0 %v2068
    %2103 = vmatprep.subr.bf16.mxu0 0
    %2104 = vmatpush2.bf16.xpose.msra.mxu0 %v2065
    %2105 = vmatprep.subr.bf16.mxu0 0
    %2106 = vmatpush2.bf16.xpose.msra.mxu0 %v2062
    %2107 = vmatprep.subr.bf16.mxu0 0
    %2108 = vmatpush2.bf16.xpose.msra.mxu0 %v2059
    %2109 = vmatprep.subr.bf16.mxu0 0
    %2110 = vmatpush2.bf16.xpose.msra.mxu0 %v2056
    %2111 = vmatprep.mubr.bf16.mxu0 0
    %2112 = vmatmul.mubr.bf16.gmra.mxu0 %v2020
    %v2113 = vpop.f32.mrf.mxu0
    %v2114 = vadd.f32 %v188, %v2113
    %v2115 = vpop.f32.mrf.mxu0
    %v2116 = vadd.f32 %v189, %v2115
    %v2117 = vpop.f32.mrf.mxu0
    %v2118 = vadd.f32 %v190, %v2117
    %v2119 = vpop.f32.mrf.mxu0
    %v2120 = vadd.f32 %v191, %v2119
    %2121 = vmatprep.mubr.bf16.mxu0 0
    %2122 = vmatmul.mubr.bf16.gmra.mxu0 %v2023
    %v2123 = vpop.f32.mrf.mxu0
    %v2124 = vadd.f32 %v192, %v2123
    %v2125 = vpop.f32.mrf.mxu0
    %v2126 = vadd.f32 %v193, %v2125
    %v2127 = vpop.f32.mrf.mxu0
    %v2128 = vadd.f32 %v194, %v2127
    %v2129 = vpop.f32.mrf.mxu0
    %v2130 = vadd.f32 %v195, %v2129
    %2131 = vmatprep.mubr.bf16.mxu0 0
    %2132 = vmatmul.mubr.bf16.gmra.mxu0 %v2026
    %v2133 = vpop.f32.mrf.mxu0
    %v2134 = vadd.f32 %v196, %v2133
    %v2135 = vpop.f32.mrf.mxu0
    %v2136 = vadd.f32 %v197, %v2135
    %v2137 = vpop.f32.mrf.mxu0
    %v2138 = vadd.f32 %v198, %v2137
    %v2139 = vpop.f32.mrf.mxu0
    %v2140 = vadd.f32 %v199, %v2139
    %2141 = vmatprep.mubr.bf16.mxu0 0
    %2142 = vmatmul.mubr.bf16.gmra.mxu0 %v2029
    %v2143 = vpop.f32.mrf.mxu0
    %v2144 = vadd.f32 %v200, %v2143
    %v2145 = vpop.f32.mrf.mxu0
    %v2146 = vadd.f32 %v201, %v2145
    %v2147 = vpop.f32.mrf.mxu0
    %v2148 = vadd.f32 %v202, %v2147
    %v2149 = vpop.f32.mrf.mxu0
    %v2150 = vadd.f32 %v203, %v2149
    %2151 = vdwg.mxu0
    %v2152 = vmax.f32 %v2114, %v2116
    %2153 = vmax.xlane.f32.xlu0 %v2152
    %v2154 = vpop.xlane.xlu0 %2153
    %v2155 = vmax.f32 %v2118, %v2120
    %2156 = vmax.xlane.f32.xlu0 %v2155
    %v2157 = vpop.xlane.xlu0 %2156
    %v2158 = vmax.f32 %v2124, %v2126
    %2159 = vmax.xlane.f32.xlu0 %v2158
    %v2160 = vpop.xlane.xlu0 %2159
    %v2161 = vmax.f32 %v2128, %v2130
    %2162 = vmax.xlane.f32.xlu0 %v2161
    %v2163 = vpop.xlane.xlu0 %2162
    %v2164 = vmax.f32 %v2134, %v2136
    %2165 = vmax.xlane.f32.xlu0 %v2164
    %v2166 = vpop.xlane.xlu0 %2165
    %v2167 = vmax.f32 %v2138, %v2140
    %2168 = vmax.xlane.f32.xlu0 %v2167
    %v2169 = vpop.xlane.xlu0 %2168
    %v2170 = vmax.f32 %v2144, %v2146
    %2171 = vmax.xlane.f32.xlu0 %v2170
    %v2172 = vpop.xlane.xlu0 %2171
    %v2173 = vmax.f32 %v2148, %v2150
    %2174 = vmax.xlane.f32.xlu0 %v2173
    %v2175 = vpop.xlane.xlu0 %2174
    %v2176 = vsub.f32 %v2114, %v2154
    %v2177 = vsub.f32 %v2116, %v2154
    %v2178 = vsub.f32 %v2118, %v2157
    %v2179 = vsub.f32 %v2120, %v2157
    %v2180 = vsub.f32 %v2124, %v2160
    %v2181 = vsub.f32 %v2126, %v2160
    %v2182 = vsub.f32 %v2128, %v2163
    %v2183 = vsub.f32 %v2130, %v2163
    %v2184 = vsub.f32 %v2134, %v2166
    %v2185 = vsub.f32 %v2136, %v2166
    %v2186 = vsub.f32 %v2138, %v2169
    %v2187 = vsub.f32 %v2140, %v2169
    %v2188 = vsub.f32 %v2144, %v2172
    %v2189 = vsub.f32 %v2146, %v2172
    %v2190 = vsub.f32 %v2148, %v2175
    %v2191 = vsub.f32 %v2150, %v2175
    %v2192 = vmul.f32 %v2176, 1.442695
    %v2193 = vpow.pop %v2192
    %v2194 = vmul.f32 %v2177, 1.442695
    %v2195 = vpow.pop %v2194
    %v2196 = vmul.f32 %v2178, 1.442695
    %v2197 = vpow.pop %v2196
    %v2198 = vmul.f32 %v2179, 1.442695
    %v2199 = vpow.pop %v2198
    %v2200 = vmul.f32 %v2180, 1.442695
    %v2201 = vpow.pop %v2200
    %v2202 = vmul.f32 %v2181, 1.442695
    %v2203 = vpow.pop %v2202
    %v2204 = vmul.f32 %v2182, 1.442695
    %v2205 = vpow.pop %v2204
    %v2206 = vmul.f32 %v2183, 1.442695
    %v2207 = vpow.pop %v2206
    %v2208 = vmul.f32 %v2184, 1.442695
    %v2209 = vpow.pop %v2208
    %v2210 = vmul.f32 %v2185, 1.442695
    %v2211 = vpow.pop %v2210
    %v2212 = vmul.f32 %v2186, 1.442695
    %v2213 = vpow.pop %v2212
    %v2214 = vmul.f32 %v2187, 1.442695
    %v2215 = vpow.pop %v2214
    %v2216 = vmul.f32 %v2188, 1.442695
    %v2217 = vpow.pop %v2216
    %v2218 = vmul.f32 %v2189, 1.442695
    %v2219 = vpow.pop %v2218
    %v2220 = vmul.f32 %v2190, 1.442695
    %v2221 = vpow.pop %v2220
    %v2222 = vmul.f32 %v2191, 1.442695
    %v2223 = vpow.pop %v2222
    %v2224 = vpack.c.bf16 %v2197, %v2193
    %v2225 = vpack.c.bf16 %v2199, %v2195
    %v2226 = vpack.c.bf16 %v2205, %v2201
    %v2227 = vpack.c.bf16 %v2207, %v2203
    %v2228 = vpack.c.bf16 %v2213, %v2209
    %v2229 = vpack.c.bf16 %v2215, %v2211
    %v2230 = vpack.c.bf16 %v2221, %v2217
    %v2231 = vpack.c.bf16 %v2223, %v2219
    %2248 = vrot.lane.b32.xlu0 %v1955, 64
    %v2249 = vpop.permute.xlu0 %2248
    %2250 = vrot.lane.b32.xlu0 %v1956, 64
    %v2251 = vpop.permute.xlu0 %2250
    %2252 = vrot.lane.b32.xlu0 %v1957, 64
    %v2253 = vpop.permute.xlu0 %2252
    %2254 = vrot.lane.b32.xlu0 %v1958, 64
    %v2255 = vpop.permute.xlu0 %2254
    %2256 = vrot.lane.b32.xlu0 %v1959, 64
    %v2257 = vpop.permute.xlu0 %2256
    %2258 = vrot.lane.b32.xlu0 %v1960, 64
    %v2259 = vpop.permute.xlu0 %2258
    %2260 = vrot.lane.b32.xlu0 %v1961, 64
    %v2261 = vpop.permute.xlu0 %2260
    %2262 = vrot.lane.b32.xlu0 %v1962, 64
    %v2263 = vpop.permute.xlu0 %2262
    %2264 = vrot.lane.b32.xlu0 %v1963, 64
    %v2265 = vpop.permute.xlu0 %2264
    %2266 = vrot.lane.b32.xlu0 %v1964, 64
    %v2267 = vpop.permute.xlu0 %2266
    %2268 = vrot.lane.b32.xlu0 %v1965, 64
    %v2269 = vpop.permute.xlu0 %2268
    %2270 = vrot.lane.b32.xlu0 %v1966, 64
    %v2271 = vpop.permute.xlu0 %2270
    %2272 = vrot.lane.b32.xlu0 %v1967, 64
    %v2273 = vpop.permute.xlu0 %2272
    %2274 = vrot.lane.b32.xlu0 %v1968, 64
    %v2275 = vpop.permute.xlu0 %2274
    %2276 = vrot.lane.b32.xlu0 %v1969, 64
    %v2277 = vpop.permute.xlu0 %2276
    %2278 = vrot.lane.b32.xlu0 %v1970, 64
    %v2279 = vpop.permute.xlu0 %2278
    %2296 = vmatprep.subr.bf16.mxu0 0
    %2297 = vmatpush1.bf16.msra.mxu0 %v2263
    %2298 = vmatprep.subr.bf16.mxu0 0
    %2299 = vmatpush1.bf16.msra.mxu0 %v2261
    %2300 = vmatprep.subr.bf16.mxu0 0
    %2301 = vmatpush1.bf16.msra.mxu0 %v2259
    %2302 = vmatprep.subr.bf16.mxu0 0
    %2303 = vmatpush1.bf16.msra.mxu0 %v2257
    %2304 = vmatprep.subr.bf16.mxu0 0
    %2305 = vmatpush1.bf16.msra.mxu0 %v2255
    %2306 = vmatprep.subr.bf16.mxu0 0
    %2307 = vmatpush1.bf16.msra.mxu0 %v2253
    %2308 = vmatprep.subr.bf16.mxu0 0
    %2309 = vmatpush1.bf16.msra.mxu0 %v2251
    %2310 = vmatprep.subr.bf16.mxu0 0
    %2311 = vmatpush1.bf16.msra.mxu0 %v2249
    %2312 = vmatprep.subr.bf16.mxu0 0
    %2313 = vmatpush2.bf16.msra.mxu0 %v2279
    %2314 = vmatprep.subr.bf16.mxu0 0
    %2315 = vmatpush2.bf16.msra.mxu0 %v2277
    %2316 = vmatprep.subr.bf16.mxu0 0
    %2317 = vmatpush2.bf16.msra.mxu0 %v2275
    %2318 = vmatprep.subr.bf16.mxu0 0
    %2319 = vmatpush2.bf16.msra.mxu0 %v2273
    %2320 = vmatprep.subr.bf16.mxu0 0
    %2321 = vmatpush2.bf16.msra.mxu0 %v2271
    %2322 = vmatprep.subr.bf16.mxu0 0
    %2323 = vmatpush2.bf16.msra.mxu0 %v2269
    %2324 = vmatprep.subr.bf16.mxu0 0
    %2325 = vmatpush2.bf16.msra.mxu0 %v2267
    %2326 = vmatprep.subr.bf16.mxu0 0
    %2327 = vmatpush2.bf16.msra.mxu0 %v2265
    %2328 = vmatprep.mubr.bf16.mxu0 %v2225
    %2329 = vmatmul.mubr.bf16.gmra.mxu0 %v2224
    %v2330 = vpop.f32.mrf.mxu0
    %v2331 = vadd.f32 0.0, %v2330
    %v2332 = vpop.f32.mrf.mxu0
    %v2333 = vpop.f32.mrf.mxu0
    %v2334 = vadd.f32 0.0, %v2333
    %v2335 = vpop.f32.mrf.mxu0
    %2336 = vmatprep.mubr.bf16.mxu0 %v2227
    %2337 = vmatmul.mubr.bf16.gmra.mxu0 %v2226
    %v2338 = vpop.f32.mrf.mxu0
    %v2339 = vadd.f32 0.0, %v2338
    %v2340 = vpop.f32.mrf.mxu0
    %v2341 = vpop.f32.mrf.mxu0
    %v2342 = vadd.f32 0.0, %v2341
    %v2343 = vpop.f32.mrf.mxu0
    %2344 = vmatprep.mubr.bf16.mxu0 %v2229
    %2345 = vmatmul.mubr.bf16.gmra.mxu0 %v2228
    %v2346 = vpop.f32.mrf.mxu0
    %v2347 = vadd.f32 0.0, %v2346
    %v2348 = vpop.f32.mrf.mxu0
    %v2349 = vpop.f32.mrf.mxu0
    %v2350 = vadd.f32 0.0, %v2349
    %v2351 = vpop.f32.mrf.mxu0
    %2352 = vmatprep.mubr.bf16.mxu0 %v2231
    %2353 = vmatmul.mubr.bf16.gmra.mxu0 %v2230
    %v2354 = vpop.f32.mrf.mxu0
    %v2355 = vadd.f32 0.0, %v2354
    %v2356 = vpop.f32.mrf.mxu0
    %v2357 = vpop.f32.mrf.mxu0
    %v2358 = vadd.f32 0.0, %v2357
    %v2359 = vpop.f32.mrf.mxu0
    %2360 = vdwg.mxu0
    %2361 = vmatprep.subr.bf16.mxu0 0
    %2362 = vmatpush1.bf16.msra.mxu0 %v527
    %2363 = vmatprep.subr.bf16.mxu0 0
    %2364 = vmatpush1.bf16.msra.mxu0 %v526
    %2365 = vmatprep.subr.bf16.mxu0 0
    %2366 = vmatpush1.bf16.msra.mxu0 %v525
    %2367 = vmatprep.subr.bf16.mxu0 0
    %2368 = vmatpush1.bf16.msra.mxu0 %v524
    %2369 = vmatprep.subr.bf16.mxu0 0
    %2370 = vmatpush1.bf16.msra.mxu0 %v523
    %2371 = vmatprep.subr.bf16.mxu0 0
    %2372 = vmatpush1.bf16.msra.mxu0 %v522
    %2373 = vmatprep.subr.bf16.mxu0 0
    %2374 = vmatpush1.bf16.msra.mxu0 %v521
    %2375 = vmatprep.subr.bf16.mxu0 0
    %2376 = vmatpush1.bf16.msra.mxu0 %v520
    %2377 = vmatprep.subr.bf16.mxu0 0
    %2378 = vmatpush2.bf16.msra.mxu0 %v535
    %2379 = vmatprep.subr.bf16.mxu0 0
    %2380 = vmatpush2.bf16.msra.mxu0 %v534
    %2381 = vmatprep.subr.bf16.mxu0 0
    %2382 = vmatpush2.bf16.msra.mxu0 %v533
    %2383 = vmatprep.subr.bf16.mxu0 0
    %2384 = vmatpush2.bf16.msra.mxu0 %v532
    %2385 = vmatprep.subr.bf16.mxu0 0
    %2386 = vmatpush2.bf16.msra.mxu0 %v531
    %2387 = vmatprep.subr.bf16.mxu0 0
    %2388 = vmatpush2.bf16.msra.mxu0 %v530
    %2389 = vmatprep.subr.bf16.mxu0 0
    %2390 = vmatpush2.bf16.msra.mxu0 %v529
    %2391 = vmatprep.subr.bf16.mxu0 0
    %2392 = vmatpush2.bf16.msra.mxu0 %v528
    %2393 = vmatprep.mubr.bf16.mxu0 %v2225
    %2394 = vmatmul.mubr.bf16.gmra.mxu0 %v2224
    %v2395 = vpop.f32.mrf.mxu0
    %v2396 = vadd.f32 0.0, %v2395
    %v2397 = vpop.f32.mrf.mxu0
    %v2398 = vpop.f32.mrf.mxu0
    %v2399 = vadd.f32 0.0, %v2398
    %v2400 = vpop.f32.mrf.mxu0
    %2401 = vmatprep.mubr.bf16.mxu0 %v2227
    %2402 = vmatmul.mubr.bf16.gmra.mxu0 %v2226
    %v2403 = vpop.f32.mrf.mxu0
    %v2404 = vadd.f32 0.0, %v2403
    %v2405 = vpop.f32.mrf.mxu0
    %v2406 = vpop.f32.mrf.mxu0
    %v2407 = vadd.f32 0.0, %v2406
    %v2408 = vpop.f32.mrf.mxu0
    %2409 = vmatprep.mubr.bf16.mxu0 %v2229
    %2410 = vmatmul.mubr.bf16.gmra.mxu0 %v2228
    %v2411 = vpop.f32.mrf.mxu0
    %v2412 = vadd.f32 0.0, %v2411
    %v2413 = vpop.f32.mrf.mxu0
    %v2414 = vpop.f32.mrf.mxu0
    %v2415 = vadd.f32 0.0, %v2414
    %v2416 = vpop.f32.mrf.mxu0
    %2417 = vmatprep.mubr.bf16.mxu0 %v2231
    %2418 = vmatmul.mubr.bf16.gmra.mxu0 %v2230
    %v2419 = vpop.f32.mrf.mxu0
    %v2420 = vadd.f32 0.0, %v2419
    %v2421 = vpop.f32.mrf.mxu0
    %v2422 = vpop.f32.mrf.mxu0
    %v2423 = vadd.f32 0.0, %v2422
    %v2424 = vpop.f32.mrf.mxu0
    %2425 = vdwg.mxu0
    %v2426 = vrcp.pop %v2396
    %v2427 = vrcp.pop %v2399
    %v2428 = vrcp.pop %v2404
    %v2429 = vrcp.pop %v2407
    %v2430 = vrcp.pop %v2412
    %v2431 = vrcp.pop %v2415
    %v2432 = vrcp.pop %v2420
    %v2433 = vrcp.pop %v2423
    %v2434 = vmul.f32 %v2331, %v2426
    %v2435 = vmul.f32 %v2334, %v2427
    %v2436 = vmul.f32 %v2339, %v2428
    %v2437 = vmul.f32 %v2342, %v2429
    %v2438 = vmul.f32 %v2347, %v2430
    %v2439 = vmul.f32 %v2350, %v2431
    %v2440 = vmul.f32 %v2355, %v2432
    %v2441 = vmul.f32 %v2358, %v2433
    %v2442 = vpack.c.bf16 %v2435, %v2434
    %v2443 = vpack.c.bf16 %v2437, %v2436
    %v2444 = vpack.c.bf16 %v2439, %v2438
    %v2445 = vpack.c.bf16 %v2441, %v2440
    %v2450 = vunpack.c.l.b16 %v1692
    %v2451 = vunpack.c.l.b16 %v1693
    %v2452 = vunpack.c.l.b16 %v1694
    %v2453 = vunpack.c.l.b16 %v1695
    %v2454 = vpack.c.b16 %v2451, %v2450
    %v2455 = vpack.c.b16 %v2453, %v2452
    %v2459 = vsel %vm225, %v2442, 0
    %v2462 = vsel %vm225, %v2443, 0
    %v2465 = vsel %vm225, %v2444, 0
    %v2468 = vsel %vm225, %v2445, 0
    %2470 = vmatprep.subr.bf16.mxu0 0
    %2471 = vmatpush1.bf16.msra.mxu0 0
    %2472 = vmatprep.subr.bf16.mxu0 0
    %2473 = vmatpush1.bf16.msra.mxu0 0
    %2474 = vmatprep.subr.bf16.mxu0 0
    %2475 = vmatpush1.bf16.msra.mxu0 0
    %2476 = vmatprep.subr.bf16.mxu0 0
    %2477 = vmatpush1.bf16.msra.mxu0 0
    %2478 = vmatprep.subr.bf16.mxu0 0
    %2479 = vmatpush1.bf16.msra.mxu0 0
    %2480 = vmatprep.subr.bf16.mxu0 0
    %2481 = vmatpush1.bf16.msra.mxu0 0
    %2482 = vmatprep.subr.bf16.mxu0 0
    %2483 = vmatpush1.bf16.msra.mxu0 %v2455
    %2484 = vmatprep.subr.bf16.mxu0 0
    %2485 = vmatpush1.bf16.msra.mxu0 %v2454
    %2486 = vmatprep.subr.bf16.mxu0 0
    %2487 = vmatpush2.bf16.msra.mxu0 0
    %2488 = vmatprep.subr.bf16.mxu0 0
    %2489 = vmatpush2.bf16.msra.mxu0 0
    %2490 = vmatprep.subr.bf16.mxu0 0
    %2491 = vmatpush2.bf16.msra.mxu0 0
    %2492 = vmatprep.subr.bf16.mxu0 0
    %2493 = vmatpush2.bf16.msra.mxu0 0
    %2494 = vmatprep.subr.bf16.mxu0 0
    %2495 = vmatpush2.bf16.msra.mxu0 0
    %2496 = vmatprep.subr.bf16.mxu0 0
    %2497 = vmatpush2.bf16.msra.mxu0 0
    %2498 = vmatprep.subr.bf16.mxu0 0
    %2499 = vmatpush2.bf16.msra.mxu0 0
    %2500 = vmatprep.subr.bf16.mxu0 0
    %2501 = vmatpush2.bf16.msra.mxu0 0
    %2502 = vmatprep.mubr.bf16.mxu0 0
    %2503 = vmatmul.mubr.bf16.gmra.mxu0 %v2459
    %v2504 = vpop.f32.mrf.mxu0
    %v2505 = vadd.f32 0.0, %v2504
    %v2506 = vpop.f32.mrf.mxu0
    %v2507 = vpop.f32.mrf.mxu0
    %v2508 = vadd.f32 0.0, %v2507
    %v2509 = vpop.f32.mrf.mxu0
    %2510 = vmatprep.mubr.bf16.mxu0 0
    %2511 = vmatmul.mubr.bf16.gmra.mxu0 %v2462
    %v2512 = vpop.f32.mrf.mxu0
    %v2513 = vadd.f32 0.0, %v2512
    %v2514 = vpop.f32.mrf.mxu0
    %v2515 = vpop.f32.mrf.mxu0
    %v2516 = vadd.f32 0.0, %v2515
    %v2517 = vpop.f32.mrf.mxu0
    %2518 = vmatprep.mubr.bf16.mxu0 0
    %2519 = vmatmul.mubr.bf16.gmra.mxu0 %v2465
    %v2520 = vpop.f32.mrf.mxu0
    %v2521 = vadd.f32 0.0, %v2520
    %v2522 = vpop.f32.mrf.mxu0
    %v2523 = vpop.f32.mrf.mxu0
    %v2524 = vadd.f32 0.0, %v2523
    %v2525 = vpop.f32.mrf.mxu0
    %2526 = vmatprep.mubr.bf16.mxu0 0
    %2527 = vmatmul.mubr.bf16.gmra.mxu0 %v2468
    %v2528 = vpop.f32.mrf.mxu0
    %v2529 = vadd.f32 0.0, %v2528
    %v2530 = vpop.f32.mrf.mxu0
    %v2531 = vpop.f32.mrf.mxu0
    %v2532 = vadd.f32 0.0, %v2531
    %v2533 = vpop.f32.mrf.mxu0
    %2534 = vdwg.mxu0
    %v2535 = vadd.f32 %v1679, %v2505
    %v2536 = vadd.f32 %v1680, %v2508
    %v2537 = vadd.f32 %v1681, %v2513
    %v2538 = vadd.f32 %v1682, %v2516
    %v2539 = vadd.f32 %v1683, %v2521
    %v2540 = vadd.f32 %v1684, %v2524
    %v2541 = vadd.f32 %v1685, %v2529
    %v2542 = vadd.f32 %v1686, %v2532
    %v2543 = vlaneseq
    %v2544 = vshrl.u32 %v2543, 7
    %v2545 = vsub.s32 3, %v2544
    %v2546 = vrot.slane %v1709, %v2545
    %v2547 = vadd.f32 %v2535, %v2546
    %v2548 = vadd.f32 %v2536, %v2546
    %v2549 = vadd.f32 %v2537, %v2546
    %v2550 = vadd.f32 %v2538, %v2546
    %v2551 = vadd.f32 %v2539, %v2546
    %v2552 = vadd.f32 %v2540, %v2546
    %v2553 = vadd.f32 %v2541, %v2546
    %v2554 = vadd.f32 %v2542, %v2546
    %v2555 = vsel %vm225, %v2547, 0.0
    %2556 = vadd.xlane.f32.xlu0 %v2555
    %v2557 = vpop.xlane.xlu0 %2556
    %v2558 = vsel %vm225, %v2548, 0.0
    %2559 = vadd.xlane.f32.xlu0 %v2558
    %v2560 = vpop.xlane.xlu0 %2559
    %v2561 = vsel %vm225, %v2549, 0.0
    %2562 = vadd.xlane.f32.xlu0 %v2561
    %v2563 = vpop.xlane.xlu0 %2562
    %v2564 = vsel %vm225, %v2550, 0.0
    %2565 = vadd.xlane.f32.xlu0 %v2564
    %v2566 = vpop.xlane.xlu0 %2565
    %v2567 = vsel %vm225, %v2551, 0.0
    %2568 = vadd.xlane.f32.xlu0 %v2567
    %v2569 = vpop.xlane.xlu0 %2568
    %v2570 = vsel %vm225, %v2552, 0.0
    %2571 = vadd.xlane.f32.xlu0 %v2570
    %v2572 = vpop.xlane.xlu0 %2571
    %v2573 = vsel %vm225, %v2553, 0.0
    %2574 = vadd.xlane.f32.xlu0 %v2573
    %v2575 = vpop.xlane.xlu0 %2574
    %v2576 = vsel %vm225, %v2554, 0.0
    %2577 = vadd.xlane.f32.xlu0 %v2576
    %v2578 = vpop.xlane.xlu0 %2577
    %v2579 = vmul.f32 %v2557, %v250
    %v2580 = vmul.f32 %v2560, %v250
    %v2581 = vmul.f32 %v2563, %v250
    %v2582 = vmul.f32 %v2566, %v250
    %v2583 = vmul.f32 %v2569, %v250
    %v2584 = vmul.f32 %v2572, %v250
    %v2585 = vmul.f32 %v2575, %v250
    %v2586 = vmul.f32 %v2578, %v250
    %v2587 = vsub.f32 %v2547, %v2579
    %v2588 = vsub.f32 %v2548, %v2580
    %v2589 = vsub.f32 %v2549, %v2581
    %v2590 = vsub.f32 %v2550, %v2582
    %v2591 = vsub.f32 %v2551, %v2583
    %v2592 = vsub.f32 %v2552, %v2584
    %v2593 = vsub.f32 %v2553, %v2585
    %v2594 = vsub.f32 %v2554, %v2586
    %v2595 = vmul.f32 %v2587, %v2587
    %v2596 = vmul.f32 %v2588, %v2588
    %v2597 = vmul.f32 %v2589, %v2589
    %v2598 = vmul.f32 %v2590, %v2590
    %v2599 = vmul.f32 %v2591, %v2591
    %v2600 = vmul.f32 %v2592, %v2592
    %v2601 = vmul.f32 %v2593, %v2593
    %v2602 = vmul.f32 %v2594, %v2594
    %v2603 = vsel %vm225, %v2595, 0.0
    %2604 = vadd.xlane.f32.xlu0 %v2603
    %v2605 = vpop.xlane.xlu0 %2604
    %v2606 = vsel %vm225, %v2596, 0.0
    %2607 = vadd.xlane.f32.xlu0 %v2606
    %v2608 = vpop.xlane.xlu0 %2607
    %v2609 = vsel %vm225, %v2597, 0.0
    %2610 = vadd.xlane.f32.xlu0 %v2609
    %v2611 = vpop.xlane.xlu0 %2610
    %v2612 = vsel %vm225, %v2598, 0.0
    %2613 = vadd.xlane.f32.xlu0 %v2612
    %v2614 = vpop.xlane.xlu0 %2613
    %v2615 = vsel %vm225, %v2599, 0.0
    %2616 = vadd.xlane.f32.xlu0 %v2615
    %v2617 = vpop.xlane.xlu0 %2616
    %v2618 = vsel %vm225, %v2600, 0.0
    %2619 = vadd.xlane.f32.xlu0 %v2618
    %v2620 = vpop.xlane.xlu0 %2619
    %v2621 = vsel %vm225, %v2601, 0.0
    %2622 = vadd.xlane.f32.xlu0 %v2621
    %v2623 = vpop.xlane.xlu0 %2622
    %v2624 = vsel %vm225, %v2602, 0.0
    %2625 = vadd.xlane.f32.xlu0 %v2624
    %v2626 = vpop.xlane.xlu0 %2625
    %v2627 = vmul.f32 %v2605, %v250
    %v2628 = vmul.f32 %v2608, %v250
    %v2629 = vmul.f32 %v2611, %v250
    %v2630 = vmul.f32 %v2614, %v250
    %v2631 = vmul.f32 %v2617, %v250
    %v2632 = vmul.f32 %v2620, %v250
    %v2633 = vmul.f32 %v2623, %v250
    %v2634 = vmul.f32 %v2626, %v250
    %v2635 = vadd.f32 %v2627, 1e-12
    %v2636 = vadd.f32 %v2628, 1e-12
    %v2637 = vadd.f32 %v2629, 1e-12
    %v2638 = vadd.f32 %v2630, 1e-12
    %v2639 = vadd.f32 %v2631, 1e-12
    %v2640 = vadd.f32 %v2632, 1e-12
    %v2641 = vadd.f32 %v2633, 1e-12
    %v2642 = vadd.f32 %v2634, 1e-12
    %v2643 = vrsqrt.pop %v2635
    %v2644 = vrsqrt.pop %v2636
    %v2645 = vrsqrt.pop %v2637
    %v2646 = vrsqrt.pop %v2638
    %v2647 = vrsqrt.pop %v2639
    %v2648 = vrsqrt.pop %v2640
    %v2649 = vrsqrt.pop %v2641
    %v2650 = vrsqrt.pop %v2642
    %v2651 = vmul.f32 %v2587, %v2643
    %v2652 = vmul.f32 %v2588, %v2644
    %v2653 = vmul.f32 %v2589, %v2645
    %v2654 = vmul.f32 %v2590, %v2646
    %v2655 = vmul.f32 %v2591, %v2647
    %v2656 = vmul.f32 %v2592, %v2648
    %v2657 = vmul.f32 %v2593, %v2649
    %v2658 = vmul.f32 %v2594, %v2650
    %v2659 = vlaneseq
    %v2660 = vshrl.u32 %v2659, 7
    %v2661 = vsub.s32 4, %v2660
    %v2662 = vrot.slane %v1709, %v2661
    %v2663 = vmul.f32 %v2651, %v2662
    %v2664 = vmul.f32 %v2652, %v2662
    %v2665 = vmul.f32 %v2653, %v2662
    %v2666 = vmul.f32 %v2654, %v2662
    %v2667 = vmul.f32 %v2655, %v2662
    %v2668 = vmul.f32 %v2656, %v2662
    %v2669 = vmul.f32 %v2657, %v2662
    %v2670 = vmul.f32 %v2658, %v2662
    %v2671 = vlaneseq
    %v2672 = vshrl.u32 %v2671, 7
    %v2673 = vsub.s32 5, %v2672
    %v2674 = vrot.slane %v1709, %v2673
    %v2675 = vadd.f32 %v2663, %v2674
    %v2676 = vadd.f32 %v2664, %v2674
    %v2677 = vadd.f32 %v2665, %v2674
    %v2678 = vadd.f32 %v2666, %v2674
    %v2679 = vadd.f32 %v2667, %v2674
    %v2680 = vadd.f32 %v2668, %v2674
    %v2681 = vadd.f32 %v2669, %v2674
    %v2682 = vadd.f32 %v2670, %v2674
    %v2683 = vpack.c.bf16 %v2676, %v2675
    %v2684 = vpack.c.bf16 %v2678, %v2677
    %v2685 = vpack.c.bf16 %v2680, %v2679
    %v2686 = vpack.c.bf16 %v2682, %v2681
    %v2687 = vlaneseq
    %v2688 = vshrl.u32 %v2687, 7
    %v2689 = vsub.s32 6, %v2688
    %v2690 = vrot.slane %v1709, %v2689
    %v2695 = vunpack.c.l.b16 %v1696
    %v2696 = vunpack.c.l.b16 %v1697
    %v2697 = vunpack.c.l.b16 %v1698
    %v2698 = vunpack.c.l.b16 %v1699
    %v2699 = vpack.c.b16 %v2696, %v2695
    %v2700 = vpack.c.b16 %v2698, %v2697
    %v2704 = vsel %vm225, %v2683, 0
    %v2707 = vsel %vm225, %v2684, 0
    %v2710 = vsel %vm225, %v2685, 0
    %v2713 = vsel %vm225, %v2686, 0
    %2715 = vmatprep.subr.bf16.mxu0 0
    %2716 = vmatpush1.bf16.msra.mxu0 0
    %2717 = vmatprep.subr.bf16.mxu0 0
    %2718 = vmatpush1.bf16.msra.mxu0 0
    %2719 = vmatprep.subr.bf16.mxu0 0
    %2720 = vmatpush1.bf16.msra.mxu0 0
    %2721 = vmatprep.subr.bf16.mxu0 0
    %2722 = vmatpush1.bf16.msra.mxu0 0
    %2723 = vmatprep.subr.bf16.mxu0 0
    %2724 = vmatpush1.bf16.msra.mxu0 0
    %2725 = vmatprep.subr.bf16.mxu0 0
    %2726 = vmatpush1.bf16.msra.mxu0 0
    %2727 = vmatprep.subr.bf16.mxu0 0
    %2728 = vmatpush1.bf16.msra.mxu0 %v2700
    %2729 = vmatprep.subr.bf16.mxu0 0
    %2730 = vmatpush1.bf16.msra.mxu0 %v2699
    %2731 = vmatprep.subr.bf16.mxu0 0
    %2732 = vmatpush2.bf16.msra.mxu0 0
    %2733 = vmatprep.subr.bf16.mxu0 0
    %2734 = vmatpush2.bf16.msra.mxu0 0
    %2735 = vmatprep.subr.bf16.mxu0 0
    %2736 = vmatpush2.bf16.msra.mxu0 0
    %2737 = vmatprep.subr.bf16.mxu0 0
    %2738 = vmatpush2.bf16.msra.mxu0 0
    %2739 = vmatprep.subr.bf16.mxu0 0
    %2740 = vmatpush2.bf16.msra.mxu0 0
    %2741 = vmatprep.subr.bf16.mxu0 0
    %2742 = vmatpush2.bf16.msra.mxu0 0
    %2743 = vmatprep.subr.bf16.mxu0 0
    %2744 = vmatpush2.bf16.msra.mxu0 0
    %2745 = vmatprep.subr.bf16.mxu0 0
    %2746 = vmatpush2.bf16.msra.mxu0 0
    %2747 = vmatprep.mubr.bf16.mxu0 0
    %2748 = vmatmul.mubr.bf16.gmra.mxu0 %v2704
    %v2749 = vpop.f32.mrf.mxu0
    %v2750 = vadd.f32 %v2690, %v2749
    %v2751 = vpop.f32.mrf.mxu0
    %v2752 = vpop.f32.mrf.mxu0
    %v2753 = vadd.f32 %v2690, %v2752
    %v2754 = vpop.f32.mrf.mxu0
    %2755 = vmatprep.mubr.bf16.mxu0 0
    %2756 = vmatmul.mubr.bf16.gmra.mxu0 %v2707
    %v2757 = vpop.f32.mrf.mxu0
    %v2758 = vadd.f32 %v2690, %v2757
    %v2759 = vpop.f32.mrf.mxu0
    %v2760 = vpop.f32.mrf.mxu0
    %v2761 = vadd.f32 %v2690, %v2760
    %v2762 = vpop.f32.mrf.mxu0
    %2763 = vmatprep.mubr.bf16.mxu0 0
    %2764 = vmatmul.mubr.bf16.gmra.mxu0 %v2710
    %v2765 = vpop.f32.mrf.mxu0
    %v2766 = vadd.f32 %v2690, %v2765
    %v2767 = vpop.f32.mrf.mxu0
    %v2768 = vpop.f32.mrf.mxu0
    %v2769 = vadd.f32 %v2690, %v2768
    %v2770 = vpop.f32.mrf.mxu0
    %2771 = vmatprep.mubr.bf16.mxu0 0
    %2772 = vmatmul.mubr.bf16.gmra.mxu0 %v2713
    %v2773 = vpop.f32.mrf.mxu0
    %v2774 = vadd.f32 %v2690, %v2773
    %v2775 = vpop.f32.mrf.mxu0
    %v2776 = vpop.f32.mrf.mxu0
    %v2777 = vadd.f32 %v2690, %v2776
    %v2778 = vpop.f32.mrf.mxu0
    %2779 = vdwg.mxu0
    %v2780 = vmul.f32 %v2750, %v2750
    %v2781 = vmul.f32 %v2753, %v2753
    %v2782 = vmul.f32 %v2758, %v2758
    %v2783 = vmul.f32 %v2761, %v2761
    %v2784 = vmul.f32 %v2766, %v2766
    %v2785 = vmul.f32 %v2769, %v2769
    %v2786 = vmul.f32 %v2774, %v2774
    %v2787 = vmul.f32 %v2777, %v2777
    %v2788 = vmul.f32 %v2750, %v2780
    %v2789 = vmul.f32 %v2753, %v2781
    %v2790 = vmul.f32 %v2758, %v2782
    %v2791 = vmul.f32 %v2761, %v2783
    %v2792 = vmul.f32 %v2766, %v2784
    %v2793 = vmul.f32 %v2769, %v2785
    %v2794 = vmul.f32 %v2774, %v2786
    %v2795 = vmul.f32 %v2777, %v2787
    %v2796 = vmul.f32 %v2788, 0.044715
    %v2797 = vmul.f32 %v2789, 0.044715
    %v2798 = vmul.f32 %v2790, 0.044715
    %v2799 = vmul.f32 %v2791, 0.044715
    %v2800 = vmul.f32 %v2792, 0.044715
    %v2801 = vmul.f32 %v2793, 0.044715
    %v2802 = vmul.f32 %v2794, 0.044715
    %v2803 = vmul.f32 %v2795, 0.044715
    %v2804 = vadd.f32 %v2750, %v2796
    %v2805 = vadd.f32 %v2753, %v2797
    %v2806 = vadd.f32 %v2758, %v2798
    %v2807 = vadd.f32 %v2761, %v2799
    %v2808 = vadd.f32 %v2766, %v2800
    %v2809 = vadd.f32 %v2769, %v2801
    %v2810 = vadd.f32 %v2774, %v2802
    %v2811 = vadd.f32 %v2777, %v2803
    %v2812 = vmul.f32 %v2804, 0.7978846
    %v2813 = vmul.f32 %v2805, 0.7978846
    %v2814 = vmul.f32 %v2806, 0.7978846
    %v2815 = vmul.f32 %v2807, 0.7978846
    %v2816 = vmul.f32 %v2808, 0.7978846
    %v2817 = vmul.f32 %v2809, 0.7978846
    %v2818 = vmul.f32 %v2810, 0.7978846
    %v2819 = vmul.f32 %v2811, 0.7978846
    %v2820 = vtanh.pop %v2812
    %v2821 = vtanh.pop %v2813
    %v2822 = vtanh.pop %v2814
    %v2823 = vtanh.pop %v2815
    %v2824 = vtanh.pop %v2816
    %v2825 = vtanh.pop %v2817
    %v2826 = vtanh.pop %v2818
    %v2827 = vtanh.pop %v2819
    %v2828 = vadd.f32 %v2820, 1.0
    %v2829 = vadd.f32 %v2821, 1.0
    %v2830 = vadd.f32 %v2822, 1.0
    %v2831 = vadd.f32 %v2823, 1.0
    %v2832 = vadd.f32 %v2824, 1.0
    %v2833 = vadd.f32 %v2825, 1.0
    %v2834 = vadd.f32 %v2826, 1.0
    %v2835 = vadd.f32 %v2827, 1.0
    %v2836 = vmul.f32 %v2828, 0.5
    %v2837 = vmul.f32 %v2829, 0.5
    %v2838 = vmul.f32 %v2830, 0.5
    %v2839 = vmul.f32 %v2831, 0.5
    %v2840 = vmul.f32 %v2832, 0.5
    %v2841 = vmul.f32 %v2833, 0.5
    %v2842 = vmul.f32 %v2834, 0.5
    %v2843 = vmul.f32 %v2835, 0.5
    %v2844 = vmul.f32 %v2750, %v2836
    %v2845 = vmul.f32 %v2753, %v2837
    %v2846 = vmul.f32 %v2758, %v2838
    %v2847 = vmul.f32 %v2761, %v2839
    %v2848 = vmul.f32 %v2766, %v2840
    %v2849 = vmul.f32 %v2769, %v2841
    %v2850 = vmul.f32 %v2774, %v2842
    %v2851 = vmul.f32 %v2777, %v2843
    %v2852 = vpack.c.bf16 %v2845, %v2844
    %v2853 = vpack.c.bf16 %v2847, %v2846
    %v2854 = vpack.c.bf16 %v2849, %v2848
    %v2855 = vpack.c.bf16 %v2851, %v2850
    %v2864 = vunpack.c.l.b16 %v1700
    %v2865 = vunpack.c.l.b16 %v1701
    %v2866 = vunpack.c.l.b16 %v1702
    %v2867 = vunpack.c.l.b16 %v1703
    %v2868 = vunpack.c.l.b16 %v1704
    %v2869 = vunpack.c.l.b16 %v1705
    %v2870 = vunpack.c.l.b16 %v1706
    %v2871 = vunpack.c.l.b16 %v1707
    %v2872 = vpack.c.b16 %v2865, %v2864
    %v2873 = vpack.c.b16 %v2867, %v2866
    %v2874 = vpack.c.b16 %v2869, %v2868
    %v2875 = vpack.c.b16 %v2871, %v2870
    %v2881 = vsel %vm1589, %v2852, 0
    %v2884 = vsel %vm1589, %v2853, 0
    %v2887 = vsel %vm1589, %v2854, 0
    %v2890 = vsel %vm1589, %v2855, 0
    %2892 = vmatprep.subr.bf16.mxu0 0
    %2893 = vmatpush1.bf16.msra.mxu0 0
    %2894 = vmatprep.subr.bf16.mxu0 0
    %2895 = vmatpush1.bf16.msra.mxu0 0
    %2896 = vmatprep.subr.bf16.mxu0 0
    %2897 = vmatpush1.bf16.msra.mxu0 0
    %2898 = vmatprep.subr.bf16.mxu0 0
    %2899 = vmatpush1.bf16.msra.mxu0 0
    %2900 = vmatprep.subr.bf16.mxu0 0
    %2901 = vmatpush1.bf16.msra.mxu0 %v2875
    %2902 = vmatprep.subr.bf16.mxu0 0
    %2903 = vmatpush1.bf16.msra.mxu0 %v2874
    %2904 = vmatprep.subr.bf16.mxu0 0
    %2905 = vmatpush1.bf16.msra.mxu0 %v2873
    %2906 = vmatprep.subr.bf16.mxu0 0
    %2907 = vmatpush1.bf16.msra.mxu0 %v2872
    %2908 = vmatprep.subr.bf16.mxu0 0
    %2909 = vmatpush2.bf16.msra.mxu0 0
    %2910 = vmatprep.subr.bf16.mxu0 0
    %2911 = vmatpush2.bf16.msra.mxu0 0
    %2912 = vmatprep.subr.bf16.mxu0 0
    %2913 = vmatpush2.bf16.msra.mxu0 0
    %2914 = vmatprep.subr.bf16.mxu0 0
    %2915 = vmatpush2.bf16.msra.mxu0 0
    %2916 = vmatprep.subr.bf16.mxu0 0
    %2917 = vmatpush2.bf16.msra.mxu0 0
    %2918 = vmatprep.subr.bf16.mxu0 0
    %2919 = vmatpush2.bf16.msra.mxu0 0
    %2920 = vmatprep.subr.bf16.mxu0 0
    %2921 = vmatpush2.bf16.msra.mxu0 0
    %2922 = vmatprep.subr.bf16.mxu0 0
    %2923 = vmatpush2.bf16.msra.mxu0 0
    %2924 = vmatprep.mubr.bf16.mxu0 0
    %2925 = vmatmul.mubr.bf16.gmra.mxu0 %v2881
    %v2926 = vpop.f32.mrf.mxu0
    %v2927 = vadd.f32 0.0, %v2926
    %v2928 = vpop.f32.mrf.mxu0
    %v2929 = vpop.f32.mrf.mxu0
    %v2930 = vpop.f32.mrf.mxu0
    %2931 = vmatprep.mubr.bf16.mxu0 0
    %2932 = vmatmul.mubr.bf16.gmra.mxu0 %v2884
    %v2933 = vpop.f32.mrf.mxu0
    %v2934 = vpop.f32.mrf.mxu0
    %v2935 = vpop.f32.mrf.mxu0
    %v2936 = vpop.f32.mrf.mxu0
    %2937 = vmatprep.mubr.bf16.mxu0 0
    %2938 = vmatmul.mubr.bf16.gmra.mxu0 %v2887
    %v2939 = vpop.f32.mrf.mxu0
    %v2940 = vadd.f32 0.0, %v2939
    %v2941 = vpop.f32.mrf.mxu0
    %v2942 = vpop.f32.mrf.mxu0
    %v2943 = vpop.f32.mrf.mxu0
    %2944 = vmatprep.mubr.bf16.mxu0 0
    %2945 = vmatmul.mubr.bf16.gmra.mxu0 %v2890
    %v2946 = vpop.f32.mrf.mxu0
    %v2947 = vpop.f32.mrf.mxu0
    %v2948 = vpop.f32.mrf.mxu0
    %v2949 = vpop.f32.mrf.mxu0
    %2950 = vdwg.mxu0
    %v2951 = vadd.f32 %v2547, %v2927
    %v2952 = vadd.f32 %v2551, %v2940
    %v2953 = vlaneseq
    %v2954 = vshrl.u32 %v2953, 7
    %v2955 = vsub.s32 7, %v2954
    %v2956 = vrot.slane %v1709, %v2955
    %v2957 = vadd.f32 %v2951, %v2956
    %v2958 = vadd.f32 %v2952, %v2956
    %v2959 = vld [vmem:[%s8] sm:$0xff]
    %v2961 = vrot.slane %v2958, 7
    %vm2963 = vcmask 1040384
    %v2964 = vsel %vm2963, %v2957, %v2961
    %vm2965 = vcmask 254976
    %v2966 = vsel %vm2965, %v2964, 0.0
    %2967 = vadd.xlane.f32.xlu0 %v2966
    %v2968 = vpop.xlane.xlu0 %2967
    %v2969 = vmul.f32 %v2968, %v250
    %v2970 = vsub.f32 %v2964, %v2969
    %v2971 = vmul.f32 %v2970, %v2970
    %v2972 = vsel %vm2965, %v2971, 0.0
    %2973 = vadd.xlane.f32.xlu0 %v2972
    %v2974 = vpop.xlane.xlu0 %2973
    %v2975 = vmul.f32 %v2974, %v250
    %v2976 = vadd.f32 %v2975, 1e-12
    %v2977 = vrsqrt.pop %v2976
    %v2978 = vmul.f32 %v2970, %v2977
    %v2979 = vlaneseq
    %v2980 = vshrl.u32 %v2979, 7
    %v2981 = vsub.s32 0, %v2980
    %v2982 = vrot.slane %v2959, %v2981
    %v2983 = vmul.f32 %v2978, %v2982
    %v2984 = vlaneseq
    %v2985 = vshrl.u32 %v2984, 7
    %v2986 = vsub.s32 1, %v2985
    %v2987 = vrot.slane %v2959, %v2986
    %v2988 = vadd.f32 %v2983, %v2987
    %v2989 = vpack.c.bf16 %v2988, %v2988
    %v2990 = vld [vmem:[%s7] sm:$0xf]
    %v2991 = vld [vmem:[%s7 + $0x4] sm:$0xf]
    %v2992 = vld [vmem:[%s7 + $0x8] sm:$0xf]
    %v2993 = vld [vmem:[%s7 + $0xc] sm:$0xf]
    %v2994 = vlaneseq
    %v2995 = vshrl.u32 %v2994, 7
    %v2996 = vsub.s32 2, %v2995
    %v2997 = vrot.slane %v2959, %v2996
    %v3002 = vunpack.c.l.b16 %v2990
    %v3003 = vunpack.c.l.b16 %v2991
    %v3004 = vunpack.c.l.b16 %v2992
    %v3005 = vunpack.c.l.b16 %v2993
    %v3006 = vpack.c.b16 %v3003, %v3002
    %v3007 = vpack.c.b16 %v3005, %v3004
    %v3011 = vsel %vm225, %v2989, 0
    %3013 = vmatprep.subr.bf16.mxu0 0
    %3014 = vmatpush1.bf16.msra.mxu0 0
    %3015 = vmatprep.subr.bf16.mxu0 0
    %3016 = vmatpush1.bf16.msra.mxu0 0
    %3017 = vmatprep.subr.bf16.mxu0 0
    %3018 = vmatpush1.bf16.msra.mxu0 0
    %3019 = vmatprep.subr.bf16.mxu0 0
    %3020 = vmatpush1.bf16.msra.mxu0 0
    %3021 = vmatprep.subr.bf16.mxu0 0
    %3022 = vmatpush1.bf16.msra.mxu0 0
    %3023 = vmatprep.subr.bf16.mxu0 0
    %3024 = vmatpush1.bf16.msra.mxu0 0
    %3025 = vmatprep.subr.bf16.mxu0 0
    %3026 = vmatpush1.bf16.msra.mxu0 %v3007
    %3027 = vmatprep.subr.bf16.mxu0 0
    %3028 = vmatpush1.bf16.msra.mxu0 %v3006
    %3029 = vmatprep.subr.bf16.mxu0 0
    %3030 = vmatpush2.bf16.msra.mxu0 0
    %3031 = vmatprep.subr.bf16.mxu0 0
    %3032 = vmatpush2.bf16.msra.mxu0 0
    %3033 = vmatprep.subr.bf16.mxu0 0
    %3034 = vmatpush2.bf16.msra.mxu0 0
    %3035 = vmatprep.subr.bf16.mxu0 0
    %3036 = vmatpush2.bf16.msra.mxu0 0
    %3037 = vmatprep.subr.bf16.mxu0 0
    %3038 = vmatpush2.bf16.msra.mxu0 0
    %3039 = vmatprep.subr.bf16.mxu0 0
    %3040 = vmatpush2.bf16.msra.mxu0 0
    %3041 = vmatprep.subr.bf16.mxu0 0
    %3042 = vmatpush2.bf16.msra.mxu0 0
    %3043 = vmatprep.subr.bf16.mxu0 0
    %3044 = vmatpush2.bf16.msra.mxu0 0
    %3045 = vmatprep.mubr.bf16.mxu0 0
    %3046 = vmatmul.mubr.bf16.gmra.mxu0 %v3011
    %v3047 = vpop.f32.mrf.mxu0
    %v3048 = vadd.f32 %v2997, %v3047
    %v3049 = vpop.f32.mrf.mxu0
    %v3050 = vpop.f32.mrf.mxu0
    %v3051 = vpop.f32.mrf.mxu0
    %3052 = vdwg.mxu0
    %3053 = vst [vmem:[#allocation2] sm:$0x3] %v3048
    // Predicated region
    $region38: #{vit_forward.1} parent=1 // pred_check
      _
    $region39: #{vit_forward.1} parent=1 // pred_check_branch
      %3055 = sbr.rel (0) target = $region41
    $region40: #{vit_forward.1} parent=1 // pred_region
      %s3057 = ssub.s32 32, 32
      %3058 = vsyncadd [#allocation3], %s3057
      %s3060 = sshll.u32 [#allocation2], 4
      %s3061 = int_to_ptr.vmem [resolvable:$true] %s3060
      %3063 = dma.vmem_to_hbm [thread:$0]  %s3061, 32, %s9, [#allocation3]
    $region41: #{vit_forward.1} parent=1 // pred_fallthru
      _
    // Predicated region
    $region42: #{vit_forward.1} parent=1 // pred_check
      _
    $region43: #{vit_forward.1} parent=1 // pred_check_branch
      %3065 = sbr.rel (0) target = $region45
    $region44: #{vit_forward.1} parent=1 // pred_region
      %3066 = dma.done [#allocation3], 32
    $region45: #{vit_forward.1} parent=1 // pred_fallthru
      _
    %3067 = vsyncpa [#allocation3], 1

</llo_original>
